<compile_context>
chip_gen: v7x
topology: tpu7x:2x2x1
jax: 0.10.0
libtpu: 0.0.40
codegen_flags: <defaults>
</compile_context>

<pallas_src>
import functools

import numpy as np
import jax
import jax.numpy as jnp
from jax.experimental import pallas as pl
from jax.experimental.pallas import tpu as pltpu

# ----------------- configuration (mirrors model_cfg of BaseBEVBackbone) ------------
MODEL_CFG = dict(
    LAYER_NUMS=[1, 1],
    LAYER_STRIDES=[1, 2],
    NUM_FILTERS=[8, 16],
    UPSAMPLE_STRIDES=[1, 2],
    NUM_UPSAMPLE_FILTERS=[8, 8],
)
INPUT_CHANNELS = 4
BN_EPS = 1e-3  # BatchNorm2d(eps=0.001) in inference (running-stats) mode, folded.


# ----------------------------- fused Pallas kernel ----------------------------------
def _fused_bev_kernel(plan, *refs):
    """plan: static tuple of op descriptors; refs = (x_ref, *weight_refs, o_ref)."""
    x_ref, o_ref = refs[0], refs[-1]
    wrefs = refs[1:-1]

    x = x_ref[0]                    # (rows, W*Cin) f32 lane-dense activation (in VMEM)
    up_sum = None
    idx = 0
    for op in plan:                 # static python loop -> fully unrolled at trace time
        if op[0] == "conv":
            _, h_img, stride = op
            a_ref, b_ref = wrefs[idx], wrefs[idx + 1]
            idx += 2
            rows, lanes = x.shape
            # Row taps via roll/shift on the VPU (NOT MXU row-selection matmuls).
            rr = jax.lax.broadcasted_iota(jnp.int32, (rows, lanes), 0)
            if rows != h_img:       # folded-batch: per-image row index
                rr = rr % h_img
            up1 = jnp.where(rr == 0, 0.0, jnp.roll(x, 1, axis=0))           # x[h-1]
            dn1 = jnp.where(rr == h_img - 1, 0.0, jnp.roll(x, -1, axis=0))  # x[h+1]
            x3 = jnp.concatenate([up1, x, dn1], axis=-1)   # (rows, 3*W*Cin) f32
            if stride > 1:          # stride-2 row decimation: one tiny 0/1 matmul (f32, exact)
                s_ref = wrefs[idx]
                idx += 1
                x3 = jnp.dot(s_ref[...], x3, preferred_element_type=jnp.float32)
            # Single wide-K MXU contraction per conv layer, bf16 operands, f32 accumulate.
            acc = jnp.dot(x3.astype(jnp.bfloat16), a_ref[...],
                          preferred_element_type=jnp.float32)
            x = jnp.maximum(acc + b_ref[...], 0.0)         # fused bias + ReLU (BN folded)
        else:                       # "deconv": ConvTranspose2d with kernel == stride
            _, s, woc = op
            e_ref, b_ref = wrefs[idx], wrefs[idx + 1]
            idx += 2
            y = jnp.dot(x.astype(jnp.bfloat16), e_ref[...],
                        preferred_element_type=jnp.float32)   # (rows, s*Wout*Ctot)
            if s > 1:
                p_ref = wrefs[idx]
                idx += 1
                u = None
                for a in range(s):  # interleave phase rows (0/1 selection, exact in f32)
                    t = jnp.dot(p_ref[a], y[:, a * woc:(a + 1) * woc],
                                preferred_element_type=jnp.float32)
                    u = t if u is None else u + t
            else:
                u = y
            u = jnp.maximum(u + b_ref[...], 0.0)
            # torch.cat(ups, dim=1): branches occupy disjoint channel slots -> plain add
            up_sum = u if up_sum is None else up_sum + u
            x = up_sum              # next block consumes cat(ups), as in forward()
    o_ref[0] = up_sum               # single lane-dense, full-width (multiple of 128) store


# ----------------------- host-side lowering of conv / deconv ------------------------
def _lower_conv_np(w_hwio, scale, bias, stride, H, W, nimg):
    """ZeroPad2d(1)+Conv2d(3x3,stride)+folded BN ->
       A_stacked (3*W*Cin, Wo*Cout), bias row, optional 0/1 decimation matrix."""
    w = np.asarray(w_hwio, np.float32) * np.asarray(scale, np.float32)[None, None, None, :]
    Cin, Cout = int(w.shape[2]), int(w.shape[3])
    s = int(stride)
    Ho, Wo = (H - 1) // s + 1, (W - 1) // s + 1
    A = np.zeros((3 * W * Cin, Wo * Cout), np.float32)
    for ki in range(3):
        base = ki * W * Cin
        for wo in range(Wo):
            for kj in range(3):
                c = s * wo + kj - 1
                if 0 <= c < W:
                    A[base + c * Cin:base + (c + 1) * Cin,
                      wo * Cout:(wo + 1) * Cout] = w[ki, kj]
    bi = np.tile(np.asarray(bias, np.float32), Wo).reshape(1, Wo * Cout)
    Sdec = None
    if s > 1:                       # 0/1 row decimation (batched block-diagonal)
        Sdec = np.zeros((nimg * Ho, nimg * H), np.float32)
        for im in range(nimg):
            for ho in range(Ho):
                Sdec[im * Ho + ho, im * H + s * ho] = 1.0
    return A, bi, Sdec, Ho, Wo


def _lower_deconv_np(w, scale, bias, stride, H, W, ch_off, Ctot, nimg):
    """ConvTranspose2d(k=s,stride=s)+folded BN, writing into channel slot
    [ch_off, ch_off+Cout) of the Ctot-wide concatenated output layout.
    Returns E_cat (W*Cin, s*Wout*Ctot), bias row, optional phase-interleave P."""
    wd = np.asarray(w, np.float32) * np.asarray(scale, np.float32)[None, None, None, :]
    Cin, Cout = int(wd.shape[0]), int(wd.shape[3])
    s = int(stride)
    Hout, Wout = H * s, W * s
    WoC = Wout * Ctot
    E = np.zeros((W * Cin, s * WoC), np.float32)
    for a in range(s):
        for w_ in range(W):
            for b in range(s):
                col = a * WoC + (s * w_ + b) * Ctot + ch_off
                E[w_ * Cin:(w_ + 1) * Cin, col:col + Cout] = wd[:, a, b, :]
    bi_c = np.zeros((Ctot,), np.float32)
    bi_c[ch_off:ch_off + Cout] = np.asarray(bias, np.float32)
    bi = np.tile(bi_c, Wout).reshape(1, WoC)
    P = None
    if s > 1:                       # 0/1 row-interleave matrices, one per phase
        P = np.zeros((s, nimg * Hout, nimg * H), np.float32)
        for a in range(s):
            for im in range(nimg):
                for h in range(H):
                    P[a, im * Hout + s * h + a, im * H + h] = 1.0
    return E, bi, P, Hout, Wout


def prepare_lowered(params, H, W, nimg, cin0):
    """Build the static op plan + flat operand / BlockSpec lists for the fused kernel."""
    blocks, deblocks = params
    up_filters = [int(c) for c in MODEL_CFG["NUM_UPSAMPLE_FILTERS"]]
    Ctot = int(sum(up_filters))
    ch_off = [0]
    for c in up_filters[:-1]:
        ch_off.append(ch_off[-1] + c)

    plan, ops, specs = [], [], []

    def add(arr, dtype):
        a = jnp.asarray(np.asarray(arr, np.float32), dtype)
        ops.append(a)
        nd = a.ndim
        specs.append(pl.BlockSpec(a.shape, lambda n, _nd=nd: (0,) * _nd))

    curH, curW = H, W
    layout_cin = cin0               # channels-per-pixel of the current lane-dense layout
    for i, layers in enumerate(blocks):
        for layer in layers:
            w = np.asarray(layer["w"], np.float32)          # (3,3,cin,cout) HWIO
            cin_l, cout = int(w.shape[2]), int(w.shape[3])
            if layout_cin != cin_l:
                # input layout is wider (padded input channels or concatenated-ups
                # layout); the real channels occupy the leading cin_l slots, rest zero.
                assert cin_l <= layout_cin
                wp = np.zeros((3, 3, layout_cin, cout), np.float32)
                wp[:, :, :cin_l, :] = w
                w = wp
            A, bi, Sdec, Ho, Wo = _lower_conv_np(
                w, layer["scale"], layer["bias"], layer["stride"], curH, curW, nimg)
            plan.append(("conv", curH, int(layer["stride"])))
            add(A, jnp.bfloat16)
            add(bi, jnp.float32)
            if Sdec is not None:
                add(Sdec, jnp.float32)
            curH, curW, layout_cin = Ho, Wo, cout
        d = deblocks[i]
        E, bi, P, Ho, Wo = _lower_deconv_np(
            d["w"], d["scale"], d["bias"], d["stride"], curH, curW, ch_off[i], Ctot, nimg)
        plan.append(("deconv", int(d["stride"]), Wo * Ctot))
        add(E, jnp.bfloat16)
        add(bi, jnp.float32)
        if P is not None:
            add(P, jnp.float32)
        curH, curW, layout_cin = Ho, Wo, Ctot
    return tuple(plan), ops, specs, (curH, curW, Ctot)


# ------------------------------- forward (Pallas) ------------------------------------
def _fold_batch_for_this_device():
    """v5e/v6e have a single TensorCore per chip -> stack the batch along the sublane
    axis in one grid step.  Dual-TC / megacore parts (v7x, v4/v5p) keep grid=(N,)
    "parallel" so each core takes one image."""
    try:
        kind = jax.devices()[0].device_kind.lower()
    except Exception:
        return False
    return any(t in kind for t in ("v5 lite", "v5e", "v5litepod", "v6 lite", "v6e"))


def forward_pallas(x_nhwc, params):
    """Mirrors BaseBEVBackbone.forward (no-BiFPN config); NHWC in, NHWC out."""
    N, H, W, Cin = x_nhwc.shape

    # Zero-pad channels so the first-layer lane width W*Cin is a multiple of 128.
    cin_pad = Cin
    for c in range(Cin, Cin + 129):
        if (W * c) % 128 == 0:
            cin_pad = c
            break
    if cin_pad != Cin:
        x_nhwc = jnp.pad(x_nhwc, ((0, 0), (0, 0), (0, 0), (0, cin_pad - Cin)))

    fold_batch = _fold_batch_for_this_device()
    nimg = N if fold_batch else 1
    plan, w_ops, w_specs, (Ho, Wo, Ctot) = prepare_lowered(params, H, W, nimg, cin_pad)

    if fold_batch:
        xf = x_nhwc.reshape(1, N * H, W * cin_pad)          # images stacked along rows
        grid = (1,)
        x_spec = pl.BlockSpec((1, N * H, W * cin_pad), lambda n: (0, 0, 0))
        out_spec = pl.BlockSpec((1, N * Ho, Wo * Ctot), lambda n: (0, 0, 0))
        out_shape = jax.ShapeDtypeStruct((1, N * Ho, Wo * Ctot), jnp.float32)
        dims = ("arbitrary",)
    else:
        xf = x_nhwc.reshape(N, H, W * cin_pad)              # lane-dense (H, W*C) layout
        grid = (N,)
        x_spec = pl.BlockSpec((1, H, W * cin_pad), lambda n: (n, 0, 0))
        out_spec = pl.BlockSpec((1, Ho, Wo * Ctot), lambda n: (n, 0, 0))
        out_shape = jax.ShapeDtypeStruct((N, Ho, Wo * Ctot), jnp.float32)
        dims = ("parallel",)                                # v7x: one image per TensorCore

    out = pl.pallas_call(
        functools.partial(_fused_bev_kernel, plan),
        out_shape=out_shape,
        grid=grid,
        in_specs=[x_spec] + w_specs,
        out_specs=out_spec,
        compiler_params=pltpu.CompilerParams(
            dimension_semantics=dims,
            vmem_limit_bytes=32 * 1024 * 1024),
    )(xf, *w_ops)
    return out.reshape(N, Ho, Wo, Ctot)                     # free row-major reshape


# ------------------------------- parameter init --------------------------------------
def _bn_fold(key, cout):
    k1, k2, k3 = jax.random.split(key, 3)
    gamma = jax.random.uniform(k1, (cout,), jnp.float32, 0.5, 1.5)
    beta = 0.1 * jax.random.normal(k2, (cout,), jnp.float32)
    running_mean = 0.1 * jax.random.normal(k3, (cout,), jnp.float32)
    running_var = jnp.ones((cout,), jnp.float32)
    scale = gamma / jnp.sqrt(running_var + BN_EPS)
    bias = beta - running_mean * scale
    return scale, bias


def _make_conv_layer(key, cin, cout, stride):
    kw, kb = jax.random.split(key)
    # torch Conv2d weight (Cout, Cin, 3, 3) -> stored as HWIO (3, 3, Cin, Cout)
    w = jax.random.normal(kw, (3, 3, cin, cout), jnp.float32) / np.sqrt(9.0 * cin)
    scale, bias = _bn_fold(kb, cout)
    return dict(w=w, scale=scale, bias=bias, stride=stride)


def _make_deconv_layer(key, cin, cout, stride):
    kw, kb = jax.random.split(key)
    # torch ConvTranspose2d weight (Cin, Cout, k, k) -> stored as (Cin, k, k, Cout)
    w = jax.random.normal(kw, (cin, stride, stride, cout), jnp.float32) / np.sqrt(float(cin))
    scale, bias = _bn_fold(kb, cout)
    return dict(w=w, scale=scale, bias=bias, stride=stride)


def init_params(key):
    layer_nums = MODEL_CFG["LAYER_NUMS"]
    layer_strides = MODEL_CFG["LAYER_STRIDES"]
    num_filters = MODEL_CFG["NUM_FILTERS"]
    up_strides = MODEL_CFG["UPSAMPLE_STRIDES"]
    up_filters = MODEL_CFG["NUM_UPSAMPLE_FILTERS"]
    c_in_list = [INPUT_CHANNELS] + list(num_filters[:-1])

    blocks, deblocks = [], []
    for i in range(len(layer_nums)):
        layers = []
        key, k = jax.random.split(key)
        layers.append(_make_conv_layer(k, c_in_list[i], num_filters[i], layer_strides[i]))
        for _ in range(layer_nums[i]):
            key, k = jax.random.split(key)
            layers.append(_make_conv_layer(k, num_filters[i], num_filters[i], 1))
        blocks.append(layers)
        key, k = jax.random.split(key)
        deblocks.append(_make_deconv_layer(k, num_filters[i], up_filters[i], up_strides[i]))
    return blocks, deblocks


# ------------------------------- XLA reference ---------------------------------------
# Mirrors the kernel's mixed precision exactly: bf16-rounded matmul operands (weights
# with BN scale folded), f32 accumulation, f32 bias + ReLU epilogue.
def _bf16(x):
    return jnp.asarray(x, jnp.bfloat16).astype(jnp.float32)


def _ref_conv(x, w, scale, bias, stride):
    w_eff = _bf16(w * scale)
    y = jax.lax.conv_general_dilated(
        _bf16(x), w_eff, window_strides=(stride, stride), padding=((1, 1), (1, 1)),
        dimension_numbers=("NHWC", "HWIO", "NHWC"),
        preferred_element_type=jnp.float32, precision=jax.lax.Precision.HIGHEST)
    return jnp.maximum(y + bias, 0.0)


def _ref_deconv(x, w, scale, bias, s):
    N, H, W, Cin = x.shape
    Cout = w.shape[-1]
    w_eff = _bf16(w * scale)
    y = jnp.einsum("nhwc,cabo->nhawbo", _bf16(x), w_eff,
                   precision=jax.lax.Precision.HIGHEST).reshape(N, H * s, W * s, Cout)
    return jnp.maximum(y + bias, 0.0)


def forward_reference(x, params):
    blocks, deblocks = params
    ups = []
    for i in range(len(blocks)):
        for layer in blocks[i]:
            x = _ref_conv(x, layer["w"], layer["scale"], layer["bias"], layer["stride"])
        d = deblocks[i]
        ups.append(_ref_deconv(x, d["w"], d["scale"], d["bias"], d["stride"]))
        x = jnp.concatenate(ups, axis=-1) if len(ups) > 1 else ups[0]
    return x


# ------------------------------------ main --------------------------------------------
if __name__ == "__main__":
    key = jax.random.PRNGKey(0)
    key, kx = jax.random.split(key)

    # data_dict['spatial_features'] in PyTorch is NCHW: (batch=2, C=4, H=16, W=16)
    x_nchw = jax.random.normal(kx, (2, INPUT_CHANNELS, 16, 16), jnp.float32)
    x_nhwc = jnp.transpose(x_nchw, (0, 2, 3, 1))

    params = init_params(key)

    out = jax.block_until_ready(forward_pallas(x_nhwc, params))

    # sanity: shape must be (2, 16, 16, sum(NUM_UPSAMPLE_FILTERS)=16)  (NHWC)
    assert out.shape == (2, 16, 16, sum(MODEL_CFG["NUM_UPSAMPLE_FILTERS"])), out.shape

    ref = jax.block_until_ready(forward_reference(x_nhwc, params))
    np.testing.assert_allclose(np.asarray(out), np.asarray(ref), rtol=5e-3, atol=5e-3)

    print("KERNEL_OK")
</pallas_src>

<mosaic_0001>
module attributes {stable_mosaic.version = 11 : i64} {
  func.func @_fused_bev_kernel(%arg0: i32, %arg1: memref<1x16x128xf32, #tpu.memory_space<vmem>>, %arg2: memref<384x128xbf16, #tpu.memory_space<vmem>>, %arg3: memref<1x128xf32, #tpu.memory_space<vmem>>, %arg4: memref<384x128xbf16, #tpu.memory_space<vmem>>, %arg5: memref<1x128xf32, #tpu.memory_space<vmem>>, %arg6: memref<128x256xbf16, #tpu.memory_space<vmem>>, %arg7: memref<1x256xf32, #tpu.memory_space<vmem>>, %arg8: memref<768x128xbf16, #tpu.memory_space<vmem>>, %arg9: memref<1x128xf32, #tpu.memory_space<vmem>>, %arg10: memref<8x16xf32, #tpu.memory_space<vmem>>, %arg11: memref<384x128xbf16, #tpu.memory_space<vmem>>, %arg12: memref<1x128xf32, #tpu.memory_space<vmem>>, %arg13: memref<128x512xbf16, #tpu.memory_space<vmem>>, %arg14: memref<1x256xf32, #tpu.memory_space<vmem>>, %arg15: memref<2x16x8xf32, #tpu.memory_space<vmem>>, %arg16: memref<1x16x256xf32, #tpu.memory_space<vmem>>) attributes {dimension_semantics = [#tpu.dimension_semantics<parallel>], iteration_bounds = array<i64: 2>, scalar_prefetch = 0 : i64, scratch_operands = 0 : i64, tpu.core_type = #tpu.core_type<tc>, window_params = [{transform_indices = @transform_0, window_bounds = array<i64: 1, 16, 128>}, {pipeline_mode = #tpu.pipeline_mode<synchronous>, transform_indices = @transform_1, window_bounds = array<i64: 384, 128>}, {pipeline_mode = #tpu.pipeline_mode<synchronous>, transform_indices = @transform_2, window_bounds = array<i64: 1, 128>}, {pipeline_mode = #tpu.pipeline_mode<synchronous>, transform_indices = @transform_3, window_bounds = array<i64: 384, 128>}, {pipeline_mode = #tpu.pipeline_mode<synchronous>, transform_indices = @transform_4, window_bounds = array<i64: 1, 128>}, {pipeline_mode = #tpu.pipeline_mode<synchronous>, transform_indices = @transform_5, window_bounds = array<i64: 128, 256>}, {pipeline_mode = #tpu.pipeline_mode<synchronous>, transform_indices = @transform_6, window_bounds = array<i64: 1, 256>}, {pipeline_mode = #tpu.pipeline_mode<synchronous>, transform_indices = @transform_7, window_bounds = array<i64: 768, 128>}, {pipeline_mode = #tpu.pipeline_mode<synchronous>, transform_indices = @transform_8, window_bounds = array<i64: 1, 128>}, {pipeline_mode = #tpu.pipeline_mode<synchronous>, transform_indices = @transform_9, window_bounds = array<i64: 8, 16>}, {pipeline_mode = #tpu.pipeline_mode<synchronous>, transform_indices = @transform_10, window_bounds = array<i64: 384, 128>}, {pipeline_mode = #tpu.pipeline_mode<synchronous>, transform_indices = @transform_11, window_bounds = array<i64: 1, 128>}, {pipeline_mode = #tpu.pipeline_mode<synchronous>, transform_indices = @transform_12, window_bounds = array<i64: 128, 512>}, {pipeline_mode = #tpu.pipeline_mode<synchronous>, transform_indices = @transform_13, window_bounds = array<i64: 1, 256>}, {pipeline_mode = #tpu.pipeline_mode<synchronous>, transform_indices = @transform_14, window_bounds = array<i64: 2, 16, 8>}, {transform_indices = @transform_15, window_bounds = array<i64: 1, 16, 256>}]} {
    %c0 = arith.constant 0 : index
    %c0_0 = arith.constant 0 : index
    %c0_1 = arith.constant 0 : index
    %0 = vector.load %arg1[%c0, %c0_0, %c0_1] : memref<1x16x128xf32, #tpu.memory_space<vmem>>, vector<1x16x128xf32>
    %1 = vector.shape_cast %0 : vector<1x16x128xf32> to vector<16x128xf32>
    %2 = tpu.iota {dimensions = array<i32: 0>} : vector<16x128xi32>
    %c0_i32 = arith.constant 0 : i32
    %3 = vector.broadcast %c0_i32 : i32 to vector<16x128xi32>
    %4 = arith.cmpi eq, %2, %3 : vector<16x128xi32>
    %5 = vector.extract_strided_slice %1 {offsets = [15, 0], sizes = [1, 128], strides = [1, 1]} : vector<16x128xf32> to vector<1x128xf32>
    %6 = vector.extract_strided_slice %1 {offsets = [0, 0], sizes = [15, 128], strides = [1, 1]} : vector<16x128xf32> to vector<15x128xf32>
    %7 = tpu.concatenate %5, %6 in 0 : vector<1x128xf32>, vector<15x128xf32> -> vector<16x128xf32>
    %cst = arith.constant 0.000000e+00 : f32
    %8 = vector.broadcast %cst : f32 to vector<16x128xf32>
    %9 = arith.select %4, %8, %7 : vector<16x128xi1>, vector<16x128xf32>
    %c15_i32 = arith.constant 15 : i32
    %10 = vector.broadcast %c15_i32 : i32 to vector<16x128xi32>
    %11 = arith.cmpi eq, %2, %10 : vector<16x128xi32>
    %12 = vector.extract_strided_slice %1 {offsets = [1, 0], sizes = [15, 128], strides = [1, 1]} : vector<16x128xf32> to vector<15x128xf32>
    %13 = vector.extract_strided_slice %1 {offsets = [0, 0], sizes = [1, 128], strides = [1, 1]} : vector<16x128xf32> to vector<1x128xf32>
    %14 = tpu.concatenate %12, %13 in 0 : vector<15x128xf32>, vector<1x128xf32> -> vector<16x128xf32>
    %cst_2 = arith.constant 0.000000e+00 : f32
    %15 = vector.broadcast %cst_2 : f32 to vector<16x128xf32>
    %16 = arith.select %11, %15, %14 : vector<16x128xi1>, vector<16x128xf32>
    %17 = tpu.concatenate %9, %1, %16 in 1 : vector<16x128xf32>, vector<16x128xf32>, vector<16x128xf32> -> vector<16x384xf32>
    %18 = arith.truncf %17 : vector<16x384xf32> to vector<16x384xbf16>
    %c0_3 = arith.constant 0 : index
    %c0_4 = arith.constant 0 : index
    %19 = vector.load %arg2[%c0_3, %c0_4] : memref<384x128xbf16, #tpu.memory_space<vmem>>, vector<384x128xbf16>
    %cst_5 = arith.constant dense<0.000000e+00> : vector<16x128xf32>
    %20 = tpu.matmul %18, %19, %cst_5 {dimension_numbers = #tpu.dot_dimension_numbers<[1], [0], [0], [1], [0, 0, 1, 1], [], []>} : vector<16x384xbf16>, vector<384x128xbf16>, vector<16x128xf32> -> vector<16x128xf32>
    %c0_6 = arith.constant 0 : index
    %c0_7 = arith.constant 0 : index
    %21 = vector.load %arg3[%c0_6, %c0_7] : memref<1x128xf32, #tpu.memory_space<vmem>>, vector<1x128xf32>
    %22 = vector.broadcast %21 : vector<1x128xf32> to vector<16x128xf32>
    %23 = arith.addf %20, %22 : vector<16x128xf32>
    %cst_8 = arith.constant 0.000000e+00 : f32
    %24 = vector.broadcast %cst_8 : f32 to vector<16x128xf32>
    %25 = arith.maximumf %23, %24 : vector<16x128xf32>
    %26 = tpu.iota {dimensions = array<i32: 0>} : vector<16x128xi32>
    %c0_i32_9 = arith.constant 0 : i32
    %27 = vector.broadcast %c0_i32_9 : i32 to vector<16x128xi32>
    %28 = arith.cmpi eq, %26, %27 : vector<16x128xi32>
    %29 = vector.extract_strided_slice %25 {offsets = [15, 0], sizes = [1, 128], strides = [1, 1]} : vector<16x128xf32> to vector<1x128xf32>
    %30 = vector.extract_strided_slice %25 {offsets = [0, 0], sizes = [15, 128], strides = [1, 1]} : vector<16x128xf32> to vector<15x128xf32>
    %31 = tpu.concatenate %29, %30 in 0 : vector<1x128xf32>, vector<15x128xf32> -> vector<16x128xf32>
    %cst_10 = arith.constant 0.000000e+00 : f32
    %32 = vector.broadcast %cst_10 : f32 to vector<16x128xf32>
    %33 = arith.select %28, %32, %31 : vector<16x128xi1>, vector<16x128xf32>
    %c15_i32_11 = arith.constant 15 : i32
    %34 = vector.broadcast %c15_i32_11 : i32 to vector<16x128xi32>
    %35 = arith.cmpi eq, %26, %34 : vector<16x128xi32>
    %36 = vector.extract_strided_slice %25 {offsets = [1, 0], sizes = [15, 128], strides = [1, 1]} : vector<16x128xf32> to vector<15x128xf32>
    %37 = vector.extract_strided_slice %25 {offsets = [0, 0], sizes = [1, 128], strides = [1, 1]} : vector<16x128xf32> to vector<1x128xf32>
    %38 = tpu.concatenate %36, %37 in 0 : vector<15x128xf32>, vector<1x128xf32> -> vector<16x128xf32>
    %cst_12 = arith.constant 0.000000e+00 : f32
    %39 = vector.broadcast %cst_12 : f32 to vector<16x128xf32>
    %40 = arith.select %35, %39, %38 : vector<16x128xi1>, vector<16x128xf32>
    %41 = tpu.concatenate %33, %25, %40 in 1 : vector<16x128xf32>, vector<16x128xf32>, vector<16x128xf32> -> vector<16x384xf32>
    %42 = arith.truncf %41 : vector<16x384xf32> to vector<16x384xbf16>
    %c0_13 = arith.constant 0 : index
    %c0_14 = arith.constant 0 : index
    %43 = vector.load %arg4[%c0_13, %c0_14] : memref<384x128xbf16, #tpu.memory_space<vmem>>, vector<384x128xbf16>
    %cst_15 = arith.constant dense<0.000000e+00> : vector<16x128xf32>
    %44 = tpu.matmul %42, %43, %cst_15 {dimension_numbers = #tpu.dot_dimension_numbers<[1], [0], [0], [1], [0, 0, 1, 1], [], []>} : vector<16x384xbf16>, vector<384x128xbf16>, vector<16x128xf32> -> vector<16x128xf32>
    %c0_16 = arith.constant 0 : index
    %c0_17 = arith.constant 0 : index
    %45 = vector.load %arg5[%c0_16, %c0_17] : memref<1x128xf32, #tpu.memory_space<vmem>>, vector<1x128xf32>
    %46 = vector.broadcast %45 : vector<1x128xf32> to vector<16x128xf32>
    %47 = arith.addf %44, %46 : vector<16x128xf32>
    %cst_18 = arith.constant 0.000000e+00 : f32
    %48 = vector.broadcast %cst_18 : f32 to vector<16x128xf32>
    %49 = arith.maximumf %47, %48 : vector<16x128xf32>
    %50 = arith.truncf %49 : vector<16x128xf32> to vector<16x128xbf16>
    %c0_19 = arith.constant 0 : index
    %c0_20 = arith.constant 0 : index
    %51 = vector.load %arg6[%c0_19, %c0_20] : memref<128x256xbf16, #tpu.memory_space<vmem>>, vector<128x256xbf16>
    %cst_21 = arith.constant dense<0.000000e+00> : vector<16x256xf32>
    %52 = tpu.matmul %50, %51, %cst_21 {dimension_numbers = #tpu.dot_dimension_numbers<[1], [0], [0], [1], [0, 0, 1, 1], [], []>} : vector<16x128xbf16>, vector<128x256xbf16>, vector<16x256xf32> -> vector<16x256xf32>
    %c0_22 = arith.constant 0 : index
    %c0_23 = arith.constant 0 : index
    %53 = vector.load %arg7[%c0_22, %c0_23] : memref<1x256xf32, #tpu.memory_space<vmem>>, vector<1x256xf32>
    %54 = vector.broadcast %53 : vector<1x256xf32> to vector<16x256xf32>
    %55 = arith.addf %52, %54 : vector<16x256xf32>
    %cst_24 = arith.constant 0.000000e+00 : f32
    %56 = vector.broadcast %cst_24 : f32 to vector<16x256xf32>
    %57 = arith.maximumf %55, %56 : vector<16x256xf32>
    %58 = tpu.iota {dimensions = array<i32: 0>} : vector<16x256xi32>
    %c0_i32_25 = arith.constant 0 : i32
    %59 = vector.broadcast %c0_i32_25 : i32 to vector<16x256xi32>
    %60 = arith.cmpi eq, %58, %59 : vector<16x256xi32>
    %61 = vector.extract_strided_slice %57 {offsets = [15, 0], sizes = [1, 256], strides = [1, 1]} : vector<16x256xf32> to vector<1x256xf32>
    %62 = vector.extract_strided_slice %57 {offsets = [0, 0], sizes = [15, 256], strides = [1, 1]} : vector<16x256xf32> to vector<15x256xf32>
    %63 = tpu.concatenate %61, %62 in 0 : vector<1x256xf32>, vector<15x256xf32> -> vector<16x256xf32>
    %cst_26 = arith.constant 0.000000e+00 : f32
    %64 = vector.broadcast %cst_26 : f32 to vector<16x256xf32>
    %65 = arith.select %60, %64, %63 : vector<16x256xi1>, vector<16x256xf32>
    %c15_i32_27 = arith.constant 15 : i32
    %66 = vector.broadcast %c15_i32_27 : i32 to vector<16x256xi32>
    %67 = arith.cmpi eq, %58, %66 : vector<16x256xi32>
    %68 = vector.extract_strided_slice %57 {offsets = [1, 0], sizes = [15, 256], strides = [1, 1]} : vector<16x256xf32> to vector<15x256xf32>
    %69 = vector.extract_strided_slice %57 {offsets = [0, 0], sizes = [1, 256], strides = [1, 1]} : vector<16x256xf32> to vector<1x256xf32>
    %70 = tpu.concatenate %68, %69 in 0 : vector<15x256xf32>, vector<1x256xf32> -> vector<16x256xf32>
    %cst_28 = arith.constant 0.000000e+00 : f32
    %71 = vector.broadcast %cst_28 : f32 to vector<16x256xf32>
    %72 = arith.select %67, %71, %70 : vector<16x256xi1>, vector<16x256xf32>
    %73 = tpu.concatenate %65, %57, %72 in 1 : vector<16x256xf32>, vector<16x256xf32>, vector<16x256xf32> -> vector<16x768xf32>
    %c0_29 = arith.constant 0 : index
    %c0_30 = arith.constant 0 : index
    %74 = vector.load %arg10[%c0_29, %c0_30] : memref<8x16xf32, #tpu.memory_space<vmem>>, vector<8x16xf32>
    %cst_31 = arith.constant dense<0.000000e+00> : vector<8x768xf32>
    %75 = tpu.matmul %74, %73, %cst_31 {dimension_numbers = #tpu.dot_dimension_numbers<[1], [0], [0], [1], [0, 0, 1, 1], [], []>} : vector<8x16xf32>, vector<16x768xf32>, vector<8x768xf32> -> vector<8x768xf32>
    %76 = arith.truncf %75 : vector<8x768xf32> to vector<8x768xbf16>
    %c0_32 = arith.constant 0 : index
    %c0_33 = arith.constant 0 : index
    %77 = vector.load %arg8[%c0_32, %c0_33] : memref<768x128xbf16, #tpu.memory_space<vmem>>, vector<768x128xbf16>
    %cst_34 = arith.constant dense<0.000000e+00> : vector<8x128xf32>
    %78 = tpu.matmul %76, %77, %cst_34 {dimension_numbers = #tpu.dot_dimension_numbers<[1], [0], [0], [1], [0, 0, 1, 1], [], []>} : vector<8x768xbf16>, vector<768x128xbf16>, vector<8x128xf32> -> vector<8x128xf32>
    %c0_35 = arith.constant 0 : index
    %c0_36 = arith.constant 0 : index
    %79 = vector.load %arg9[%c0_35, %c0_36] : memref<1x128xf32, #tpu.memory_space<vmem>>, vector<1x128xf32>
    %80 = vector.broadcast %79 : vector<1x128xf32> to vector<8x128xf32>
    %81 = arith.addf %78, %80 : vector<8x128xf32>
    %cst_37 = arith.constant 0.000000e+00 : f32
    %82 = vector.broadcast %cst_37 : f32 to vector<8x128xf32>
    %83 = arith.maximumf %81, %82 : vector<8x128xf32>
    %84 = tpu.iota {dimensions = array<i32: 0>} : vector<8x128xi32>
    %c0_i32_38 = arith.constant 0 : i32
    %85 = vector.broadcast %c0_i32_38 : i32 to vector<8x128xi32>
    %86 = arith.cmpi eq, %84, %85 : vector<8x128xi32>
    %87 = vector.extract_strided_slice %83 {offsets = [7, 0], sizes = [1, 128], strides = [1, 1]} : vector<8x128xf32> to vector<1x128xf32>
    %88 = vector.extract_strided_slice %83 {offsets = [0, 0], sizes = [7, 128], strides = [1, 1]} : vector<8x128xf32> to vector<7x128xf32>
    %89 = tpu.concatenate %87, %88 in 0 : vector<1x128xf32>, vector<7x128xf32> -> vector<8x128xf32>
    %cst_39 = arith.constant 0.000000e+00 : f32
    %90 = vector.broadcast %cst_39 : f32 to vector<8x128xf32>
    %91 = arith.select %86, %90, %89 : vector<8x128xi1>, vector<8x128xf32>
    %c7_i32 = arith.constant 7 : i32
    %92 = vector.broadcast %c7_i32 : i32 to vector<8x128xi32>
    %93 = arith.cmpi eq, %84, %92 : vector<8x128xi32>
    %94 = vector.extract_strided_slice %83 {offsets = [1, 0], sizes = [7, 128], strides = [1, 1]} : vector<8x128xf32> to vector<7x128xf32>
    %95 = vector.extract_strided_slice %83 {offsets = [0, 0], sizes = [1, 128], strides = [1, 1]} : vector<8x128xf32> to vector<1x128xf32>
    %96 = tpu.concatenate %94, %95 in 0 : vector<7x128xf32>, vector<1x128xf32> -> vector<8x128xf32>
    %cst_40 = arith.constant 0.000000e+00 : f32
    %97 = vector.broadcast %cst_40 : f32 to vector<8x128xf32>
    %98 = arith.select %93, %97, %96 : vector<8x128xi1>, vector<8x128xf32>
    %99 = tpu.concatenate %91, %83, %98 in 1 : vector<8x128xf32>, vector<8x128xf32>, vector<8x128xf32> -> vector<8x384xf32>
    %100 = arith.truncf %99 : vector<8x384xf32> to vector<8x384xbf16>
    %c0_41 = arith.constant 0 : index
    %c0_42 = arith.constant 0 : index
    %101 = vector.load %arg11[%c0_41, %c0_42] : memref<384x128xbf16, #tpu.memory_space<vmem>>, vector<384x128xbf16>
    %cst_43 = arith.constant dense<0.000000e+00> : vector<8x128xf32>
    %102 = tpu.matmul %100, %101, %cst_43 {dimension_numbers = #tpu.dot_dimension_numbers<[1], [0], [0], [1], [0, 0, 1, 1], [], []>} : vector<8x384xbf16>, vector<384x128xbf16>, vector<8x128xf32> -> vector<8x128xf32>
    %c0_44 = arith.constant 0 : index
    %c0_45 = arith.constant 0 : index
    %103 = vector.load %arg12[%c0_44, %c0_45] : memref<1x128xf32, #tpu.memory_space<vmem>>, vector<1x128xf32>
    %104 = vector.broadcast %103 : vector<1x128xf32> to vector<8x128xf32>
    %105 = arith.addf %102, %104 : vector<8x128xf32>
    %cst_46 = arith.constant 0.000000e+00 : f32
    %106 = vector.broadcast %cst_46 : f32 to vector<8x128xf32>
    %107 = arith.maximumf %105, %106 : vector<8x128xf32>
    %108 = arith.truncf %107 : vector<8x128xf32> to vector<8x128xbf16>
    %c0_47 = arith.constant 0 : index
    %c0_48 = arith.constant 0 : index
    %109 = vector.load %arg13[%c0_47, %c0_48] : memref<128x512xbf16, #tpu.memory_space<vmem>>, vector<128x512xbf16>
    %cst_49 = arith.constant dense<0.000000e+00> : vector<8x512xf32>
    %110 = tpu.matmul %108, %109, %cst_49 {dimension_numbers = #tpu.dot_dimension_numbers<[1], [0], [0], [1], [0, 0, 1, 1], [], []>} : vector<8x128xbf16>, vector<128x512xbf16>, vector<8x512xf32> -> vector<8x512xf32>
    %c0_50 = arith.constant 0 : index
    %c0_51 = arith.constant 0 : index
    %c0_52 = arith.constant 0 : index
    %111 = vector.load %arg15[%c0_50, %c0_51, %c0_52] : memref<2x16x8xf32, #tpu.memory_space<vmem>>, vector<1x16x8xf32>
    %112 = vector.shape_cast %111 : vector<1x16x8xf32> to vector<16x8xf32>
    %113 = vector.extract_strided_slice %110 {offsets = [0, 0], sizes = [8, 256], strides = [1, 1]} : vector<8x512xf32> to vector<8x256xf32>
    %cst_53 = arith.constant dense<0.000000e+00> : vector<16x256xf32>
    %114 = tpu.matmul %112, %113, %cst_53 {dimension_numbers = #tpu.dot_dimension_numbers<[1], [0], [0], [1], [0, 0, 1, 1], [], []>} : vector<16x8xf32>, vector<8x256xf32>, vector<16x256xf32> -> vector<16x256xf32>
    %c1 = arith.constant 1 : index
    %c0_54 = arith.constant 0 : index
    %c0_55 = arith.constant 0 : index
    %115 = vector.load %arg15[%c1, %c0_54, %c0_55] : memref<2x16x8xf32, #tpu.memory_space<vmem>>, vector<1x16x8xf32>
    %116 = vector.shape_cast %115 : vector<1x16x8xf32> to vector<16x8xf32>
    %117 = vector.extract_strided_slice %110 {offsets = [0, 256], sizes = [8, 256], strides = [1, 1]} : vector<8x512xf32> to vector<8x256xf32>
    %cst_56 = arith.constant dense<0.000000e+00> : vector<16x256xf32>
    %118 = tpu.matmul %116, %117, %cst_56 {dimension_numbers = #tpu.dot_dimension_numbers<[1], [0], [0], [1], [0, 0, 1, 1], [], []>} : vector<16x8xf32>, vector<8x256xf32>, vector<16x256xf32> -> vector<16x256xf32>
    %119 = arith.addf %114, %118 : vector<16x256xf32>
    %c0_57 = arith.constant 0 : index
    %c0_58 = arith.constant 0 : index
    %120 = vector.load %arg14[%c0_57, %c0_58] : memref<1x256xf32, #tpu.memory_space<vmem>>, vector<1x256xf32>
    %121 = vector.broadcast %120 : vector<1x256xf32> to vector<16x256xf32>
    %122 = arith.addf %119, %121 : vector<16x256xf32>
    %cst_59 = arith.constant 0.000000e+00 : f32
    %123 = vector.broadcast %cst_59 : f32 to vector<16x256xf32>
    %124 = arith.maximumf %122, %123 : vector<16x256xf32>
    %125 = arith.addf %57, %124 : vector<16x256xf32>
    %c0_60 = arith.constant 0 : index
    %c0_61 = arith.constant 0 : index
    %c0_62 = arith.constant 0 : index
    %126 = vector.load %arg16[%c0_60, %c0_61, %c0_62] : memref<1x16x256xf32, #tpu.memory_space<vmem>>, vector<1x16x256xf32>
    %127 = vector.shape_cast %126 : vector<1x16x256xf32> to vector<16x256xf32>
    %128 = vector.shape_cast %125 : vector<16x256xf32> to vector<1x16x256xf32>
    tpu.vector_store %arg16[%c0_60, %c0_61, %c0_62], %128 {strides = array<i32>} : memref<1x16x256xf32, #tpu.memory_space<vmem>>, vector<1x16x256xf32>,
    return
  }
  func.func @transform_0(%arg0: i32) -> (i32, i32, i32) {
    %c0_i32 = arith.constant 0 : i32
    %c0_i32_0 = arith.constant 0 : i32
    %c0_i32_1 = arith.constant 0 : i32
    return %arg0, %c0_i32, %c0_i32_0 : i32, i32, i32
  }
  func.func @transform_1(%arg0: i32) -> (i32, i32) {
    %c0_i32 = arith.constant 0 : i32
    %c0_i32_0 = arith.constant 0 : i32
    %c0_i32_1 = arith.constant 0 : i32
    return %c0_i32, %c0_i32_0 : i32, i32
  }
  func.func @transform_2(%arg0: i32) -> (i32, i32) {
    %c0_i32 = arith.constant 0 : i32
    %c0_i32_0 = arith.constant 0 : i32
    %c0_i32_1 = arith.constant 0 : i32
    return %c0_i32, %c0_i32_0 : i32, i32
  }
  func.func @transform_3(%arg0: i32) -> (i32, i32) {
    %c0_i32 = arith.constant 0 : i32
    %c0_i32_0 = arith.constant 0 : i32
    %c0_i32_1 = arith.constant 0 : i32
    return %c0_i32, %c0_i32_0 : i32, i32
  }
  func.func @transform_4(%arg0: i32) -> (i32, i32) {
    %c0_i32 = arith.constant 0 : i32
    %c0_i32_0 = arith.constant 0 : i32
    %c0_i32_1 = arith.constant 0 : i32
    return %c0_i32, %c0_i32_0 : i32, i32
  }
  func.func @transform_5(%arg0: i32) -> (i32, i32) {
    %c0_i32 = arith.constant 0 : i32
    %c0_i32_0 = arith.constant 0 : i32
    %c0_i32_1 = arith.constant 0 : i32
    return %c0_i32, %c0_i32_0 : i32, i32
  }
  func.func @transform_6(%arg0: i32) -> (i32, i32) {
    %c0_i32 = arith.constant 0 : i32
    %c0_i32_0 = arith.constant 0 : i32
    %c0_i32_1 = arith.constant 0 : i32
    return %c0_i32, %c0_i32_0 : i32, i32
  }
  func.func @transform_7(%arg0: i32) -> (i32, i32) {
    %c0_i32 = arith.constant 0 : i32
    %c0_i32_0 = arith.constant 0 : i32
    %c0_i32_1 = arith.constant 0 : i32
    return %c0_i32, %c0_i32_0 : i32, i32
  }
  func.func @transform_8(%arg0: i32) -> (i32, i32) {
    %c0_i32 = arith.constant 0 : i32
    %c0_i32_0 = arith.constant 0 : i32
    %c0_i32_1 = arith.constant 0 : i32
    return %c0_i32, %c0_i32_0 : i32, i32
  }
  func.func @transform_9(%arg0: i32) -> (i32, i32) {
    %c0_i32 = arith.constant 0 : i32
    %c0_i32_0 = arith.constant 0 : i32
    %c0_i32_1 = arith.constant 0 : i32
    return %c0_i32, %c0_i32_0 : i32, i32
  }
  func.func @transform_10(%arg0: i32) -> (i32, i32) {
    %c0_i32 = arith.constant 0 : i32
    %c0_i32_0 = arith.constant 0 : i32
    %c0_i32_1 = arith.constant 0 : i32
    return %c0_i32, %c0_i32_0 : i32, i32
  }
  func.func @transform_11(%arg0: i32) -> (i32, i32) {
    %c0_i32 = arith.constant 0 : i32
    %c0_i32_0 = arith.constant 0 : i32
    %c0_i32_1 = arith.constant 0 : i32
    return %c0_i32, %c0_i32_0 : i32, i32
  }
  func.func @transform_12(%arg0: i32) -> (i32, i32) {
    %c0_i32 = arith.constant 0 : i32
    %c0_i32_0 = arith.constant 0 : i32
    %c0_i32_1 = arith.constant 0 : i32
    return %c0_i32, %c0_i32_0 : i32, i32
  }
  func.func @transform_13(%arg0: i32) -> (i32, i32) {
    %c0_i32 = arith.constant 0 : i32
    %c0_i32_0 = arith.constant 0 : i32
    %c0_i32_1 = arith.constant 0 : i32
    return %c0_i32, %c0_i32_0 : i32, i32
  }
  func.func @transform_14(%arg0: i32) -> (i32, i32, i32) {
    %c0_i32 = arith.constant 0 : i32
    %c0_i32_0 = arith.constant 0 : i32
    %c0_i32_1 = arith.constant 0 : i32
    %c0_i32_2 = arith.constant 0 : i32
    return %c0_i32, %c0_i32_0, %c0_i32_1 : i32, i32, i32
  }
  func.func @transform_15(%arg0: i32) -> (i32, i32, i32) {
    %c0_i32 = arith.constant 0 : i32
    %c0_i32_0 = arith.constant 0 : i32
    %c0_i32_1 = arith.constant 0 : i32
    return %arg0, %c0_i32, %c0_i32_0 : i32, i32, i32
  }
}

</mosaic_0001>

<llo_original>
// kernel: tpu_custom_call.1
$region0: #{tpu_custom_call.1}
  #allocation0 [shape = 'u32[]', space=smem, size = 0x4, offset = 0x4, fixed_abs, tag = 'smem constant byte address 0x4 - core index']
  #allocation1 [shape = 'u32[144,128]{1,0:T(1,128)}', space=vmem, size = 0x12000, scoped, tag = 'internal scratch']
  %s0 = inlined_call_operand.vmem [shape: f32[2,16,128], index: 0, kind: input, shape index: {}]
  %s1 = inlined_call_operand.hbm [shape: bf16[384,128], index: 1, kind: input, shape index: {}]
  %s2 = inlined_call_operand.vmem [shape: f32[1,128], index: 2, kind: input, shape index: {}]
  %s3 = inlined_call_operand.hbm [shape: bf16[384,128], index: 3, kind: input, shape index: {}]
  %s4 = inlined_call_operand.vmem [shape: f32[1,128], index: 4, kind: input, shape index: {}]
  %s5 = inlined_call_operand.hbm [shape: bf16[128,256], index: 5, kind: input, shape index: {}]
  %s6 = inlined_call_operand.vmem [shape: f32[1,256], index: 6, kind: input, shape index: {}]
  %s7 = inlined_call_operand.hbm [shape: bf16[768,128], index: 7, kind: input, shape index: {}]
  %s8 = inlined_call_operand.vmem [shape: f32[1,128], index: 8, kind: input, shape index: {}]
  %s9 = inlined_call_operand.vmem [shape: f32[8,16], index: 9, kind: input, shape index: {}]
  %s10 = inlined_call_operand.hbm [shape: bf16[384,128], index: 10, kind: input, shape index: {}]
  %s11 = inlined_call_operand.vmem [shape: f32[1,128], index: 11, kind: input, shape index: {}]
  %s12 = inlined_call_operand.hbm [shape: bf16[128,512], index: 12, kind: input, shape index: {}]
  %s13 = inlined_call_operand.vmem [shape: f32[1,256], index: 13, kind: input, shape index: {}]
  %s14 = inlined_call_operand.vmem [shape: f32[2,16,8], index: 14, kind: input, shape index: {}]
  %s15 = inlined_call_operand.hbm [shape: f32[2,16,256], index: 15, kind: output, shape index: {}]
  %s16 = sld [smem:[#allocation0]]
  $region117: #{tpu_custom_call.1} parent=0
    _
  %s18 = ssub.s32 1, %s16
  %s19 = scalar_select 0, %s18, %s16
  $region1: #{tpu_custom_call.1} parent=0
    #allocation2 [shape = 'u8[98304]{0}', space=vmem, size = 0x18000, scoped, tag = 'input window, operand 1, single buffered']
    #allocation3 [shape = 's32[2]{0}', space=sflag, size = 0x8, scoped, tag = 'scoped memory for tpu_custom_call.1']
    #allocation4 [shape = 's32[2]{0}', space=sflag, size = 0x8, scoped, tag = 'scoped memory for tpu_custom_call.1']
    #allocation5 [shape = 'u8[98304]{0}', space=vmem, size = 0x18000, scoped, tag = 'input window, operand 3, single buffered']
    #allocation6 [shape = 's32[1]{0}', space=sflag, size = 0x4, scoped, tag = 'scoped memory for tpu_custom_call.1']
    #allocation7 [shape = 'u8[65536]{0}', space=vmem, size = 0x10000, scoped, tag = 'input window, operand 5, single buffered']
    #allocation8 [shape = 'u8[196608]{0}', space=vmem, size = 0x30000, scoped, tag = 'input window, operand 7, single buffered']
    #allocation9 [shape = 's32[1]{0}', space=sflag, size = 0x4, scoped, tag = 'scoped memory for tpu_custom_call.1']
    #allocation10 [shape = 'u8[98304]{0}', space=vmem, size = 0x18000, scoped, tag = 'input window, operand 10, single buffered']
    #allocation11 [shape = 'u8[131072]{0}', space=vmem, size = 0x20000, scoped, tag = 'input window, operand 12, single buffered']
    #allocation12 [shape = 's32[1]{0}', space=sflag, size = 0x4, scoped, tag = 'scoped memory for tpu_custom_call.1']
    #allocation13 [shape = 'u8[32768]{0}', space=vmem, size = 0x8000, scoped, tag = 'output window, operand 0']
    %20 = vsyncpa [#allocation3], 0
    %21 = vsyncpa [#allocation6], 0
    %22 = vsyncpa [#allocation9], 0
    %23 = vsyncpa [#allocation12], 0
    %24 = vsyncpa [#allocation4], 0
    %s25 = scalar_lea.sflag [#allocation4], 1
    %26 = vsyncpa %s25, 0
    loop: start=0, step=1, limit=4
    $region2: #{tpu_custom_call.1} parent=1 // loop_pre_header
      _
    $region3: #{tpu_custom_call.1} parent=1 // loop_header
      %s28 = sphi 0, %s32
      %p29 = scmp.ge.s32.totalorder %s28, 4
      %s38 = sphi 0, %s40
      %s41 = sphi 0, %s38
      %s42 = sphi 0, %s41
      %s58 = sphi 0, %s42
      %s62 = sphi 0, %s62
      %s64 = sphi 0, %s62
      %s65 = sphi 0, %s64
      %s79 = sphi 0, %s65
      %s83 = sphi 0, %s83
      %s85 = sphi 0, %s83
      %s86 = sphi 0, %s85
      %s100 = sphi 0, %s86
      %s104 = sphi 0, %s104
      %s106 = sphi 0, %s104
      %s107 = sphi 0, %s106
      %s121 = sphi 0, %s107
      %s125 = sphi 0, %s125
      %s127 = sphi 0, %s125
      %s128 = sphi 0, %s127
      %s142 = sphi 0, %s128
      %s146 = sphi 0, %s146
      %s148 = sphi 0, %s146
      %s149 = sphi 0, %s148
      %s163 = sphi 0, %s149
      %s167 = sphi 0, %s167
      %s169 = sphi 0, %s167
      %s170 = sphi 0, %s169
      %s184 = sphi 0, %s170
      %s188 = sphi 0, %s188
      %s190 = sphi 0, %s188
      %s191 = sphi 0, %s190
      %s205 = sphi 0, %s191
      %s209 = sphi 0, %s209
      %s211 = sphi 0, %s209
      %s212 = sphi 0, %s211
      %s226 = sphi 0, %s212
      %s230 = sphi 0, %s230
      %s232 = sphi 0, %s230
      %s233 = sphi 0, %s232
      %s247 = sphi 0, %s233
      %s251 = sphi 0, %s251
      %s253 = sphi 0, %s251
      %s254 = sphi 0, %s253
      %s268 = sphi 0, %s254
      %s272 = sphi 0, %s272
      %s274 = sphi 0, %s272
      %s275 = sphi 0, %s274
      %s289 = sphi 0, %s275
      %s293 = sphi 0, %s293
      %s295 = sphi 0, %s293
      %s296 = sphi 0, %s295
      %s310 = sphi 0, %s296
      %s314 = sphi 0, %s314
      %s316 = sphi 0, %s314
      %s317 = sphi 0, %s316
      %s331 = sphi 0, %s317
      %s335 = sphi 0, %s335
      %s337 = sphi 0, %s335
      %s338 = sphi 0, %s337
      %s352 = sphi 0, %s338
      %s358 = sphi 0, %s360
      %s361 = sphi 0, %s358
      %s362 = sphi 0, %s361
      %s378 = sphi 0, %s362
    $region4: #{tpu_custom_call.1} parent=1 // loop_header_branch
      %31 = sbr.rel (%p29) target = $region8
    $region5: #{tpu_custom_call.1} parent=1 // loop_body
      %s33 = ssub.s32 %s28, 1
      %s34 = ssub.s32 %s28, 2
      %s35 = sadd.s32 %s28, 1
      %s36 = ssub.s32 %s28, %s35
      %p37 = scmp.eq.s32.totalorder %s36, 0
      %s39 = sadd.s32 %s38, 1
      %s40 = scalar_select %p37, %s38, %s39
      %p43 = pneg %p37
      %p44 = scmp.eq.s32.totalorder %s28, 1
      %p45 = por %p43, %p44
      %p46 = scmp.ne.s32.totalorder %s38, %s41
      %p47 = scmp.eq.s32.totalorder %s28, 0
      %p48 = por %p46, %p47
      %p49 = scmp.ne.s32.totalorder %s38, %s41
      %p50 = scmp.eq.s32.totalorder %s33, 1
      %p51 = por %p49, %p50
      %p52 = scmp.ne.s32.totalorder %s41, %s42
      %p53 = scmp.eq.s32.totalorder %s33, 0
      %p54 = por %p52, %p53
      %p55 = scmp.ne.s32.totalorder %s41, %s42
      %p56 = scmp.eq.s32.totalorder %s34, 1
      %p57 = por %p55, %p56
      %p59 = scmp.ne.s32.totalorder %s42, %s58
      %p60 = scmp.eq.s32.totalorder %s34, 0
      %p61 = por %p59, %p60
      %s63 = sadd.s32 %s62, 1
      %p66 = scmp.eq.s32.totalorder %s28, 1
      %p67 = scmp.ne.s32.totalorder %s62, %s64
      %p68 = scmp.eq.s32.totalorder %s28, 0
      %p69 = por %p67, %p68
      %p70 = scmp.ne.s32.totalorder %s62, %s64
      %p71 = scmp.eq.s32.totalorder %s33, 1
      %p72 = por %p70, %p71
      %p73 = scmp.ne.s32.totalorder %s64, %s65
      %p74 = scmp.eq.s32.totalorder %s33, 0
      %p75 = por %p73, %p74
      %p76 = scmp.ne.s32.totalorder %s64, %s65
      %p77 = scmp.eq.s32.totalorder %s34, 1
      %p78 = por %p76, %p77
      %p80 = scmp.ne.s32.totalorder %s65, %s79
      %p81 = scmp.eq.s32.totalorder %s34, 0
      %p82 = por %p80, %p81
      %s84 = sadd.s32 %s83, 1
      %p87 = scmp.eq.s32.totalorder %s28, 1
      %p88 = scmp.ne.s32.totalorder %s83, %s85
      %p89 = scmp.eq.s32.totalorder %s28, 0
      %p90 = por %p88, %p89
      %p91 = scmp.ne.s32.totalorder %s83, %s85
      %p92 = scmp.eq.s32.totalorder %s33, 1
      %p93 = por %p91, %p92
      %p94 = scmp.ne.s32.totalorder %s85, %s86
      %p95 = scmp.eq.s32.totalorder %s33, 0
      %p96 = por %p94, %p95
      %p97 = scmp.ne.s32.totalorder %s85, %s86
      %p98 = scmp.eq.s32.totalorder %s34, 1
      %p99 = por %p97, %p98
      %p101 = scmp.ne.s32.totalorder %s86, %s100
      %p102 = scmp.eq.s32.totalorder %s34, 0
      %p103 = por %p101, %p102
      %s105 = sadd.s32 %s104, 1
      %p108 = scmp.eq.s32.totalorder %s28, 1
      %p109 = scmp.ne.s32.totalorder %s104, %s106
      %p110 = scmp.eq.s32.totalorder %s28, 0
      %p111 = por %p109, %p110
      %p112 = scmp.ne.s32.totalorder %s104, %s106
      %p113 = scmp.eq.s32.totalorder %s33, 1
      %p114 = por %p112, %p113
      %p115 = scmp.ne.s32.totalorder %s106, %s107
      %p116 = scmp.eq.s32.totalorder %s33, 0
      %p117 = por %p115, %p116
      %p118 = scmp.ne.s32.totalorder %s106, %s107
      %p119 = scmp.eq.s32.totalorder %s34, 1
      %p120 = por %p118, %p119
      %p122 = scmp.ne.s32.totalorder %s107, %s121
      %p123 = scmp.eq.s32.totalorder %s34, 0
      %p124 = por %p122, %p123
      %s126 = sadd.s32 %s125, 1
      %p129 = scmp.eq.s32.totalorder %s28, 1
      %p130 = scmp.ne.s32.totalorder %s125, %s127
      %p131 = scmp.eq.s32.totalorder %s28, 0
      %p132 = por %p130, %p131
      %p133 = scmp.ne.s32.totalorder %s125, %s127
      %p134 = scmp.eq.s32.totalorder %s33, 1
      %p135 = por %p133, %p134
      %p136 = scmp.ne.s32.totalorder %s127, %s128
      %p137 = scmp.eq.s32.totalorder %s33, 0
      %p138 = por %p136, %p137
      %p139 = scmp.ne.s32.totalorder %s127, %s128
      %p140 = scmp.eq.s32.totalorder %s34, 1
      %p141 = por %p139, %p140
      %p143 = scmp.ne.s32.totalorder %s128, %s142
      %p144 = scmp.eq.s32.totalorder %s34, 0
      %p145 = por %p143, %p144
      %s147 = sadd.s32 %s146, 1
      %p150 = scmp.eq.s32.totalorder %s28, 1
      %p151 = scmp.ne.s32.totalorder %s146, %s148
      %p152 = scmp.eq.s32.totalorder %s28, 0
      %p153 = por %p151, %p152
      %p154 = scmp.ne.s32.totalorder %s146, %s148
      %p155 = scmp.eq.s32.totalorder %s33, 1
      %p156 = por %p154, %p155
      %p157 = scmp.ne.s32.totalorder %s148, %s149
      %p158 = scmp.eq.s32.totalorder %s33, 0
      %p159 = por %p157, %p158
      %p160 = scmp.ne.s32.totalorder %s148, %s149
      %p161 = scmp.eq.s32.totalorder %s34, 1
      %p162 = por %p160, %p161
      %p164 = scmp.ne.s32.totalorder %s149, %s163
      %p165 = scmp.eq.s32.totalorder %s34, 0
      %p166 = por %p164, %p165
      %s168 = sadd.s32 %s167, 1
      %p171 = scmp.eq.s32.totalorder %s28, 1
      %p172 = scmp.ne.s32.totalorder %s167, %s169
      %p173 = scmp.eq.s32.totalorder %s28, 0
      %p174 = por %p172, %p173
      %p175 = scmp.ne.s32.totalorder %s167, %s169
      %p176 = scmp.eq.s32.totalorder %s33, 1
      %p177 = por %p175, %p176
      %p178 = scmp.ne.s32.totalorder %s169, %s170
      %p179 = scmp.eq.s32.totalorder %s33, 0
      %p180 = por %p178, %p179
      %p181 = scmp.ne.s32.totalorder %s169, %s170
      %p182 = scmp.eq.s32.totalorder %s34, 1
      %p183 = por %p181, %p182
      %p185 = scmp.ne.s32.totalorder %s170, %s184
      %p186 = scmp.eq.s32.totalorder %s34, 0
      %p187 = por %p185, %p186
      %s189 = sadd.s32 %s188, 1
      %p192 = scmp.eq.s32.totalorder %s28, 1
      %p193 = scmp.ne.s32.totalorder %s188, %s190
      %p194 = scmp.eq.s32.totalorder %s28, 0
      %p195 = por %p193, %p194
      %p196 = scmp.ne.s32.totalorder %s188, %s190
      %p197 = scmp.eq.s32.totalorder %s33, 1
      %p198 = por %p196, %p197
      %p199 = scmp.ne.s32.totalorder %s190, %s191
      %p200 = scmp.eq.s32.totalorder %s33, 0
      %p201 = por %p199, %p200
      %p202 = scmp.ne.s32.totalorder %s190, %s191
      %p203 = scmp.eq.s32.totalorder %s34, 1
      %p204 = por %p202, %p203
      %p206 = scmp.ne.s32.totalorder %s191, %s205
      %p207 = scmp.eq.s32.totalorder %s34, 0
      %p208 = por %p206, %p207
      %s210 = sadd.s32 %s209, 1
      %p213 = scmp.eq.s32.totalorder %s28, 1
      %p214 = scmp.ne.s32.totalorder %s209, %s211
      %p215 = scmp.eq.s32.totalorder %s28, 0
      %p216 = por %p214, %p215
      %p217 = scmp.ne.s32.totalorder %s209, %s211
      %p218 = scmp.eq.s32.totalorder %s33, 1
      %p219 = por %p217, %p218
      %p220 = scmp.ne.s32.totalorder %s211, %s212
      %p221 = scmp.eq.s32.totalorder %s33, 0
      %p222 = por %p220, %p221
      %p223 = scmp.ne.s32.totalorder %s211, %s212
      %p224 = scmp.eq.s32.totalorder %s34, 1
      %p225 = por %p223, %p224
      %p227 = scmp.ne.s32.totalorder %s212, %s226
      %p228 = scmp.eq.s32.totalorder %s34, 0
      %p229 = por %p227, %p228
      %s231 = sadd.s32 %s230, 1
      %p234 = scmp.eq.s32.totalorder %s28, 1
      %p235 = scmp.ne.s32.totalorder %s230, %s232
      %p236 = scmp.eq.s32.totalorder %s28, 0
      %p237 = por %p235, %p236
      %p238 = scmp.ne.s32.totalorder %s230, %s232
      %p239 = scmp.eq.s32.totalorder %s33, 1
      %p240 = por %p238, %p239
      %p241 = scmp.ne.s32.totalorder %s232, %s233
      %p242 = scmp.eq.s32.totalorder %s33, 0
      %p243 = por %p241, %p242
      %p244 = scmp.ne.s32.totalorder %s232, %s233
      %p245 = scmp.eq.s32.totalorder %s34, 1
      %p246 = por %p244, %p245
      %p248 = scmp.ne.s32.totalorder %s233, %s247
      %p249 = scmp.eq.s32.totalorder %s34, 0
      %p250 = por %p248, %p249
      %s252 = sadd.s32 %s251, 1
      %p255 = scmp.eq.s32.totalorder %s28, 1
      %p256 = scmp.ne.s32.totalorder %s251, %s253
      %p257 = scmp.eq.s32.totalorder %s28, 0
      %p258 = por %p256, %p257
      %p259 = scmp.ne.s32.totalorder %s251, %s253
      %p260 = scmp.eq.s32.totalorder %s33, 1
      %p261 = por %p259, %p260
      %p262 = scmp.ne.s32.totalorder %s253, %s254
      %p263 = scmp.eq.s32.totalorder %s33, 0
      %p264 = por %p262, %p263
      %p265 = scmp.ne.s32.totalorder %s253, %s254
      %p266 = scmp.eq.s32.totalorder %s34, 1
      %p267 = por %p265, %p266
      %p269 = scmp.ne.s32.totalorder %s254, %s268
      %p270 = scmp.eq.s32.totalorder %s34, 0
      %p271 = por %p269, %p270
      %s273 = sadd.s32 %s272, 1
      %p276 = scmp.eq.s32.totalorder %s28, 1
      %p277 = scmp.ne.s32.totalorder %s272, %s274
      %p278 = scmp.eq.s32.totalorder %s28, 0
      %p279 = por %p277, %p278
      %p280 = scmp.ne.s32.totalorder %s272, %s274
      %p281 = scmp.eq.s32.totalorder %s33, 1
      %p282 = por %p280, %p281
      %p283 = scmp.ne.s32.totalorder %s274, %s275
      %p284 = scmp.eq.s32.totalorder %s33, 0
      %p285 = por %p283, %p284
      %p286 = scmp.ne.s32.totalorder %s274, %s275
      %p287 = scmp.eq.s32.totalorder %s34, 1
      %p288 = por %p286, %p287
      %p290 = scmp.ne.s32.totalorder %s275, %s289
      %p291 = scmp.eq.s32.totalorder %s34, 0
      %p292 = por %p290, %p291
      %s294 = sadd.s32 %s293, 1
      %p297 = scmp.eq.s32.totalorder %s28, 1
      %p298 = scmp.ne.s32.totalorder %s293, %s295
      %p299 = scmp.eq.s32.totalorder %s28, 0
      %p300 = por %p298, %p299
      %p301 = scmp.ne.s32.totalorder %s293, %s295
      %p302 = scmp.eq.s32.totalorder %s33, 1
      %p303 = por %p301, %p302
      %p304 = scmp.ne.s32.totalorder %s295, %s296
      %p305 = scmp.eq.s32.totalorder %s33, 0
      %p306 = por %p304, %p305
      %p307 = scmp.ne.s32.totalorder %s295, %s296
      %p308 = scmp.eq.s32.totalorder %s34, 1
      %p309 = por %p307, %p308
      %p311 = scmp.ne.s32.totalorder %s296, %s310
      %p312 = scmp.eq.s32.totalorder %s34, 0
      %p313 = por %p311, %p312
      %s315 = sadd.s32 %s314, 1
      %p318 = scmp.eq.s32.totalorder %s28, 1
      %p319 = scmp.ne.s32.totalorder %s314, %s316
      %p320 = scmp.eq.s32.totalorder %s28, 0
      %p321 = por %p319, %p320
      %p322 = scmp.ne.s32.totalorder %s314, %s316
      %p323 = scmp.eq.s32.totalorder %s33, 1
      %p324 = por %p322, %p323
      %p325 = scmp.ne.s32.totalorder %s316, %s317
      %p326 = scmp.eq.s32.totalorder %s33, 0
      %p327 = por %p325, %p326
      %p328 = scmp.ne.s32.totalorder %s316, %s317
      %p329 = scmp.eq.s32.totalorder %s34, 1
      %p330 = por %p328, %p329
      %p332 = scmp.ne.s32.totalorder %s317, %s331
      %p333 = scmp.eq.s32.totalorder %s34, 0
      %p334 = por %p332, %p333
      %s336 = sadd.s32 %s335, 1
      %p339 = scmp.eq.s32.totalorder %s28, 1
      %p340 = scmp.ne.s32.totalorder %s335, %s337
      %p341 = scmp.eq.s32.totalorder %s28, 0
      %p342 = por %p340, %p341
      %p343 = scmp.ne.s32.totalorder %s335, %s337
      %p344 = scmp.eq.s32.totalorder %s33, 1
      %p345 = por %p343, %p344
      %p346 = scmp.ne.s32.totalorder %s337, %s338
      %p347 = scmp.eq.s32.totalorder %s33, 0
      %p348 = por %p346, %p347
      %p349 = scmp.ne.s32.totalorder %s337, %s338
      %p350 = scmp.eq.s32.totalorder %s34, 1
      %p351 = por %p349, %p350
      %p353 = scmp.ne.s32.totalorder %s338, %s352
      %p354 = scmp.eq.s32.totalorder %s34, 0
      %p355 = por %p353, %p354
      %s356 = ssub.s32 %s28, %s35
      %p357 = scmp.eq.s32.totalorder %s356, 0
      %s359 = sadd.s32 %s358, 1
      %s360 = scalar_select %p357, %s358, %s359
      %p363 = pneg %p357
      %p364 = scmp.eq.s32.totalorder %s28, 1
      %p365 = por %p363, %p364
      %p366 = scmp.ne.s32.totalorder %s358, %s361
      %p367 = scmp.eq.s32.totalorder %s28, 0
      %p368 = por %p366, %p367
      %p369 = scmp.ne.s32.totalorder %s358, %s361
      %p370 = scmp.eq.s32.totalorder %s33, 1
      %p371 = por %p369, %p370
      %p372 = scmp.ne.s32.totalorder %s361, %s362
      %p373 = scmp.eq.s32.totalorder %s33, 0
      %p374 = por %p372, %p373
      %p375 = scmp.ne.s32.totalorder %s361, %s362
      %p376 = scmp.eq.s32.totalorder %s34, 1
      %p377 = por %p375, %p376
      %p379 = scmp.ne.s32.totalorder %s362, %s378
      %p380 = scmp.eq.s32.totalorder %s34, 0
      %p381 = por %p379, %p380
      %p382 = scmp.le.s32.totalorder 1, %s28
      %p383 = scmp.lt.s32.totalorder %s28, 3
      %p384 = pnand %p382, %p383
      %p385 = pneg %p384
      // Predicated region
      $region9: #{tpu_custom_call.1} parent=5 // pred_check
        _
      $region10: #{tpu_custom_call.1} parent=5 // pred_check_branch
        %387 = sbr.rel (%p384) target = $region12
      $region11: #{tpu_custom_call.1} parent=5 // pred_region
        %s388 = ssub.s32 %s28, 1
        // Predicated region
        $region13: #{tpu_custom_call.1} parent=11 // pred_check
          %p389 = pneg %p75
        $region14: #{tpu_custom_call.1} parent=11 // pred_check_branch
          %391 = sbr.rel (%p389) target = $region16
        $region15: #{tpu_custom_call.1} parent=11 // pred_region
          %s393 = ssub.s32 3072, 3072
          %394 = vsyncadd [#allocation3], %s393
          %s395 = sshll.u32 [#allocation2], 4
          %s396 = int_to_ptr.vmem [resolvable:$true] %s395
          %401 = dma.hbm_to_vmem [thread:$0]  %s1, 3072, %s396, [#allocation3], 64, 64, 4
        $region16: #{tpu_custom_call.1} parent=11 // pred_fallthru
          _
        // Predicated region
        $region17: #{tpu_custom_call.1} parent=11 // pred_check
          %p402 = pneg %p96
        $region18: #{tpu_custom_call.1} parent=11 // pred_check_branch
          %404 = sbr.rel (%p402) target = $region20
        $region19: #{tpu_custom_call.1} parent=11 // pred_region
          _
        $region20: #{tpu_custom_call.1} parent=11 // pred_fallthru
          _
        // Predicated region
        $region21: #{tpu_custom_call.1} parent=11 // pred_check
          %p405 = pneg %p117
        $region22: #{tpu_custom_call.1} parent=11 // pred_check_branch
          %407 = sbr.rel (%p405) target = $region24
        $region23: #{tpu_custom_call.1} parent=11 // pred_region
          %s409 = ssub.s32 3072, 3072
          %410 = vsyncadd [#allocation6], %s409
          %s411 = sshll.u32 [#allocation5], 4
          %s412 = int_to_ptr.vmem [resolvable:$true] %s411
          %417 = dma.hbm_to_vmem [thread:$0]  %s3, 3072, %s412, [#allocation6], 64, 64, 4
        $region24: #{tpu_custom_call.1} parent=11 // pred_fallthru
          _
        // Predicated region
        $region25: #{tpu_custom_call.1} parent=11 // pred_check
          %p418 = pneg %p138
        $region26: #{tpu_custom_call.1} parent=11 // pred_check_branch
          %420 = sbr.rel (%p418) target = $region28
        $region27: #{tpu_custom_call.1} parent=11 // pred_region
          _
        $region28: #{tpu_custom_call.1} parent=11 // pred_fallthru
          _
        // Predicated region
        $region29: #{tpu_custom_call.1} parent=11 // pred_check
          %p421 = pneg %p159
        $region30: #{tpu_custom_call.1} parent=11 // pred_check_branch
          %423 = sbr.rel (%p421) target = $region32
        $region31: #{tpu_custom_call.1} parent=11 // pred_region
          %s425 = ssub.s32 2048, 2048
          %426 = vsyncadd [#allocation6], %s425
          %s427 = sshll.u32 [#allocation7], 4
          %s428 = int_to_ptr.vmem [resolvable:$true] %s427
          %433 = dma.hbm_to_vmem [thread:$0]  %s5, 2048, %s428, [#allocation6], 128, 128, 8
        $region32: #{tpu_custom_call.1} parent=11 // pred_fallthru
          _
        // Predicated region
        $region33: #{tpu_custom_call.1} parent=11 // pred_check
          %p434 = pneg %p180
        $region34: #{tpu_custom_call.1} parent=11 // pred_check_branch
          %436 = sbr.rel (%p434) target = $region36
        $region35: #{tpu_custom_call.1} parent=11 // pred_region
          _
        $region36: #{tpu_custom_call.1} parent=11 // pred_fallthru
          _
        // Predicated region
        $region37: #{tpu_custom_call.1} parent=11 // pred_check
          %p437 = pneg %p201
        $region38: #{tpu_custom_call.1} parent=11 // pred_check_branch
          %439 = sbr.rel (%p437) target = $region40
        $region39: #{tpu_custom_call.1} parent=11 // pred_region
          %s441 = ssub.s32 6144, 6144
          %442 = vsyncadd [#allocation9], %s441
          %s443 = sshll.u32 [#allocation8], 4
          %s444 = int_to_ptr.vmem [resolvable:$true] %s443
          %449 = dma.hbm_to_vmem [thread:$0]  %s7, 6144, %s444, [#allocation9], 64, 64, 4
        $region40: #{tpu_custom_call.1} parent=11 // pred_fallthru
          _
        // Predicated region
        $region41: #{tpu_custom_call.1} parent=11 // pred_check
          %p450 = pneg %p222
        $region42: #{tpu_custom_call.1} parent=11 // pred_check_branch
          %452 = sbr.rel (%p450) target = $region44
        $region43: #{tpu_custom_call.1} parent=11 // pred_region
          _
        $region44: #{tpu_custom_call.1} parent=11 // pred_fallthru
          _
        // Predicated region
        $region45: #{tpu_custom_call.1} parent=11 // pred_check
          %p453 = pneg %p243
        $region46: #{tpu_custom_call.1} parent=11 // pred_check_branch
          %455 = sbr.rel (%p453) target = $region48
        $region47: #{tpu_custom_call.1} parent=11 // pred_region
          _
        $region48: #{tpu_custom_call.1} parent=11 // pred_fallthru
          _
        // Predicated region
        $region49: #{tpu_custom_call.1} parent=11 // pred_check
          %p456 = pneg %p264
        $region50: #{tpu_custom_call.1} parent=11 // pred_check_branch
          %458 = sbr.rel (%p456) target = $region52
        $region51: #{tpu_custom_call.1} parent=11 // pred_region
          %s460 = ssub.s32 3072, 3072
          %461 = vsyncadd [#allocation9], %s460
          %s462 = sshll.u32 [#allocation10], 4
          %s463 = int_to_ptr.vmem [resolvable:$true] %s462
          %468 = dma.hbm_to_vmem [thread:$0]  %s10, 3072, %s463, [#allocation9], 64, 64, 4
        $region52: #{tpu_custom_call.1} parent=11 // pred_fallthru
          _
        // Predicated region
        $region53: #{tpu_custom_call.1} parent=11 // pred_check
          %p469 = pneg %p285
        $region54: #{tpu_custom_call.1} parent=11 // pred_check_branch
          %471 = sbr.rel (%p469) target = $region56
        $region55: #{tpu_custom_call.1} parent=11 // pred_region
          _
        $region56: #{tpu_custom_call.1} parent=11 // pred_fallthru
          _
        // Predicated region
        $region57: #{tpu_custom_call.1} parent=11 // pred_check
          %p472 = pneg %p306
        $region58: #{tpu_custom_call.1} parent=11 // pred_check_branch
          %474 = sbr.rel (%p472) target = $region60
        $region59: #{tpu_custom_call.1} parent=11 // pred_region
          %s476 = ssub.s32 4096, 4096
          %477 = vsyncadd [#allocation12], %s476
          %s478 = sshll.u32 [#allocation11], 4
          %s479 = int_to_ptr.vmem [resolvable:$true] %s478
          %484 = dma.hbm_to_vmem [thread:$0]  %s12, 4096, %s479, [#allocation12], 256, 256, 16
        $region60: #{tpu_custom_call.1} parent=11 // pred_fallthru
          _
        // Predicated region
        $region61: #{tpu_custom_call.1} parent=11 // pred_check
          %p485 = pneg %p327
        $region62: #{tpu_custom_call.1} parent=11 // pred_check_branch
          %487 = sbr.rel (%p485) target = $region64
        $region63: #{tpu_custom_call.1} parent=11 // pred_region
          _
        $region64: #{tpu_custom_call.1} parent=11 // pred_fallthru
          _
        // Predicated region
        $region65: #{tpu_custom_call.1} parent=11 // pred_check
          %p488 = pneg %p348
        $region66: #{tpu_custom_call.1} parent=11 // pred_check_branch
          %490 = sbr.rel (%p488) target = $region68
        $region67: #{tpu_custom_call.1} parent=11 // pred_region
          _
        $region68: #{tpu_custom_call.1} parent=11 // pred_fallthru
          _
      $region12: #{tpu_custom_call.1} parent=5 // pred_fallthru
        _
      %p491 = scmp.lt.s32.totalorder %s28, 2
      // Predicated region
      $region69: #{tpu_custom_call.1} parent=5 // pred_check
        %p492 = pneg %p491
      $region70: #{tpu_custom_call.1} parent=5 // pred_check_branch
        %494 = sbr.rel (%p492) target = $region72
      $region71: #{tpu_custom_call.1} parent=5 // pred_region
        // Predicated region
        $region73: #{tpu_custom_call.1} parent=71 // pred_check
          %p495 = pneg %p48
        $region74: #{tpu_custom_call.1} parent=71 // pred_check_branch
          %497 = sbr.rel (%p495) target = $region76
        $region75: #{tpu_custom_call.1} parent=71 // pred_region
          %p498 = scmp.lt.s32.totalorder %s28, 1
          %s499 = scalar_select %p498, %s28, 1
          %s500 = smul.addr %s499, 2
          %s501 = smul.addr %s500, 8
          %s502 = scalar_lea.vmem %s0, %s501
        $region76: #{tpu_custom_call.1} parent=71 // pred_fallthru
          _
      $region72: #{tpu_custom_call.1} parent=5 // pred_fallthru
        _
      %p503 = scmp.le.s32.totalorder 1, %s28
      %p504 = scmp.lt.s32.totalorder %s28, 3
      %p505 = pnand %p503, %p504
      %p506 = pneg %p505
      // Predicated region
      $region77: #{tpu_custom_call.1} parent=5 // pred_check
        _
      $region78: #{tpu_custom_call.1} parent=5 // pred_check_branch
        %508 = sbr.rel (%p505) target = $region80
      $region79: #{tpu_custom_call.1} parent=5 // pred_region
        %s509 = ssub.s32 %s28, 1
        // Predicated region
        $region81: #{tpu_custom_call.1} parent=79 // pred_check
          %p510 = pneg %p75
        $region82: #{tpu_custom_call.1} parent=79 // pred_check_branch
          %512 = sbr.rel (%p510) target = $region84
        $region83: #{tpu_custom_call.1} parent=79 // pred_region
          %513 = dma.done [#allocation3], 3072
        $region84: #{tpu_custom_call.1} parent=79 // pred_fallthru
          _
        // Predicated region
        $region85: #{tpu_custom_call.1} parent=79 // pred_check
          %p514 = pneg %p117
        $region86: #{tpu_custom_call.1} parent=79 // pred_check_branch
          %516 = sbr.rel (%p514) target = $region88
        $region87: #{tpu_custom_call.1} parent=79 // pred_region
          %517 = dma.done [#allocation6], 3072
        $region88: #{tpu_custom_call.1} parent=79 // pred_fallthru
          _
        // Predicated region
        $region89: #{tpu_custom_call.1} parent=79 // pred_check
          %p518 = pneg %p159
        $region90: #{tpu_custom_call.1} parent=79 // pred_check_branch
          %520 = sbr.rel (%p518) target = $region92
        $region91: #{tpu_custom_call.1} parent=79 // pred_region
          %521 = dma.done [#allocation6], 2048
        $region92: #{tpu_custom_call.1} parent=79 // pred_fallthru
          _
        // Predicated region
        $region93: #{tpu_custom_call.1} parent=79 // pred_check
          %p522 = pneg %p201
        $region94: #{tpu_custom_call.1} parent=79 // pred_check_branch
          %524 = sbr.rel (%p522) target = $region96
        $region95: #{tpu_custom_call.1} parent=79 // pred_region
          %525 = dma.done [#allocation9], 6144
        $region96: #{tpu_custom_call.1} parent=79 // pred_fallthru
          _
        // Predicated region
        $region97: #{tpu_custom_call.1} parent=79 // pred_check
          %p526 = pneg %p264
        $region98: #{tpu_custom_call.1} parent=79 // pred_check_branch
          %528 = sbr.rel (%p526) target = $region100
        $region99: #{tpu_custom_call.1} parent=79 // pred_region
          %529 = dma.done [#allocation9], 3072
        $region100: #{tpu_custom_call.1} parent=79 // pred_fallthru
          _
        // Predicated region
        $region101: #{tpu_custom_call.1} parent=79 // pred_check
          %p530 = pneg %p306
        $region102: #{tpu_custom_call.1} parent=79 // pred_check_branch
          %532 = sbr.rel (%p530) target = $region104
        $region103: #{tpu_custom_call.1} parent=79 // pred_region
          %533 = dma.done [#allocation12], 4096
        $region104: #{tpu_custom_call.1} parent=79 // pred_fallthru
          _
        %p534 = scmp.lt.s32.totalorder %s33, 1
        %s535 = scalar_select %p534, %s33, 1
        %s536 = smul.addr %s535, 2
        %s537 = smul.addr %s536, 8
        %s538 = scalar_lea.vmem %s0, %s537
        %p539 = pneg %p54
        %p540 = pneg %p51
        %p541 = pneg %p75
        %p542 = pneg %p72
        %p543 = pneg %p96
        %p544 = pneg %p93
        %p545 = pneg %p117
        %p546 = pneg %p114
        %p547 = pneg %p138
        %p548 = pneg %p135
        %p549 = pneg %p159
        %p550 = pneg %p156
        %p551 = pneg %p180
        %p552 = pneg %p177
        %p553 = pneg %p201
        %p554 = pneg %p198
        %p555 = pneg %p222
        %p556 = pneg %p219
        %p557 = pneg %p243
        %p558 = pneg %p240
        %p559 = pneg %p264
        %p560 = pneg %p261
        %p561 = pneg %p285
        %p562 = pneg %p282
        %p563 = pneg %p306
        %p564 = pneg %p303
        %p565 = pneg %p327
        %p566 = pneg %p324
        %p567 = pneg %p348
        %p568 = pneg %p345
        %p569 = pneg %p374
        %p570 = pneg %p371
        %s571 = sand.u32 %s361, 1
        %s572 = scalar_lea.sflag [#allocation4], %s571
        %s573 = sand.u32 %s361, 1
        %s574 = smul.addr %s573, 32
        %s575 = scalar_lea.vmem [#allocation13], %s574
        %p576 = scmp.lt.s32.totalorder %s33, 1
        %s577 = scalar_select %p576, %s33, 1
        %s578 = smul.addr %s577, 2
        %s579 = smul.addr %s578, 8
        %s580 = scalar_lea.vmem %s0, %s579
        %v582 = vld [vmem:[%s580] sm:$0xff]
        %v583 = vld [vmem:[%s580 + $0x8] sm:$0xff]
        %v584 = vlaneseq
        %v585 = vshrl.u32 %v584, 7
        %v586 = vadd.s32 %v585, 8
        %vm587 = vcmp.eq.s32.totalorder %v585, 0
        %vm588 = vcmp.eq.s32.totalorder %v586, 0
        %v590 = vrot.slane %v583, 7
        %vm593 = vcmask 1040384
        %v594 = vrot.slane %v582, 7
        %v595 = vsel %vm593, %v594, %v590
        %v598 = vsel %vm593, %v590, %v594
        %v599 = vsel %vm587, 0.0, %v598
        %v600 = vsel %vm588, 0.0, %v595
        %vm601 = vcmp.eq.s32.totalorder %v585, 15
        %vm602 = vcmp.eq.s32.totalorder %v586, 15
        %vm603 = vcmask 1046528
        %v604 = vrot.slane %v582, 1
        %v605 = vrot.slane %v583, 1
        %v606 = vsel %vm603, %v604, %v605
        %v610 = vsel %vm603, %v605, %v604
        %v611 = vsel %vm601, 0.0, %v606
        %v612 = vsel %vm602, 0.0, %v610
        %v613 = vpack.c.bf16 %v600, %v599
        %v614 = vpack.c.bf16 %v583, %v582
        %v615 = vpack.c.bf16 %v612, %v611
        %v616 = vld [vmem:[#allocation2] sm:$0xf]
        %v617 = vld [vmem:[#allocation2 + $0x4] sm:$0xf]
        %v618 = vld [vmem:[#allocation2 + $0x8] sm:$0xf]
        %v619 = vld [vmem:[#allocation2 + $0xc] sm:$0xf]
        %v620 = vld [vmem:[#allocation2 + $0x10] sm:$0xf]
        %v621 = vld [vmem:[#allocation2 + $0x14] sm:$0xf]
        %v622 = vld [vmem:[#allocation2 + $0x18] sm:$0xf]
        %v623 = vld [vmem:[#allocation2 + $0x1c] sm:$0xf]
        %v624 = vld [vmem:[#allocation2 + $0x20] sm:$0xf]
        %v625 = vld [vmem:[#allocation2 + $0x24] sm:$0xf]
        %v626 = vld [vmem:[#allocation2 + $0x28] sm:$0xf]
        %v627 = vld [vmem:[#allocation2 + $0x2c] sm:$0xf]
        %v628 = vld [vmem:[#allocation2 + $0x30] sm:$0xf]
        %v629 = vld [vmem:[#allocation2 + $0x34] sm:$0xf]
        %v630 = vld [vmem:[#allocation2 + $0x38] sm:$0xf]
        %v631 = vld [vmem:[#allocation2 + $0x3c] sm:$0xf]
        %v632 = vld [vmem:[#allocation2 + $0x40] sm:$0xf]
        %v633 = vld [vmem:[#allocation2 + $0x44] sm:$0xf]
        %v634 = vld [vmem:[#allocation2 + $0x48] sm:$0xf]
        %v635 = vld [vmem:[#allocation2 + $0x4c] sm:$0xf]
        %v636 = vld [vmem:[#allocation2 + $0x50] sm:$0xf]
        %v637 = vld [vmem:[#allocation2 + $0x54] sm:$0xf]
        %v638 = vld [vmem:[#allocation2 + $0x58] sm:$0xf]
        %v639 = vld [vmem:[#allocation2 + $0x5c] sm:$0xf]
        %v640 = vld [vmem:[#allocation2 + $0x60] sm:$0xf]
        %v641 = vld [vmem:[#allocation2 + $0x64] sm:$0xf]
        %v642 = vld [vmem:[#allocation2 + $0x68] sm:$0xf]
        %v643 = vld [vmem:[#allocation2 + $0x6c] sm:$0xf]
        %v644 = vld [vmem:[#allocation2 + $0x70] sm:$0xf]
        %v645 = vld [vmem:[#allocation2 + $0x74] sm:$0xf]
        %v646 = vld [vmem:[#allocation2 + $0x78] sm:$0xf]
        %v647 = vld [vmem:[#allocation2 + $0x7c] sm:$0xf]
        %v648 = vld [vmem:[#allocation2 + $0x80] sm:$0xf]
        %v649 = vld [vmem:[#allocation2 + $0x84] sm:$0xf]
        %v650 = vld [vmem:[#allocation2 + $0x88] sm:$0xf]
        %v651 = vld [vmem:[#allocation2 + $0x8c] sm:$0xf]
        %v652 = vld [vmem:[#allocation2 + $0x90] sm:$0xf]
        %v653 = vld [vmem:[#allocation2 + $0x94] sm:$0xf]
        %v654 = vld [vmem:[#allocation2 + $0x98] sm:$0xf]
        %v655 = vld [vmem:[#allocation2 + $0x9c] sm:$0xf]
        %v656 = vld [vmem:[#allocation2 + $0xa0] sm:$0xf]
        %v657 = vld [vmem:[#allocation2 + $0xa4] sm:$0xf]
        %v658 = vld [vmem:[#allocation2 + $0xa8] sm:$0xf]
        %v659 = vld [vmem:[#allocation2 + $0xac] sm:$0xf]
        %v660 = vld [vmem:[#allocation2 + $0xb0] sm:$0xf]
        %v661 = vld [vmem:[#allocation2 + $0xb4] sm:$0xf]
        %v662 = vld [vmem:[#allocation2 + $0xb8] sm:$0xf]
        %v663 = vld [vmem:[#allocation2 + $0xbc] sm:$0xf]
        %v664 = vld [vmem:[%s2] sm:$0x1]
        %v666 = vlaneseq
        %v667 = vshrl.u32 %v666, 7
        %v668 = vsub.s32 0, %v667
        %v669 = vrot.slane %v664, %v668
        %v719 = vunpack.c.l.b16 %v616
        %v720 = vunpack.c.l.b16 %v617
        %v721 = vunpack.c.l.b16 %v618
        %v722 = vunpack.c.l.b16 %v619
        %v723 = vunpack.c.l.b16 %v620
        %v724 = vunpack.c.l.b16 %v621
        %v725 = vunpack.c.l.b16 %v622
        %v726 = vunpack.c.l.b16 %v623
        %v727 = vunpack.c.l.b16 %v624
        %v728 = vunpack.c.l.b16 %v625
        %v729 = vunpack.c.l.b16 %v626
        %v730 = vunpack.c.l.b16 %v627
        %v731 = vunpack.c.l.b16 %v628
        %v732 = vunpack.c.l.b16 %v629
        %v733 = vunpack.c.l.b16 %v630
        %v734 = vunpack.c.l.b16 %v631
        %v735 = vunpack.c.l.b16 %v632
        %v736 = vunpack.c.l.b16 %v633
        %v737 = vunpack.c.l.b16 %v634
        %v738 = vunpack.c.l.b16 %v635
        %v739 = vunpack.c.l.b16 %v636
        %v740 = vunpack.c.l.b16 %v637
        %v741 = vunpack.c.l.b16 %v638
        %v742 = vunpack.c.l.b16 %v639
        %v743 = vunpack.c.l.b16 %v640
        %v744 = vunpack.c.l.b16 %v641
        %v745 = vunpack.c.l.b16 %v642
        %v746 = vunpack.c.l.b16 %v643
        %v747 = vunpack.c.l.b16 %v644
        %v748 = vunpack.c.l.b16 %v645
        %v749 = vunpack.c.l.b16 %v646
        %v750 = vunpack.c.l.b16 %v647
        %v751 = vunpack.c.l.b16 %v648
        %v752 = vunpack.c.l.b16 %v649
        %v753 = vunpack.c.l.b16 %v650
        %v754 = vunpack.c.l.b16 %v651
        %v755 = vunpack.c.l.b16 %v652
        %v756 = vunpack.c.l.b16 %v653
        %v757 = vunpack.c.l.b16 %v654
        %v758 = vunpack.c.l.b16 %v655
        %v759 = vunpack.c.l.b16 %v656
        %v760 = vunpack.c.l.b16 %v657
        %v761 = vunpack.c.l.b16 %v658
        %v762 = vunpack.c.l.b16 %v659
        %v763 = vunpack.c.l.b16 %v660
        %v764 = vunpack.c.l.b16 %v661
        %v765 = vunpack.c.l.b16 %v662
        %v766 = vunpack.c.l.b16 %v663
        %v767 = vpack.c.b16 %v720, %v719
        %v768 = vpack.c.b16 %v722, %v721
        %v769 = vpack.c.b16 %v724, %v723
        %v770 = vpack.c.b16 %v726, %v725
        %v771 = vpack.c.b16 %v728, %v727
        %v772 = vpack.c.b16 %v730, %v729
        %v773 = vpack.c.b16 %v732, %v731
        %v774 = vpack.c.b16 %v734, %v733
        %v775 = vpack.c.b16 %v736, %v735
        %v776 = vpack.c.b16 %v738, %v737
        %v777 = vpack.c.b16 %v740, %v739
        %v778 = vpack.c.b16 %v742, %v741
        %v779 = vpack.c.b16 %v744, %v743
        %v780 = vpack.c.b16 %v746, %v745
        %v781 = vpack.c.b16 %v748, %v747
        %v782 = vpack.c.b16 %v750, %v749
        %v783 = vpack.c.b16 %v752, %v751
        %v784 = vpack.c.b16 %v754, %v753
        %v785 = vpack.c.b16 %v756, %v755
        %v786 = vpack.c.b16 %v758, %v757
        %v787 = vpack.c.b16 %v760, %v759
        %v788 = vpack.c.b16 %v762, %v761
        %v789 = vpack.c.b16 %v764, %v763
        %v790 = vpack.c.b16 %v766, %v765
        %815 = vmatprep.subr.bf16.mxu0 0
        %816 = vmatpush1.bf16.msra.mxu0 %v767
        %817 = vmatprep.subr.bf16.mxu0 0
        %818 = vmatpush1.bf16.msra.mxu0 %v768
        %819 = vmatprep.subr.bf16.mxu0 0
        %820 = vmatpush1.bf16.msra.mxu0 %v769
        %821 = vmatprep.subr.bf16.mxu0 0
        %822 = vmatpush1.bf16.msra.mxu0 %v770
        %823 = vmatprep.subr.bf16.mxu0 0
        %824 = vmatpush1.bf16.msra.mxu0 %v771
        %825 = vmatprep.subr.bf16.mxu0 0
        %826 = vmatpush1.bf16.msra.mxu0 %v772
        %827 = vmatprep.subr.bf16.mxu0 0
        %828 = vmatpush1.bf16.msra.mxu0 %v773
        %829 = vmatprep.subr.bf16.mxu0 0
        %830 = vmatpush1.bf16.msra.mxu0 %v774
        %831 = vmatprep.subr.bf16.mxu0 0
        %832 = vmatpush1.bf16.msra.mxu0 %v775
        %833 = vmatprep.subr.bf16.mxu0 0
        %834 = vmatpush1.bf16.msra.mxu0 %v776
        %835 = vmatprep.subr.bf16.mxu0 0
        %836 = vmatpush1.bf16.msra.mxu0 %v777
        %837 = vmatprep.subr.bf16.mxu0 0
        %838 = vmatpush1.bf16.msra.mxu0 %v778
        %839 = vmatprep.subr.bf16.mxu0 0
        %840 = vmatpush1.bf16.msra.mxu0 %v779
        %841 = vmatprep.subr.bf16.mxu0 0
        %842 = vmatpush1.bf16.msra.mxu0 %v780
        %843 = vmatprep.subr.bf16.mxu0 0
        %844 = vmatpush1.bf16.msra.mxu0 %v781
        %845 = vmatprep.subr.bf16.mxu0 0
        %846 = vmatpush1.bf16.msra.mxu0 %v782
        %847 = vmatprep.mubr.bf16.mxu0 %v614
        %848 = vmatmul.mubr.bf16.gmra.mrb[0].mxu0 %v613
        %v849 = vpop.f32.mrb[0].mxu0
        %v850 = vadd.f32 %v669, %v849
        %v851 = vpop.f32.mrb[0].mxu0
        %v852 = vpop.f32.mrb[0].mxu0
        %v853 = vadd.f32 %v669, %v852
        %v854 = vpop.f32.mrb[0].mxu0
        %855 = vdwg.mxu0
        %856 = vmatprep.subr.bf16.mxu0 0
        %857 = vmatpush1.bf16.msra.mxu0 %v783
        %858 = vmatprep.subr.bf16.mxu0 0
        %859 = vmatpush1.bf16.msra.mxu0 %v784
        %860 = vmatprep.subr.bf16.mxu0 0
        %861 = vmatpush1.bf16.msra.mxu0 %v785
        %862 = vmatprep.subr.bf16.mxu0 0
        %863 = vmatpush1.bf16.msra.mxu0 %v786
        %864 = vmatprep.subr.bf16.mxu0 0
        %865 = vmatpush1.bf16.msra.mxu0 %v787
        %866 = vmatprep.subr.bf16.mxu0 0
        %867 = vmatpush1.bf16.msra.mxu0 %v788
        %868 = vmatprep.subr.bf16.mxu0 0
        %869 = vmatpush1.bf16.msra.mxu0 %v789
        %870 = vmatprep.subr.bf16.mxu0 0
        %871 = vmatpush1.bf16.msra.mxu0 %v790
        %872 = vmatprep.subr.bf16.mxu0 0
        %873 = vmatpush1.bf16.msra.mxu0 0
        %874 = vmatprep.subr.bf16.mxu0 0
        %875 = vmatpush1.bf16.msra.mxu0 0
        %876 = vmatprep.subr.bf16.mxu0 0
        %877 = vmatpush1.bf16.msra.mxu0 0
        %878 = vmatprep.subr.bf16.mxu0 0
        %879 = vmatpush1.bf16.msra.mxu0 0
        %880 = vmatprep.subr.bf16.mxu0 0
        %881 = vmatpush1.bf16.msra.mxu0 0
        %882 = vmatprep.subr.bf16.mxu0 0
        %883 = vmatpush1.bf16.msra.mxu0 0
        %884 = vmatprep.subr.bf16.mxu0 0
        %885 = vmatpush1.bf16.msra.mxu0 0
        %886 = vmatprep.subr.bf16.mxu0 0
        %887 = vmatpush1.bf16.msra.mxu0 0
        %888 = vmatprep.mubr.bf16.mxu0 0
        %889 = vmatmul.mubr.bf16.gmra.mrb[0].mxu0 %v615
        %v890 = vpop.f32.mrb[0].mxu0
        %v891 = vadd.f32 %v850, %v890
        %v892 = vpop.f32.mrb[0].mxu0
        %v893 = vpop.f32.mrb[0].mxu0
        %v894 = vadd.f32 %v853, %v893
        %v895 = vpop.f32.mrb[0].mxu0
        %896 = vdwg.mxu0
        %v897 = vmax.f32 %v891, 0.0
        %v898 = vmax.f32 %v894, 0.0
        %v900 = vrot.slane %v898, 7
        %v903 = vrot.slane %v897, 7
        %v904 = vsel %vm593, %v903, %v900
        %v907 = vsel %vm593, %v900, %v903
        %v908 = vsel %vm587, 0.0, %v907
        %v909 = vsel %vm588, 0.0, %v904
        %v910 = vrot.slane %v897, 1
        %v911 = vrot.slane %v898, 1
        %v912 = vsel %vm603, %v910, %v911
        %v916 = vsel %vm603, %v911, %v910
        %v917 = vsel %vm601, 0.0, %v912
        %v918 = vsel %vm602, 0.0, %v916
        %v919 = vpack.c.bf16 %v909, %v908
        %v920 = vpack.c.bf16 %v898, %v897
        %v921 = vpack.c.bf16 %v918, %v917
        %v922 = vld [vmem:[#allocation5] sm:$0xf]
        %v923 = vld [vmem:[#allocation5 + $0x4] sm:$0xf]
        %v924 = vld [vmem:[#allocation5 + $0x8] sm:$0xf]
        %v925 = vld [vmem:[#allocation5 + $0xc] sm:$0xf]
        %v926 = vld [vmem:[#allocation5 + $0x10] sm:$0xf]
        %v927 = vld [vmem:[#allocation5 + $0x14] sm:$0xf]
        %v928 = vld [vmem:[#allocation5 + $0x18] sm:$0xf]
        %v929 = vld [vmem:[#allocation5 + $0x1c] sm:$0xf]
        %v930 = vld [vmem:[#allocation5 + $0x20] sm:$0xf]
        %v931 = vld [vmem:[#allocation5 + $0x24] sm:$0xf]
        %v932 = vld [vmem:[#allocation5 + $0x28] sm:$0xf]
        %v933 = vld [vmem:[#allocation5 + $0x2c] sm:$0xf]
        %v934 = vld [vmem:[#allocation5 + $0x30] sm:$0xf]
        %v935 = vld [vmem:[#allocation5 + $0x34] sm:$0xf]
        %v936 = vld [vmem:[#allocation5 + $0x38] sm:$0xf]
        %v937 = vld [vmem:[#allocation5 + $0x3c] sm:$0xf]
        %v938 = vld [vmem:[#allocation5 + $0x40] sm:$0xf]
        %v939 = vld [vmem:[#allocation5 + $0x44] sm:$0xf]
        %v940 = vld [vmem:[#allocation5 + $0x48] sm:$0xf]
        %v941 = vld [vmem:[#allocation5 + $0x4c] sm:$0xf]
        %v942 = vld [vmem:[#allocation5 + $0x50] sm:$0xf]
        %v943 = vld [vmem:[#allocation5 + $0x54] sm:$0xf]
        %v944 = vld [vmem:[#allocation5 + $0x58] sm:$0xf]
        %v945 = vld [vmem:[#allocation5 + $0x5c] sm:$0xf]
        %v946 = vld [vmem:[#allocation5 + $0x60] sm:$0xf]
        %v947 = vld [vmem:[#allocation5 + $0x64] sm:$0xf]
        %v948 = vld [vmem:[#allocation5 + $0x68] sm:$0xf]
        %v949 = vld [vmem:[#allocation5 + $0x6c] sm:$0xf]
        %v950 = vld [vmem:[#allocation5 + $0x70] sm:$0xf]
        %v951 = vld [vmem:[#allocation5 + $0x74] sm:$0xf]
        %v952 = vld [vmem:[#allocation5 + $0x78] sm:$0xf]
        %v953 = vld [vmem:[#allocation5 + $0x7c] sm:$0xf]
        %v954 = vld [vmem:[#allocation5 + $0x80] sm:$0xf]
        %v955 = vld [vmem:[#allocation5 + $0x84] sm:$0xf]
        %v956 = vld [vmem:[#allocation5 + $0x88] sm:$0xf]
        %v957 = vld [vmem:[#allocation5 + $0x8c] sm:$0xf]
        %v958 = vld [vmem:[#allocation5 + $0x90] sm:$0xf]
        %v959 = vld [vmem:[#allocation5 + $0x94] sm:$0xf]
        %v960 = vld [vmem:[#allocation5 + $0x98] sm:$0xf]
        %v961 = vld [vmem:[#allocation5 + $0x9c] sm:$0xf]
        %v962 = vld [vmem:[#allocation5 + $0xa0] sm:$0xf]
        %v963 = vld [vmem:[#allocation5 + $0xa4] sm:$0xf]
        %v964 = vld [vmem:[#allocation5 + $0xa8] sm:$0xf]
        %v965 = vld [vmem:[#allocation5 + $0xac] sm:$0xf]
        %v966 = vld [vmem:[#allocation5 + $0xb0] sm:$0xf]
        %v967 = vld [vmem:[#allocation5 + $0xb4] sm:$0xf]
        %v968 = vld [vmem:[#allocation5 + $0xb8] sm:$0xf]
        %v969 = vld [vmem:[#allocation5 + $0xbc] sm:$0xf]
        %v970 = vld [vmem:[%s4] sm:$0x1]
        %v972 = vlaneseq
        %v973 = vshrl.u32 %v972, 7
        %v974 = vsub.s32 0, %v973
        %v975 = vrot.slane %v970, %v974
        %v1025 = vunpack.c.l.b16 %v922
        %v1026 = vunpack.c.l.b16 %v923
        %v1027 = vunpack.c.l.b16 %v924
        %v1028 = vunpack.c.l.b16 %v925
        %v1029 = vunpack.c.l.b16 %v926
        %v1030 = vunpack.c.l.b16 %v927
        %v1031 = vunpack.c.l.b16 %v928
        %v1032 = vunpack.c.l.b16 %v929
        %v1033 = vunpack.c.l.b16 %v930
        %v1034 = vunpack.c.l.b16 %v931
        %v1035 = vunpack.c.l.b16 %v932
        %v1036 = vunpack.c.l.b16 %v933
        %v1037 = vunpack.c.l.b16 %v934
        %v1038 = vunpack.c.l.b16 %v935
        %v1039 = vunpack.c.l.b16 %v936
        %v1040 = vunpack.c.l.b16 %v937
        %v1041 = vunpack.c.l.b16 %v938
        %v1042 = vunpack.c.l.b16 %v939
        %v1043 = vunpack.c.l.b16 %v940
        %v1044 = vunpack.c.l.b16 %v941
        %v1045 = vunpack.c.l.b16 %v942
        %v1046 = vunpack.c.l.b16 %v943
        %v1047 = vunpack.c.l.b16 %v944
        %v1048 = vunpack.c.l.b16 %v945
        %v1049 = vunpack.c.l.b16 %v946
        %v1050 = vunpack.c.l.b16 %v947
        %v1051 = vunpack.c.l.b16 %v948
        %v1052 = vunpack.c.l.b16 %v949
        %v1053 = vunpack.c.l.b16 %v950
        %v1054 = vunpack.c.l.b16 %v951
        %v1055 = vunpack.c.l.b16 %v952
        %v1056 = vunpack.c.l.b16 %v953
        %v1057 = vunpack.c.l.b16 %v954
        %v1058 = vunpack.c.l.b16 %v955
        %v1059 = vunpack.c.l.b16 %v956
        %v1060 = vunpack.c.l.b16 %v957
        %v1061 = vunpack.c.l.b16 %v958
        %v1062 = vunpack.c.l.b16 %v959
        %v1063 = vunpack.c.l.b16 %v960
        %v1064 = vunpack.c.l.b16 %v961
        %v1065 = vunpack.c.l.b16 %v962
        %v1066 = vunpack.c.l.b16 %v963
        %v1067 = vunpack.c.l.b16 %v964
        %v1068 = vunpack.c.l.b16 %v965
        %v1069 = vunpack.c.l.b16 %v966
        %v1070 = vunpack.c.l.b16 %v967
        %v1071 = vunpack.c.l.b16 %v968
        %v1072 = vunpack.c.l.b16 %v969
        %v1073 = vpack.c.b16 %v1026, %v1025
        %v1074 = vpack.c.b16 %v1028, %v1027
        %v1075 = vpack.c.b16 %v1030, %v1029
        %v1076 = vpack.c.b16 %v1032, %v1031
        %v1077 = vpack.c.b16 %v1034, %v1033
        %v1078 = vpack.c.b16 %v1036, %v1035
        %v1079 = vpack.c.b16 %v1038, %v1037
        %v1080 = vpack.c.b16 %v1040, %v1039
        %v1081 = vpack.c.b16 %v1042, %v1041
        %v1082 = vpack.c.b16 %v1044, %v1043
        %v1083 = vpack.c.b16 %v1046, %v1045
        %v1084 = vpack.c.b16 %v1048, %v1047
        %v1085 = vpack.c.b16 %v1050, %v1049
        %v1086 = vpack.c.b16 %v1052, %v1051
        %v1087 = vpack.c.b16 %v1054, %v1053
        %v1088 = vpack.c.b16 %v1056, %v1055
        %v1089 = vpack.c.b16 %v1058, %v1057
        %v1090 = vpack.c.b16 %v1060, %v1059
        %v1091 = vpack.c.b16 %v1062, %v1061
        %v1092 = vpack.c.b16 %v1064, %v1063
        %v1093 = vpack.c.b16 %v1066, %v1065
        %v1094 = vpack.c.b16 %v1068, %v1067
        %v1095 = vpack.c.b16 %v1070, %v1069
        %v1096 = vpack.c.b16 %v1072, %v1071
        %1121 = vmatprep.subr.bf16.mxu0 0
        %1122 = vmatpush1.bf16.msra.mxu0 %v1073
        %1123 = vmatprep.subr.bf16.mxu0 0
        %1124 = vmatpush1.bf16.msra.mxu0 %v1074
        %1125 = vmatprep.subr.bf16.mxu0 0
        %1126 = vmatpush1.bf16.msra.mxu0 %v1075
        %1127 = vmatprep.subr.bf16.mxu0 0
        %1128 = vmatpush1.bf16.msra.mxu0 %v1076
        %1129 = vmatprep.subr.bf16.mxu0 0
        %1130 = vmatpush1.bf16.msra.mxu0 %v1077
        %1131 = vmatprep.subr.bf16.mxu0 0
        %1132 = vmatpush1.bf16.msra.mxu0 %v1078
        %1133 = vmatprep.subr.bf16.mxu0 0
        %1134 = vmatpush1.bf16.msra.mxu0 %v1079
        %1135 = vmatprep.subr.bf16.mxu0 0
        %1136 = vmatpush1.bf16.msra.mxu0 %v1080
        %1137 = vmatprep.subr.bf16.mxu0 0
        %1138 = vmatpush1.bf16.msra.mxu0 %v1081
        %1139 = vmatprep.subr.bf16.mxu0 0
        %1140 = vmatpush1.bf16.msra.mxu0 %v1082
        %1141 = vmatprep.subr.bf16.mxu0 0
        %1142 = vmatpush1.bf16.msra.mxu0 %v1083
        %1143 = vmatprep.subr.bf16.mxu0 0
        %1144 = vmatpush1.bf16.msra.mxu0 %v1084
        %1145 = vmatprep.subr.bf16.mxu0 0
        %1146 = vmatpush1.bf16.msra.mxu0 %v1085
        %1147 = vmatprep.subr.bf16.mxu0 0
        %1148 = vmatpush1.bf16.msra.mxu0 %v1086
        %1149 = vmatprep.subr.bf16.mxu0 0
        %1150 = vmatpush1.bf16.msra.mxu0 %v1087
        %1151 = vmatprep.subr.bf16.mxu0 0
        %1152 = vmatpush1.bf16.msra.mxu0 %v1088
        %1153 = vmatprep.mubr.bf16.mxu0 %v920
        %1154 = vmatmul.mubr.bf16.gmra.mrb[0].mxu0 %v919
        %v1155 = vpop.f32.mrb[0].mxu0
        %v1156 = vadd.f32 %v975, %v1155
        %v1157 = vpop.f32.mrb[0].mxu0
        %v1158 = vpop.f32.mrb[0].mxu0
        %v1159 = vadd.f32 %v975, %v1158
        %v1160 = vpop.f32.mrb[0].mxu0
        %1161 = vdwg.mxu0
        %1162 = vmatprep.subr.bf16.mxu0 0
        %1163 = vmatpush1.bf16.msra.mxu0 %v1089
        %1164 = vmatprep.subr.bf16.mxu0 0
        %1165 = vmatpush1.bf16.msra.mxu0 %v1090
        %1166 = vmatprep.subr.bf16.mxu0 0
        %1167 = vmatpush1.bf16.msra.mxu0 %v1091
        %1168 = vmatprep.subr.bf16.mxu0 0
        %1169 = vmatpush1.bf16.msra.mxu0 %v1092
        %1170 = vmatprep.subr.bf16.mxu0 0
        %1171 = vmatpush1.bf16.msra.mxu0 %v1093
        %1172 = vmatprep.subr.bf16.mxu0 0
        %1173 = vmatpush1.bf16.msra.mxu0 %v1094
        %1174 = vmatprep.subr.bf16.mxu0 0
        %1175 = vmatpush1.bf16.msra.mxu0 %v1095
        %1176 = vmatprep.subr.bf16.mxu0 0
        %1177 = vmatpush1.bf16.msra.mxu0 %v1096
        %1178 = vmatprep.subr.bf16.mxu0 0
        %1179 = vmatpush1.bf16.msra.mxu0 0
        %1180 = vmatprep.subr.bf16.mxu0 0
        %1181 = vmatpush1.bf16.msra.mxu0 0
        %1182 = vmatprep.subr.bf16.mxu0 0
        %1183 = vmatpush1.bf16.msra.mxu0 0
        %1184 = vmatprep.subr.bf16.mxu0 0
        %1185 = vmatpush1.bf16.msra.mxu0 0
        %1186 = vmatprep.subr.bf16.mxu0 0
        %1187 = vmatpush1.bf16.msra.mxu0 0
        %1188 = vmatprep.subr.bf16.mxu0 0
        %1189 = vmatpush1.bf16.msra.mxu0 0
        %1190 = vmatprep.subr.bf16.mxu0 0
        %1191 = vmatpush1.bf16.msra.mxu0 0
        %1192 = vmatprep.subr.bf16.mxu0 0
        %1193 = vmatpush1.bf16.msra.mxu0 0
        %1194 = vmatprep.mubr.bf16.mxu0 0
        %1195 = vmatmul.mubr.bf16.gmra.mrb[0].mxu0 %v921
        %v1196 = vpop.f32.mrb[0].mxu0
        %v1197 = vadd.f32 %v1156, %v1196
        %v1198 = vpop.f32.mrb[0].mxu0
        %v1199 = vpop.f32.mrb[0].mxu0
        %v1200 = vadd.f32 %v1159, %v1199
        %v1201 = vpop.f32.mrb[0].mxu0
        %1202 = vdwg.mxu0
        %v1203 = vmax.f32 %v1197, 0.0
        %v1204 = vmax.f32 %v1200, 0.0
        %v1205 = vpack.c.bf16 %v1204, %v1203
        %v1206 = vld [vmem:[#allocation7] sm:$0xff]
        %v1207 = vld [vmem:[#allocation7 + $0x8] sm:$0xff]
        %v1208 = vld [vmem:[#allocation7 + $0x10] sm:$0xff]
        %v1209 = vld [vmem:[#allocation7 + $0x18] sm:$0xff]
        %v1210 = vld [vmem:[#allocation7 + $0x20] sm:$0xff]
        %v1211 = vld [vmem:[#allocation7 + $0x28] sm:$0xff]
        %v1212 = vld [vmem:[#allocation7 + $0x30] sm:$0xff]
        %v1213 = vld [vmem:[#allocation7 + $0x38] sm:$0xff]
        %v1214 = vld [vmem:[#allocation7 + $0x40] sm:$0xff]
        %v1215 = vld [vmem:[#allocation7 + $0x48] sm:$0xff]
        %v1216 = vld [vmem:[#allocation7 + $0x50] sm:$0xff]
        %v1217 = vld [vmem:[#allocation7 + $0x58] sm:$0xff]
        %v1218 = vld [vmem:[#allocation7 + $0x60] sm:$0xff]
        %v1219 = vld [vmem:[#allocation7 + $0x68] sm:$0xff]
        %v1220 = vld [vmem:[#allocation7 + $0x70] sm:$0xff]
        %v1221 = vld [vmem:[#allocation7 + $0x78] sm:$0xff]
        %v1222 = vld [vmem:[%s6] sm:$0x3]
        %v1224 = vlaneseq
        %v1225 = vshrl.u32 %v1224, 7
        %v1226 = vsub.s32 0, %v1225
        %v1227 = vrot.slane %v1222, %v1226
        %v1228 = vlaneseq
        %v1229 = vshrl.u32 %v1228, 7
        %v1230 = vsub.s32 1, %v1229
        %v1231 = vrot.slane %v1222, %v1230
        %v1250 = vunpack.c.l.b16 %v1206
        %v1251 = vunpack.c.h.b16 %v1206
        %v1252 = vunpack.c.l.b16 %v1207
        %v1253 = vunpack.c.h.b16 %v1207
        %v1254 = vunpack.c.l.b16 %v1208
        %v1255 = vunpack.c.h.b16 %v1208
        %v1256 = vunpack.c.l.b16 %v1209
        %v1257 = vunpack.c.h.b16 %v1209
        %v1258 = vunpack.c.l.b16 %v1210
        %v1259 = vunpack.c.h.b16 %v1210
        %v1260 = vunpack.c.l.b16 %v1211
        %v1261 = vunpack.c.h.b16 %v1211
        %v1262 = vunpack.c.l.b16 %v1212
        %v1263 = vunpack.c.h.b16 %v1212
        %v1264 = vunpack.c.l.b16 %v1213
        %v1265 = vunpack.c.h.b16 %v1213
        %v1266 = vunpack.c.l.b16 %v1214
        %v1267 = vunpack.c.h.b16 %v1214
        %v1268 = vunpack.c.l.b16 %v1215
        %v1269 = vunpack.c.h.b16 %v1215
        %v1270 = vunpack.c.l.b16 %v1216
        %v1271 = vunpack.c.h.b16 %v1216
        %v1272 = vunpack.c.l.b16 %v1217
        %v1273 = vunpack.c.h.b16 %v1217
        %v1274 = vunpack.c.l.b16 %v1218
        %v1275 = vunpack.c.h.b16 %v1218
        %v1276 = vunpack.c.l.b16 %v1219
        %v1277 = vunpack.c.h.b16 %v1219
        %v1278 = vunpack.c.l.b16 %v1220
        %v1279 = vunpack.c.h.b16 %v1220
        %v1280 = vunpack.c.l.b16 %v1221
        %v1281 = vunpack.c.h.b16 %v1221
        %v1282 = vpack.c.b16 %v1252, %v1250
        %v1283 = vpack.c.b16 %v1253, %v1251
        %v1284 = vpack.c.b16 %v1256, %v1254
        %v1285 = vpack.c.b16 %v1257, %v1255
        %v1286 = vpack.c.b16 %v1260, %v1258
        %v1287 = vpack.c.b16 %v1261, %v1259
        %v1288 = vpack.c.b16 %v1264, %v1262
        %v1289 = vpack.c.b16 %v1265, %v1263
        %v1290 = vpack.c.b16 %v1268, %v1266
        %v1291 = vpack.c.b16 %v1269, %v1267
        %v1292 = vpack.c.b16 %v1272, %v1270
        %v1293 = vpack.c.b16 %v1273, %v1271
        %v1294 = vpack.c.b16 %v1276, %v1274
        %v1295 = vpack.c.b16 %v1277, %v1275
        %v1296 = vpack.c.b16 %v1280, %v1278
        %v1297 = vpack.c.b16 %v1281, %v1279
        %1314 = vmatprep.subr.bf16.mxu0 %v1283
        %1315 = vmatpush1.bf16.msra.mxu0 %v1282
        %1316 = vmatprep.subr.bf16.mxu0 %v1285
        %1317 = vmatpush1.bf16.msra.mxu0 %v1284
        %1318 = vmatprep.subr.bf16.mxu0 %v1287
        %1319 = vmatpush1.bf16.msra.mxu0 %v1286
        %1320 = vmatprep.subr.bf16.mxu0 %v1289
        %1321 = vmatpush1.bf16.msra.mxu0 %v1288
        %1322 = vmatprep.subr.bf16.mxu0 %v1291
        %1323 = vmatpush1.bf16.msra.mxu0 %v1290
        %1324 = vmatprep.subr.bf16.mxu0 %v1293
        %1325 = vmatpush1.bf16.msra.mxu0 %v1292
        %1326 = vmatprep.subr.bf16.mxu0 %v1295
        %1327 = vmatpush1.bf16.msra.mxu0 %v1294
        %1328 = vmatprep.subr.bf16.mxu0 %v1297
        %1329 = vmatpush1.bf16.msra.mxu0 %v1296
        %1330 = vmatprep.subr.bf16.mxu0 0
        %1331 = vmatpush1.bf16.msra.mxu0 0
        %1332 = vmatprep.subr.bf16.mxu0 0
        %1333 = vmatpush1.bf16.msra.mxu0 0
        %1334 = vmatprep.subr.bf16.mxu0 0
        %1335 = vmatpush1.bf16.msra.mxu0 0
        %1336 = vmatprep.subr.bf16.mxu0 0
        %1337 = vmatpush1.bf16.msra.mxu0 0
        %1338 = vmatprep.subr.bf16.mxu0 0
        %1339 = vmatpush1.bf16.msra.mxu0 0
        %1340 = vmatprep.subr.bf16.mxu0 0
        %1341 = vmatpush1.bf16.msra.mxu0 0
        %1342 = vmatprep.subr.bf16.mxu0 0
        %1343 = vmatpush1.bf16.msra.mxu0 0
        %1344 = vmatprep.subr.bf16.mxu0 0
        %1345 = vmatpush1.bf16.msra.mxu0 0
        %1346 = vmatprep.mubr.bf16.mxu0 0
        %1347 = vmatmul.mubr.bf16.gmra.mrb[0].mxu0 %v1205
        %v1348 = vpop.f32.mrb[0].mxu0
        %v1349 = vadd.f32 %v1227, %v1348
        %v1350 = vpop.f32.mrb[0].mxu0
        %v1351 = vadd.f32 %v1231, %v1350
        %v1352 = vpop.f32.mrb[0].mxu0
        %v1353 = vadd.f32 %v1227, %v1352
        %v1354 = vpop.f32.mrb[0].mxu0
        %v1355 = vadd.f32 %v1231, %v1354
        %1356 = vdwg.mxu0
        %v1357 = vmax.f32 %v1349, 0.0
        %v1358 = vmax.f32 %v1351, 0.0
        %v1359 = vmax.f32 %v1353, 0.0
        %v1360 = vmax.f32 %v1355, 0.0
        %v1363 = vrot.slane %v1359, 7
        %v1364 = vrot.slane %v1360, 7
        %v1369 = vrot.slane %v1357, 7
        %v1370 = vrot.slane %v1358, 7
        %v1371 = vsel %vm593, %v1369, %v1363
        %v1372 = vsel %vm593, %v1370, %v1364
        %v1377 = vsel %vm593, %v1363, %v1369
        %v1378 = vsel %vm593, %v1364, %v1370
        %v1379 = vsel %vm587, 0.0, %v1377
        %v1380 = vsel %vm587, 0.0, %v1378
        %v1381 = vsel %vm588, 0.0, %v1371
        %v1382 = vsel %vm588, 0.0, %v1372
        %v1383 = vrot.slane %v1357, 1
        %v1384 = vrot.slane %v1359, 1
        %v1385 = vsel %vm603, %v1383, %v1384
        %v1386 = vrot.slane %v1358, 1
        %v1387 = vrot.slane %v1360, 1
        %v1388 = vsel %vm603, %v1386, %v1387
        %v1395 = vsel %vm603, %v1384, %v1383
        %v1396 = vsel %vm603, %v1387, %v1386
        %v1397 = vsel %vm601, 0.0, %v1385
        %v1398 = vsel %vm601, 0.0, %v1388
        %v1399 = vsel %vm602, 0.0, %v1395
        %v1400 = vsel %vm602, 0.0, %v1396
        %v1401 = vld [vmem:[%s9] sm:$0xff]
        %vm1402 = vcmask 130048
        %v1404 = vsel %vm1402, %v1401, 0
        %1406 = vmatprep.subr.mxu0 %v1380
        %1407 = vmatpush1.msra.mxu0 %v1379
        %1408 = vmatprep.subr.mxu0 %v1382
        %1409 = vmatpush1.msra.mxu0 %v1381
        %1410 = vmatprep.subr.mxu0 0.0
        %1411 = vmatpush1.msra.mxu0 0.0
        %1412 = vmatprep.subr.mxu0 0.0
        %1413 = vmatpush1.msra.mxu0 0.0
        %1414 = vmatprep.subr.mxu0 0.0
        %1415 = vmatpush1.msra.mxu0 0.0
        %1416 = vmatprep.subr.mxu0 0.0
        %1417 = vmatpush1.msra.mxu0 0.0
        %1418 = vmatprep.subr.mxu0 0.0
        %1419 = vmatpush1.msra.mxu0 0.0
        %1420 = vmatprep.subr.mxu0 0.0
        %1421 = vmatpush1.msra.mxu0 0.0
        %1422 = vmatprep.subr.mxu0 0.0
        %1423 = vmatpush1.msra.mxu0 0.0
        %1424 = vmatprep.subr.mxu0 0.0
        %1425 = vmatpush1.msra.mxu0 0.0
        %1426 = vmatprep.subr.mxu0 0.0
        %1427 = vmatpush1.msra.mxu0 0.0
        %1428 = vmatprep.subr.mxu0 0.0
        %1429 = vmatpush1.msra.mxu0 0.0
        %1430 = vmatprep.subr.mxu0 0.0
        %1431 = vmatpush1.msra.mxu0 0.0
        %1432 = vmatprep.subr.mxu0 0.0
        %1433 = vmatpush1.msra.mxu0 0.0
        %1434 = vmatprep.subr.mxu0 0.0
        %1435 = vmatpush1.msra.mxu0 0.0
        %1436 = vmatprep.subr.mxu0 0.0
        %1437 = vmatpush1.msra.mxu0 0.0
        %1438 = vmatprep.subr.mxu0 0.0
        %1439 = vmatpush1.msra.mxu0 0.0
        %1440 = vmatprep.subr.mxu0 0.0
        %1441 = vmatpush1.msra.mxu0 0.0
        %1442 = vmatprep.subr.mxu0 0.0
        %1443 = vmatpush1.msra.mxu0 0.0
        %1444 = vmatprep.subr.mxu0 0.0
        %1445 = vmatpush1.msra.mxu0 0.0
        %1446 = vmatprep.subr.mxu0 0.0
        %1447 = vmatpush1.msra.mxu0 0.0
        %1448 = vmatprep.subr.mxu0 0.0
        %1449 = vmatpush1.msra.mxu0 0.0
        %1450 = vmatprep.subr.mxu0 0.0
        %1451 = vmatpush1.msra.mxu0 0.0
        %1452 = vmatprep.subr.mxu0 0.0
        %1453 = vmatpush1.msra.mxu0 0.0
        %1454 = vmatprep.subr.mxu0 0.0
        %1455 = vmatpush1.msra.mxu0 0.0
        %1456 = vmatprep.subr.mxu0 0.0
        %1457 = vmatpush1.msra.mxu0 0.0
        %1458 = vmatprep.subr.mxu0 0.0
        %1459 = vmatpush1.msra.mxu0 0.0
        %1460 = vmatprep.subr.mxu0 0.0
        %1461 = vmatpush1.msra.mxu0 0.0
        %1462 = vmatprep.subr.mxu0 0.0
        %1463 = vmatpush1.msra.mxu0 0.0
        %1464 = vmatprep.subr.mxu0 0.0
        %1465 = vmatpush1.msra.mxu0 0.0
        %1466 = vmatprep.subr.mxu0 0.0
        %1467 = vmatpush1.msra.mxu0 0.0
        %1468 = vmatprep.subr.mxu0 0.0
        %1469 = vmatpush1.msra.mxu0 0.0
        %1470 = vmatprep.mubr.f32.mxu0 0.0
        %1471 = vmatmul.mubr.f32.gmra.mrb[0].mxu0 %v1404
        %v1472 = vpop.f32.mrb[0].mxu0
        %v1473 = vadd.f32 0.0, %v1472
        %v1474 = vpop.f32.mrb[0].mxu0
        %v1475 = vadd.f32 0.0, %v1474
        %1476 = vdwg.mxu0
        %1477 = vmatprep.subr.mxu0 %v1358
        %1478 = vmatpush1.msra.mxu0 %v1357
        %1479 = vmatprep.subr.mxu0 %v1360
        %1480 = vmatpush1.msra.mxu0 %v1359
        %1481 = vmatprep.subr.mxu0 0.0
        %1482 = vmatpush1.msra.mxu0 0.0
        %1483 = vmatprep.subr.mxu0 0.0
        %1484 = vmatpush1.msra.mxu0 0.0
        %1485 = vmatprep.subr.mxu0 0.0
        %1486 = vmatpush1.msra.mxu0 0.0
        %1487 = vmatprep.subr.mxu0 0.0
        %1488 = vmatpush1.msra.mxu0 0.0
        %1489 = vmatprep.subr.mxu0 0.0
        %1490 = vmatpush1.msra.mxu0 0.0
        %1491 = vmatprep.subr.mxu0 0.0
        %1492 = vmatpush1.msra.mxu0 0.0
        %1493 = vmatprep.subr.mxu0 0.0
        %1494 = vmatpush1.msra.mxu0 0.0
        %1495 = vmatprep.subr.mxu0 0.0
        %1496 = vmatpush1.msra.mxu0 0.0
        %1497 = vmatprep.subr.mxu0 0.0
        %1498 = vmatpush1.msra.mxu0 0.0
        %1499 = vmatprep.subr.mxu0 0.0
        %1500 = vmatpush1.msra.mxu0 0.0
        %1501 = vmatprep.subr.mxu0 0.0
        %1502 = vmatpush1.msra.mxu0 0.0
        %1503 = vmatprep.subr.mxu0 0.0
        %1504 = vmatpush1.msra.mxu0 0.0
        %1505 = vmatprep.subr.mxu0 0.0
        %1506 = vmatpush1.msra.mxu0 0.0
        %1507 = vmatprep.subr.mxu0 0.0
        %1508 = vmatpush1.msra.mxu0 0.0
        %1509 = vmatprep.subr.mxu0 0.0
        %1510 = vmatpush1.msra.mxu0 0.0
        %1511 = vmatprep.subr.mxu0 0.0
        %1512 = vmatpush1.msra.mxu0 0.0
        %1513 = vmatprep.subr.mxu0 0.0
        %1514 = vmatpush1.msra.mxu0 0.0
        %1515 = vmatprep.subr.mxu0 0.0
        %1516 = vmatpush1.msra.mxu0 0.0
        %1517 = vmatprep.subr.mxu0 0.0
        %1518 = vmatpush1.msra.mxu0 0.0
        %1519 = vmatprep.subr.mxu0 0.0
        %1520 = vmatpush1.msra.mxu0 0.0
        %1521 = vmatprep.subr.mxu0 0.0
        %1522 = vmatpush1.msra.mxu0 0.0
        %1523 = vmatprep.subr.mxu0 0.0
        %1524 = vmatpush1.msra.mxu0 0.0
        %1525 = vmatprep.subr.mxu0 0.0
        %1526 = vmatpush1.msra.mxu0 0.0
        %1527 = vmatprep.subr.mxu0 0.0
        %1528 = vmatpush1.msra.mxu0 0.0
        %1529 = vmatprep.subr.mxu0 0.0
        %1530 = vmatpush1.msra.mxu0 0.0
        %1531 = vmatprep.subr.mxu0 0.0
        %1532 = vmatpush1.msra.mxu0 0.0
        %1533 = vmatprep.subr.mxu0 0.0
        %1534 = vmatpush1.msra.mxu0 0.0
        %1535 = vmatprep.subr.mxu0 0.0
        %1536 = vmatpush1.msra.mxu0 0.0
        %1537 = vmatprep.subr.mxu0 0.0
        %1538 = vmatpush1.msra.mxu0 0.0
        %1539 = vmatprep.subr.mxu0 0.0
        %1540 = vmatpush1.msra.mxu0 0.0
        %1541 = vmatprep.mubr.f32.mxu0 0.0
        %1542 = vmatmul.mubr.f32.gmra.mrb[0].mxu0 %v1404
        %v1543 = vpop.f32.mrb[0].mxu0
        %v1544 = vadd.f32 0.0, %v1543
        %v1545 = vpop.f32.mrb[0].mxu0
        %v1546 = vadd.f32 0.0, %v1545
        %1547 = vdwg.mxu0
        %1548 = vmatprep.subr.mxu0 %v1398
        %1549 = vmatpush1.msra.mxu0 %v1397
        %1550 = vmatprep.subr.mxu0 %v1400
        %1551 = vmatpush1.msra.mxu0 %v1399
        %1552 = vmatprep.subr.mxu0 0.0
        %1553 = vmatpush1.msra.mxu0 0.0
        %1554 = vmatprep.subr.mxu0 0.0
        %1555 = vmatpush1.msra.mxu0 0.0
        %1556 = vmatprep.subr.mxu0 0.0
        %1557 = vmatpush1.msra.mxu0 0.0
        %1558 = vmatprep.subr.mxu0 0.0
        %1559 = vmatpush1.msra.mxu0 0.0
        %1560 = vmatprep.subr.mxu0 0.0
        %1561 = vmatpush1.msra.mxu0 0.0
        %1562 = vmatprep.subr.mxu0 0.0
        %1563 = vmatpush1.msra.mxu0 0.0
        %1564 = vmatprep.subr.mxu0 0.0
        %1565 = vmatpush1.msra.mxu0 0.0
        %1566 = vmatprep.subr.mxu0 0.0
        %1567 = vmatpush1.msra.mxu0 0.0
        %1568 = vmatprep.subr.mxu0 0.0
        %1569 = vmatpush1.msra.mxu0 0.0
        %1570 = vmatprep.subr.mxu0 0.0
        %1571 = vmatpush1.msra.mxu0 0.0
        %1572 = vmatprep.subr.mxu0 0.0
        %1573 = vmatpush1.msra.mxu0 0.0
        %1574 = vmatprep.subr.mxu0 0.0
        %1575 = vmatpush1.msra.mxu0 0.0
        %1576 = vmatprep.subr.mxu0 0.0
        %1577 = vmatpush1.msra.mxu0 0.0
        %1578 = vmatprep.subr.mxu0 0.0
        %1579 = vmatpush1.msra.mxu0 0.0
        %1580 = vmatprep.subr.mxu0 0.0
        %1581 = vmatpush1.msra.mxu0 0.0
        %1582 = vmatprep.subr.mxu0 0.0
        %1583 = vmatpush1.msra.mxu0 0.0
        %1584 = vmatprep.subr.mxu0 0.0
        %1585 = vmatpush1.msra.mxu0 0.0
        %1586 = vmatprep.subr.mxu0 0.0
        %1587 = vmatpush1.msra.mxu0 0.0
        %1588 = vmatprep.subr.mxu0 0.0
        %1589 = vmatpush1.msra.mxu0 0.0
        %1590 = vmatprep.subr.mxu0 0.0
        %1591 = vmatpush1.msra.mxu0 0.0
        %1592 = vmatprep.subr.mxu0 0.0
        %1593 = vmatpush1.msra.mxu0 0.0
        %1594 = vmatprep.subr.mxu0 0.0
        %1595 = vmatpush1.msra.mxu0 0.0
        %1596 = vmatprep.subr.mxu0 0.0
        %1597 = vmatpush1.msra.mxu0 0.0
        %1598 = vmatprep.subr.mxu0 0.0
        %1599 = vmatpush1.msra.mxu0 0.0
        %1600 = vmatprep.subr.mxu0 0.0
        %1601 = vmatpush1.msra.mxu0 0.0
        %1602 = vmatprep.subr.mxu0 0.0
        %1603 = vmatpush1.msra.mxu0 0.0
        %1604 = vmatprep.subr.mxu0 0.0
        %1605 = vmatpush1.msra.mxu0 0.0
        %1606 = vmatprep.subr.mxu0 0.0
        %1607 = vmatpush1.msra.mxu0 0.0
        %1608 = vmatprep.subr.mxu0 0.0
        %1609 = vmatpush1.msra.mxu0 0.0
        %1610 = vmatprep.subr.mxu0 0.0
        %1611 = vmatpush1.msra.mxu0 0.0
        %1612 = vmatprep.mubr.f32.mxu0 0.0
        %1613 = vmatmul.mubr.f32.gmra.mrb[0].mxu0 %v1404
        %v1614 = vpop.f32.mrb[0].mxu0
        %v1615 = vadd.f32 0.0, %v1614
        %v1616 = vpop.f32.mrb[0].mxu0
        %v1617 = vadd.f32 0.0, %v1616
        %1618 = vdwg.mxu0
        %v1619 = vpack.c.bf16 %v1473, %v1473
        %v1620 = vpack.c.bf16 %v1475, %v1475
        %v1621 = vpack.c.bf16 %v1544, %v1544
        %v1622 = vpack.c.bf16 %v1546, %v1546
        %v1623 = vpack.c.bf16 %v1615, %v1615
        %v1624 = vpack.c.bf16 %v1617, %v1617
        %v1625 = vld [vmem:[#allocation8] sm:$0xf]
        %v1626 = vld [vmem:[#allocation8 + $0x4] sm:$0xf]
        %v1627 = vld [vmem:[#allocation8 + $0x8] sm:$0xf]
        %v1628 = vld [vmem:[#allocation8 + $0xc] sm:$0xf]
        %v1629 = vld [vmem:[#allocation8 + $0x10] sm:$0xf]
        %v1630 = vld [vmem:[#allocation8 + $0x14] sm:$0xf]
        %v1631 = vld [vmem:[#allocation8 + $0x18] sm:$0xf]
        %v1632 = vld [vmem:[#allocation8 + $0x1c] sm:$0xf]
        %v1633 = vld [vmem:[#allocation8 + $0x20] sm:$0xf]
        %v1634 = vld [vmem:[#allocation8 + $0x24] sm:$0xf]
        %v1635 = vld [vmem:[#allocation8 + $0x28] sm:$0xf]
        %v1636 = vld [vmem:[#allocation8 + $0x2c] sm:$0xf]
        %v1637 = vld [vmem:[#allocation8 + $0x30] sm:$0xf]
        %v1638 = vld [vmem:[#allocation8 + $0x34] sm:$0xf]
        %v1639 = vld [vmem:[#allocation8 + $0x38] sm:$0xf]
        %v1640 = vld [vmem:[#allocation8 + $0x3c] sm:$0xf]
        %v1641 = vld [vmem:[#allocation8 + $0x40] sm:$0xf]
        %v1642 = vld [vmem:[#allocation8 + $0x44] sm:$0xf]
        %v1643 = vld [vmem:[#allocation8 + $0x48] sm:$0xf]
        %v1644 = vld [vmem:[#allocation8 + $0x4c] sm:$0xf]
        %v1645 = vld [vmem:[#allocation8 + $0x50] sm:$0xf]
        %v1646 = vld [vmem:[#allocation8 + $0x54] sm:$0xf]
        %v1647 = vld [vmem:[#allocation8 + $0x58] sm:$0xf]
        %v1648 = vld [vmem:[#allocation8 + $0x5c] sm:$0xf]
        %v1649 = vld [vmem:[#allocation8 + $0x60] sm:$0xf]
        %v1650 = vld [vmem:[#allocation8 + $0x64] sm:$0xf]
        %v1651 = vld [vmem:[#allocation8 + $0x68] sm:$0xf]
        %v1652 = vld [vmem:[#allocation8 + $0x6c] sm:$0xf]
        %v1653 = vld [vmem:[#allocation8 + $0x70] sm:$0xf]
        %v1654 = vld [vmem:[#allocation8 + $0x74] sm:$0xf]
        %v1655 = vld [vmem:[#allocation8 + $0x78] sm:$0xf]
        %v1656 = vld [vmem:[#allocation8 + $0x7c] sm:$0xf]
        %v1657 = vld [vmem:[#allocation8 + $0x80] sm:$0xf]
        %v1658 = vld [vmem:[#allocation8 + $0x84] sm:$0xf]
        %v1659 = vld [vmem:[#allocation8 + $0x88] sm:$0xf]
        %v1660 = vld [vmem:[#allocation8 + $0x8c] sm:$0xf]
        %v1661 = vld [vmem:[#allocation8 + $0x90] sm:$0xf]
        %v1662 = vld [vmem:[#allocation8 + $0x94] sm:$0xf]
        %v1663 = vld [vmem:[#allocation8 + $0x98] sm:$0xf]
        %v1664 = vld [vmem:[#allocation8 + $0x9c] sm:$0xf]
        %v1665 = vld [vmem:[#allocation8 + $0xa0] sm:$0xf]
        %v1666 = vld [vmem:[#allocation8 + $0xa4] sm:$0xf]
        %v1667 = vld [vmem:[#allocation8 + $0xa8] sm:$0xf]
        %v1668 = vld [vmem:[#allocation8 + $0xac] sm:$0xf]
        %v1669 = vld [vmem:[#allocation8 + $0xb0] sm:$0xf]
        %v1670 = vld [vmem:[#allocation8 + $0xb4] sm:$0xf]
        %v1671 = vld [vmem:[#allocation8 + $0xb8] sm:$0xf]
        %v1672 = vld [vmem:[#allocation8 + $0xbc] sm:$0xf]
        %v1673 = vld [vmem:[#allocation8 + $0xc0] sm:$0xf]
        %v1674 = vld [vmem:[#allocation8 + $0xc4] sm:$0xf]
        %v1675 = vld [vmem:[#allocation8 + $0xc8] sm:$0xf]
        %v1676 = vld [vmem:[#allocation8 + $0xcc] sm:$0xf]
        %v1677 = vld [vmem:[#allocation8 + $0xd0] sm:$0xf]
        %v1678 = vld [vmem:[#allocation8 + $0xd4] sm:$0xf]
        %v1679 = vld [vmem:[#allocation8 + $0xd8] sm:$0xf]
        %v1680 = vld [vmem:[#allocation8 + $0xdc] sm:$0xf]
        %v1681 = vld [vmem:[#allocation8 + $0xe0] sm:$0xf]
        %v1682 = vld [vmem:[#allocation8 + $0xe4] sm:$0xf]
        %v1683 = vld [vmem:[#allocation8 + $0xe8] sm:$0xf]
        %v1684 = vld [vmem:[#allocation8 + $0xec] sm:$0xf]
        %v1685 = vld [vmem:[#allocation8 + $0xf0] sm:$0xf]
        %v1686 = vld [vmem:[#allocation8 + $0xf4] sm:$0xf]
        %v1687 = vld [vmem:[#allocation8 + $0xf8] sm:$0xf]
        %v1688 = vld [vmem:[#allocation8 + $0xfc] sm:$0xf]
        %v1689 = vld [vmem:[#allocation8 + $0x100] sm:$0xf]
        %v1690 = vld [vmem:[#allocation8 + $0x104] sm:$0xf]
        %v1691 = vld [vmem:[#allocation8 + $0x108] sm:$0xf]
        %v1692 = vld [vmem:[#allocation8 + $0x10c] sm:$0xf]
        %v1693 = vld [vmem:[#allocation8 + $0x110] sm:$0xf]
        %v1694 = vld [vmem:[#allocation8 + $0x114] sm:$0xf]
        %v1695 = vld [vmem:[#allocation8 + $0x118] sm:$0xf]
        %v1696 = vld [vmem:[#allocation8 + $0x11c] sm:$0xf]
        %v1697 = vld [vmem:[#allocation8 + $0x120] sm:$0xf]
        %v1698 = vld [vmem:[#allocation8 + $0x124] sm:$0xf]
        %v1699 = vld [vmem:[#allocation8 + $0x128] sm:$0xf]
        %v1700 = vld [vmem:[#allocation8 + $0x12c] sm:$0xf]
        %v1701 = vld [vmem:[#allocation8 + $0x130] sm:$0xf]
        %v1702 = vld [vmem:[#allocation8 + $0x134] sm:$0xf]
        %v1703 = vld [vmem:[#allocation8 + $0x138] sm:$0xf]
        %v1704 = vld [vmem:[#allocation8 + $0x13c] sm:$0xf]
        %v1705 = vld [vmem:[#allocation8 + $0x140] sm:$0xf]
        %v1706 = vld [vmem:[#allocation8 + $0x144] sm:$0xf]
        %v1707 = vld [vmem:[#allocation8 + $0x148] sm:$0xf]
        %v1708 = vld [vmem:[#allocation8 + $0x14c] sm:$0xf]
        %v1709 = vld [vmem:[#allocation8 + $0x150] sm:$0xf]
        %v1710 = vld [vmem:[#allocation8 + $0x154] sm:$0xf]
        %v1711 = vld [vmem:[#allocation8 + $0x158] sm:$0xf]
        %v1712 = vld [vmem:[#allocation8 + $0x15c] sm:$0xf]
        %v1713 = vld [vmem:[#allocation8 + $0x160] sm:$0xf]
        %v1714 = vld [vmem:[#allocation8 + $0x164] sm:$0xf]
        %v1715 = vld [vmem:[#allocation8 + $0x168] sm:$0xf]
        %v1716 = vld [vmem:[#allocation8 + $0x16c] sm:$0xf]
        %v1717 = vld [vmem:[#allocation8 + $0x170] sm:$0xf]
        %v1718 = vld [vmem:[#allocation8 + $0x174] sm:$0xf]
        %v1719 = vld [vmem:[#allocation8 + $0x178] sm:$0xf]
        %v1720 = vld [vmem:[#allocation8 + $0x17c] sm:$0xf]
        %v1721 = vld [vmem:[%s8] sm:$0x1]
        %v1723 = vlaneseq
        %v1724 = vshrl.u32 %v1723, 7
        %v1725 = vsub.s32 0, %v1724
        %v1726 = vrot.slane %v1721, %v1725
        %v1824 = vunpack.c.l.b16 %v1625
        %v1825 = vunpack.c.l.b16 %v1626
        %v1826 = vunpack.c.l.b16 %v1627
        %v1827 = vunpack.c.l.b16 %v1628
        %v1828 = vunpack.c.l.b16 %v1629
        %v1829 = vunpack.c.l.b16 %v1630
        %v1830 = vunpack.c.l.b16 %v1631
        %v1831 = vunpack.c.l.b16 %v1632
        %v1832 = vunpack.c.l.b16 %v1633
        %v1833 = vunpack.c.l.b16 %v1634
        %v1834 = vunpack.c.l.b16 %v1635
        %v1835 = vunpack.c.l.b16 %v1636
        %v1836 = vunpack.c.l.b16 %v1637
        %v1837 = vunpack.c.l.b16 %v1638
        %v1838 = vunpack.c.l.b16 %v1639
        %v1839 = vunpack.c.l.b16 %v1640
        %v1840 = vunpack.c.l.b16 %v1641
        %v1841 = vunpack.c.l.b16 %v1642
        %v1842 = vunpack.c.l.b16 %v1643
        %v1843 = vunpack.c.l.b16 %v1644
        %v1844 = vunpack.c.l.b16 %v1645
        %v1845 = vunpack.c.l.b16 %v1646
        %v1846 = vunpack.c.l.b16 %v1647
        %v1847 = vunpack.c.l.b16 %v1648
        %v1848 = vunpack.c.l.b16 %v1649
        %v1849 = vunpack.c.l.b16 %v1650
        %v1850 = vunpack.c.l.b16 %v1651
        %v1851 = vunpack.c.l.b16 %v1652
        %v1852 = vunpack.c.l.b16 %v1653
        %v1853 = vunpack.c.l.b16 %v1654
        %v1854 = vunpack.c.l.b16 %v1655
        %v1855 = vunpack.c.l.b16 %v1656
        %v1856 = vunpack.c.l.b16 %v1657
        %v1857 = vunpack.c.l.b16 %v1658
        %v1858 = vunpack.c.l.b16 %v1659
        %v1859 = vunpack.c.l.b16 %v1660
        %v1860 = vunpack.c.l.b16 %v1661
        %v1861 = vunpack.c.l.b16 %v1662
        %v1862 = vunpack.c.l.b16 %v1663
        %v1863 = vunpack.c.l.b16 %v1664
        %v1864 = vunpack.c.l.b16 %v1665
        %v1865 = vunpack.c.l.b16 %v1666
        %v1866 = vunpack.c.l.b16 %v1667
        %v1867 = vunpack.c.l.b16 %v1668
        %v1868 = vunpack.c.l.b16 %v1669
        %v1869 = vunpack.c.l.b16 %v1670
        %v1870 = vunpack.c.l.b16 %v1671
        %v1871 = vunpack.c.l.b16 %v1672
        %v1872 = vunpack.c.l.b16 %v1673
        %v1873 = vunpack.c.l.b16 %v1674
        %v1874 = vunpack.c.l.b16 %v1675
        %v1875 = vunpack.c.l.b16 %v1676
        %v1876 = vunpack.c.l.b16 %v1677
        %v1877 = vunpack.c.l.b16 %v1678
        %v1878 = vunpack.c.l.b16 %v1679
        %v1879 = vunpack.c.l.b16 %v1680
        %v1880 = vunpack.c.l.b16 %v1681
        %v1881 = vunpack.c.l.b16 %v1682
        %v1882 = vunpack.c.l.b16 %v1683
        %v1883 = vunpack.c.l.b16 %v1684
        %v1884 = vunpack.c.l.b16 %v1685
        %v1885 = vunpack.c.l.b16 %v1686
        %v1886 = vunpack.c.l.b16 %v1687
        %v1887 = vunpack.c.l.b16 %v1688
        %v1888 = vunpack.c.l.b16 %v1689
        %v1889 = vunpack.c.l.b16 %v1690
        %v1890 = vunpack.c.l.b16 %v1691
        %v1891 = vunpack.c.l.b16 %v1692
        %v1892 = vunpack.c.l.b16 %v1693
        %v1893 = vunpack.c.l.b16 %v1694
        %v1894 = vunpack.c.l.b16 %v1695
        %v1895 = vunpack.c.l.b16 %v1696
        %v1896 = vunpack.c.l.b16 %v1697
        %v1897 = vunpack.c.l.b16 %v1698
        %v1898 = vunpack.c.l.b16 %v1699
        %v1899 = vunpack.c.l.b16 %v1700
        %v1900 = vunpack.c.l.b16 %v1701
        %v1901 = vunpack.c.l.b16 %v1702
        %v1902 = vunpack.c.l.b16 %v1703
        %v1903 = vunpack.c.l.b16 %v1704
        %v1904 = vunpack.c.l.b16 %v1705
        %v1905 = vunpack.c.l.b16 %v1706
        %v1906 = vunpack.c.l.b16 %v1707
        %v1907 = vunpack.c.l.b16 %v1708
        %v1908 = vunpack.c.l.b16 %v1709
        %v1909 = vunpack.c.l.b16 %v1710
        %v1910 = vunpack.c.l.b16 %v1711
        %v1911 = vunpack.c.l.b16 %v1712
        %v1912 = vunpack.c.l.b16 %v1713
        %v1913 = vunpack.c.l.b16 %v1714
        %v1914 = vunpack.c.l.b16 %v1715
        %v1915 = vunpack.c.l.b16 %v1716
        %v1916 = vunpack.c.l.b16 %v1717
        %v1917 = vunpack.c.l.b16 %v1718
        %v1918 = vunpack.c.l.b16 %v1719
        %v1919 = vunpack.c.l.b16 %v1720
        %v1920 = vpack.c.b16 %v1825, %v1824
        %v1921 = vpack.c.b16 %v1827, %v1826
        %v1922 = vpack.c.b16 %v1829, %v1828
        %v1923 = vpack.c.b16 %v1831, %v1830
        %v1924 = vpack.c.b16 %v1833, %v1832
        %v1925 = vpack.c.b16 %v1835, %v1834
        %v1926 = vpack.c.b16 %v1837, %v1836
        %v1927 = vpack.c.b16 %v1839, %v1838
        %v1928 = vpack.c.b16 %v1841, %v1840
        %v1929 = vpack.c.b16 %v1843, %v1842
        %v1930 = vpack.c.b16 %v1845, %v1844
        %v1931 = vpack.c.b16 %v1847, %v1846
        %v1932 = vpack.c.b16 %v1849, %v1848
        %v1933 = vpack.c.b16 %v1851, %v1850
        %v1934 = vpack.c.b16 %v1853, %v1852
        %v1935 = vpack.c.b16 %v1855, %v1854
        %v1936 = vpack.c.b16 %v1857, %v1856
        %v1937 = vpack.c.b16 %v1859, %v1858
        %v1938 = vpack.c.b16 %v1861, %v1860
        %v1939 = vpack.c.b16 %v1863, %v1862
        %v1940 = vpack.c.b16 %v1865, %v1864
        %v1941 = vpack.c.b16 %v1867, %v1866
        %v1942 = vpack.c.b16 %v1869, %v1868
        %v1943 = vpack.c.b16 %v1871, %v1870
        %v1944 = vpack.c.b16 %v1873, %v1872
        %v1945 = vpack.c.b16 %v1875, %v1874
        %v1946 = vpack.c.b16 %v1877, %v1876
        %v1947 = vpack.c.b16 %v1879, %v1878
        %v1948 = vpack.c.b16 %v1881, %v1880
        %v1949 = vpack.c.b16 %v1883, %v1882
        %v1950 = vpack.c.b16 %v1885, %v1884
        %v1951 = vpack.c.b16 %v1887, %v1886
        %v1952 = vpack.c.b16 %v1889, %v1888
        %v1953 = vpack.c.b16 %v1891, %v1890
        %v1954 = vpack.c.b16 %v1893, %v1892
        %v1955 = vpack.c.b16 %v1895, %v1894
        %v1956 = vpack.c.b16 %v1897, %v1896
        %v1957 = vpack.c.b16 %v1899, %v1898
        %v1958 = vpack.c.b16 %v1901, %v1900
        %v1959 = vpack.c.b16 %v1903, %v1902
        %v1960 = vpack.c.b16 %v1905, %v1904
        %v1961 = vpack.c.b16 %v1907, %v1906
        %v1962 = vpack.c.b16 %v1909, %v1908
        %v1963 = vpack.c.b16 %v1911, %v1910
        %v1964 = vpack.c.b16 %v1913, %v1912
        %v1965 = vpack.c.b16 %v1915, %v1914
        %v1966 = vpack.c.b16 %v1917, %v1916
        %v1967 = vpack.c.b16 %v1919, %v1918
        %2016 = vmatprep.subr.bf16.mxu0 0
        %2017 = vmatpush1.bf16.msra.mxu0 %v1920
        %2018 = vmatprep.subr.bf16.mxu0 0
        %2019 = vmatpush1.bf16.msra.mxu0 %v1921
        %2020 = vmatprep.subr.bf16.mxu0 0
        %2021 = vmatpush1.bf16.msra.mxu0 %v1922
        %2022 = vmatprep.subr.bf16.mxu0 0
        %2023 = vmatpush1.bf16.msra.mxu0 %v1923
        %2024 = vmatprep.subr.bf16.mxu0 0
        %2025 = vmatpush1.bf16.msra.mxu0 %v1924
        %2026 = vmatprep.subr.bf16.mxu0 0
        %2027 = vmatpush1.bf16.msra.mxu0 %v1925
        %2028 = vmatprep.subr.bf16.mxu0 0
        %2029 = vmatpush1.bf16.msra.mxu0 %v1926
        %2030 = vmatprep.subr.bf16.mxu0 0
        %2031 = vmatpush1.bf16.msra.mxu0 %v1927
        %2032 = vmatprep.subr.bf16.mxu0 0
        %2033 = vmatpush1.bf16.msra.mxu0 %v1928
        %2034 = vmatprep.subr.bf16.mxu0 0
        %2035 = vmatpush1.bf16.msra.mxu0 %v1929
        %2036 = vmatprep.subr.bf16.mxu0 0
        %2037 = vmatpush1.bf16.msra.mxu0 %v1930
        %2038 = vmatprep.subr.bf16.mxu0 0
        %2039 = vmatpush1.bf16.msra.mxu0 %v1931
        %2040 = vmatprep.subr.bf16.mxu0 0
        %2041 = vmatpush1.bf16.msra.mxu0 %v1932
        %2042 = vmatprep.subr.bf16.mxu0 0
        %2043 = vmatpush1.bf16.msra.mxu0 %v1933
        %2044 = vmatprep.subr.bf16.mxu0 0
        %2045 = vmatpush1.bf16.msra.mxu0 %v1934
        %2046 = vmatprep.subr.bf16.mxu0 0
        %2047 = vmatpush1.bf16.msra.mxu0 %v1935
        %2048 = vmatprep.mubr.bf16.mxu0 %v1620
        %2049 = vmatmul.mubr.bf16.gmra.mrb[0].mxu0 %v1619
        %v2050 = vpop.f32.mrb[0].mxu0
        %v2051 = vadd.f32 %v1726, %v2050
        %v2052 = vpop.f32.mrb[0].mxu0
        %v2053 = vpop.f32.mrb[0].mxu0
        %v2054 = vpop.f32.mrb[0].mxu0
        %2055 = vdwg.mxu0
        %2056 = vmatprep.subr.bf16.mxu0 0
        %2057 = vmatpush1.bf16.msra.mxu0 %v1936
        %2058 = vmatprep.subr.bf16.mxu0 0
        %2059 = vmatpush1.bf16.msra.mxu0 %v1937
        %2060 = vmatprep.subr.bf16.mxu0 0
        %2061 = vmatpush1.bf16.msra.mxu0 %v1938
        %2062 = vmatprep.subr.bf16.mxu0 0
        %2063 = vmatpush1.bf16.msra.mxu0 %v1939
        %2064 = vmatprep.subr.bf16.mxu0 0
        %2065 = vmatpush1.bf16.msra.mxu0 %v1940
        %2066 = vmatprep.subr.bf16.mxu0 0
        %2067 = vmatpush1.bf16.msra.mxu0 %v1941
        %2068 = vmatprep.subr.bf16.mxu0 0
        %2069 = vmatpush1.bf16.msra.mxu0 %v1942
        %2070 = vmatprep.subr.bf16.mxu0 0
        %2071 = vmatpush1.bf16.msra.mxu0 %v1943
        %2072 = vmatprep.subr.bf16.mxu0 0
        %2073 = vmatpush1.bf16.msra.mxu0 %v1944
        %2074 = vmatprep.subr.bf16.mxu0 0
        %2075 = vmatpush1.bf16.msra.mxu0 %v1945
        %2076 = vmatprep.subr.bf16.mxu0 0
        %2077 = vmatpush1.bf16.msra.mxu0 %v1946
        %2078 = vmatprep.subr.bf16.mxu0 0
        %2079 = vmatpush1.bf16.msra.mxu0 %v1947
        %2080 = vmatprep.subr.bf16.mxu0 0
        %2081 = vmatpush1.bf16.msra.mxu0 %v1948
        %2082 = vmatprep.subr.bf16.mxu0 0
        %2083 = vmatpush1.bf16.msra.mxu0 %v1949
        %2084 = vmatprep.subr.bf16.mxu0 0
        %2085 = vmatpush1.bf16.msra.mxu0 %v1950
        %2086 = vmatprep.subr.bf16.mxu0 0
        %2087 = vmatpush1.bf16.msra.mxu0 %v1951
        %2088 = vmatprep.mubr.bf16.mxu0 %v1622
        %2089 = vmatmul.mubr.bf16.gmra.mrb[0].mxu0 %v1621
        %v2090 = vpop.f32.mrb[0].mxu0
        %v2091 = vadd.f32 %v2051, %v2090
        %v2092 = vpop.f32.mrb[0].mxu0
        %v2093 = vpop.f32.mrb[0].mxu0
        %v2094 = vpop.f32.mrb[0].mxu0
        %2095 = vdwg.mxu0
        %2096 = vmatprep.subr.bf16.mxu0 0
        %2097 = vmatpush1.bf16.msra.mxu0 %v1952
        %2098 = vmatprep.subr.bf16.mxu0 0
        %2099 = vmatpush1.bf16.msra.mxu0 %v1953
        %2100 = vmatprep.subr.bf16.mxu0 0
        %2101 = vmatpush1.bf16.msra.mxu0 %v1954
        %2102 = vmatprep.subr.bf16.mxu0 0
        %2103 = vmatpush1.bf16.msra.mxu0 %v1955
        %2104 = vmatprep.subr.bf16.mxu0 0
        %2105 = vmatpush1.bf16.msra.mxu0 %v1956
        %2106 = vmatprep.subr.bf16.mxu0 0
        %2107 = vmatpush1.bf16.msra.mxu0 %v1957
        %2108 = vmatprep.subr.bf16.mxu0 0
        %2109 = vmatpush1.bf16.msra.mxu0 %v1958
        %2110 = vmatprep.subr.bf16.mxu0 0
        %2111 = vmatpush1.bf16.msra.mxu0 %v1959
        %2112 = vmatprep.subr.bf16.mxu0 0
        %2113 = vmatpush1.bf16.msra.mxu0 %v1960
        %2114 = vmatprep.subr.bf16.mxu0 0
        %2115 = vmatpush1.bf16.msra.mxu0 %v1961
        %2116 = vmatprep.subr.bf16.mxu0 0
        %2117 = vmatpush1.bf16.msra.mxu0 %v1962
        %2118 = vmatprep.subr.bf16.mxu0 0
        %2119 = vmatpush1.bf16.msra.mxu0 %v1963
        %2120 = vmatprep.subr.bf16.mxu0 0
        %2121 = vmatpush1.bf16.msra.mxu0 %v1964
        %2122 = vmatprep.subr.bf16.mxu0 0
        %2123 = vmatpush1.bf16.msra.mxu0 %v1965
        %2124 = vmatprep.subr.bf16.mxu0 0
        %2125 = vmatpush1.bf16.msra.mxu0 %v1966
        %2126 = vmatprep.subr.bf16.mxu0 0
        %2127 = vmatpush1.bf16.msra.mxu0 %v1967
        %2128 = vmatprep.mubr.bf16.mxu0 %v1624
        %2129 = vmatmul.mubr.bf16.gmra.mrb[0].mxu0 %v1623
        %v2130 = vpop.f32.mrb[0].mxu0
        %v2131 = vadd.f32 %v2091, %v2130
        %v2132 = vpop.f32.mrb[0].mxu0
        %v2133 = vpop.f32.mrb[0].mxu0
        %v2134 = vpop.f32.mrb[0].mxu0
        %2135 = vdwg.mxu0
        %v2136 = vmax.f32 %v2131, 0.0
        %v2138 = vrot.slane %v2136, 7
        %v2140 = vsel %vm593, %v2138, %v2138
        %v2141 = vsel %vm587, 0.0, %v2140
        %vm2142 = vcmp.eq.s32.totalorder %v585, 7
        %v2143 = vrot.slane %v2136, 1
        %v2145 = vsel %vm603, %v2143, %v2143
        %v2146 = vsel %vm2142, 0.0, %v2145
        %v2147 = vpack.c.bf16 %v2141, %v2141
        %v2148 = vpack.c.bf16 %v2136, %v2136
        %v2149 = vpack.c.bf16 %v2146, %v2146
        %v2150 = vld [vmem:[#allocation10] sm:$0xf]
        %v2151 = vld [vmem:[#allocation10 + $0x4] sm:$0xf]
        %v2152 = vld [vmem:[#allocation10 + $0x8] sm:$0xf]
        %v2153 = vld [vmem:[#allocation10 + $0xc] sm:$0xf]
        %v2154 = vld [vmem:[#allocation10 + $0x10] sm:$0xf]
        %v2155 = vld [vmem:[#allocation10 + $0x14] sm:$0xf]
        %v2156 = vld [vmem:[#allocation10 + $0x18] sm:$0xf]
        %v2157 = vld [vmem:[#allocation10 + $0x1c] sm:$0xf]
        %v2158 = vld [vmem:[#allocation10 + $0x20] sm:$0xf]
        %v2159 = vld [vmem:[#allocation10 + $0x24] sm:$0xf]
        %v2160 = vld [vmem:[#allocation10 + $0x28] sm:$0xf]
        %v2161 = vld [vmem:[#allocation10 + $0x2c] sm:$0xf]
        %v2162 = vld [vmem:[#allocation10 + $0x30] sm:$0xf]
        %v2163 = vld [vmem:[#allocation10 + $0x34] sm:$0xf]
        %v2164 = vld [vmem:[#allocation10 + $0x38] sm:$0xf]
        %v2165 = vld [vmem:[#allocation10 + $0x3c] sm:$0xf]
        %v2166 = vld [vmem:[#allocation10 + $0x40] sm:$0xf]
        %v2167 = vld [vmem:[#allocation10 + $0x44] sm:$0xf]
        %v2168 = vld [vmem:[#allocation10 + $0x48] sm:$0xf]
        %v2169 = vld [vmem:[#allocation10 + $0x4c] sm:$0xf]
        %v2170 = vld [vmem:[#allocation10 + $0x50] sm:$0xf]
        %v2171 = vld [vmem:[#allocation10 + $0x54] sm:$0xf]
        %v2172 = vld [vmem:[#allocation10 + $0x58] sm:$0xf]
        %v2173 = vld [vmem:[#allocation10 + $0x5c] sm:$0xf]
        %v2174 = vld [vmem:[#allocation10 + $0x60] sm:$0xf]
        %v2175 = vld [vmem:[#allocation10 + $0x64] sm:$0xf]
        %v2176 = vld [vmem:[#allocation10 + $0x68] sm:$0xf]
        %v2177 = vld [vmem:[#allocation10 + $0x6c] sm:$0xf]
        %v2178 = vld [vmem:[#allocation10 + $0x70] sm:$0xf]
        %v2179 = vld [vmem:[#allocation10 + $0x74] sm:$0xf]
        %v2180 = vld [vmem:[#allocation10 + $0x78] sm:$0xf]
        %v2181 = vld [vmem:[#allocation10 + $0x7c] sm:$0xf]
        %v2182 = vld [vmem:[#allocation10 + $0x80] sm:$0xf]
        %v2183 = vld [vmem:[#allocation10 + $0x84] sm:$0xf]
        %v2184 = vld [vmem:[#allocation10 + $0x88] sm:$0xf]
        %v2185 = vld [vmem:[#allocation10 + $0x8c] sm:$0xf]
        %v2186 = vld [vmem:[#allocation10 + $0x90] sm:$0xf]
        %v2187 = vld [vmem:[#allocation10 + $0x94] sm:$0xf]
        %v2188 = vld [vmem:[#allocation10 + $0x98] sm:$0xf]
        %v2189 = vld [vmem:[#allocation10 + $0x9c] sm:$0xf]
        %v2190 = vld [vmem:[#allocation10 + $0xa0] sm:$0xf]
        %v2191 = vld [vmem:[#allocation10 + $0xa4] sm:$0xf]
        %v2192 = vld [vmem:[#allocation10 + $0xa8] sm:$0xf]
        %v2193 = vld [vmem:[#allocation10 + $0xac] sm:$0xf]
        %v2194 = vld [vmem:[#allocation10 + $0xb0] sm:$0xf]
        %v2195 = vld [vmem:[#allocation10 + $0xb4] sm:$0xf]
        %v2196 = vld [vmem:[#allocation10 + $0xb8] sm:$0xf]
        %v2197 = vld [vmem:[#allocation10 + $0xbc] sm:$0xf]
        %v2198 = vld [vmem:[%s11] sm:$0x1]
        %v2200 = vlaneseq
        %v2201 = vshrl.u32 %v2200, 7
        %v2202 = vsub.s32 0, %v2201
        %v2203 = vrot.slane %v2198, %v2202
        %v2253 = vunpack.c.l.b16 %v2150
        %v2254 = vunpack.c.l.b16 %v2151
        %v2255 = vunpack.c.l.b16 %v2152
        %v2256 = vunpack.c.l.b16 %v2153
        %v2257 = vunpack.c.l.b16 %v2154
        %v2258 = vunpack.c.l.b16 %v2155
        %v2259 = vunpack.c.l.b16 %v2156
        %v2260 = vunpack.c.l.b16 %v2157
        %v2261 = vunpack.c.l.b16 %v2158
        %v2262 = vunpack.c.l.b16 %v2159
        %v2263 = vunpack.c.l.b16 %v2160
        %v2264 = vunpack.c.l.b16 %v2161
        %v2265 = vunpack.c.l.b16 %v2162
        %v2266 = vunpack.c.l.b16 %v2163
        %v2267 = vunpack.c.l.b16 %v2164
        %v2268 = vunpack.c.l.b16 %v2165
        %v2269 = vunpack.c.l.b16 %v2166
        %v2270 = vunpack.c.l.b16 %v2167
        %v2271 = vunpack.c.l.b16 %v2168
        %v2272 = vunpack.c.l.b16 %v2169
        %v2273 = vunpack.c.l.b16 %v2170
        %v2274 = vunpack.c.l.b16 %v2171
        %v2275 = vunpack.c.l.b16 %v2172
        %v2276 = vunpack.c.l.b16 %v2173
        %v2277 = vunpack.c.l.b16 %v2174
        %v2278 = vunpack.c.l.b16 %v2175
        %v2279 = vunpack.c.l.b16 %v2176
        %v2280 = vunpack.c.l.b16 %v2177
        %v2281 = vunpack.c.l.b16 %v2178
        %v2282 = vunpack.c.l.b16 %v2179
        %v2283 = vunpack.c.l.b16 %v2180
        %v2284 = vunpack.c.l.b16 %v2181
        %v2285 = vunpack.c.l.b16 %v2182
        %v2286 = vunpack.c.l.b16 %v2183
        %v2287 = vunpack.c.l.b16 %v2184
        %v2288 = vunpack.c.l.b16 %v2185
        %v2289 = vunpack.c.l.b16 %v2186
        %v2290 = vunpack.c.l.b16 %v2187
        %v2291 = vunpack.c.l.b16 %v2188
        %v2292 = vunpack.c.l.b16 %v2189
        %v2293 = vunpack.c.l.b16 %v2190
        %v2294 = vunpack.c.l.b16 %v2191
        %v2295 = vunpack.c.l.b16 %v2192
        %v2296 = vunpack.c.l.b16 %v2193
        %v2297 = vunpack.c.l.b16 %v2194
        %v2298 = vunpack.c.l.b16 %v2195
        %v2299 = vunpack.c.l.b16 %v2196
        %v2300 = vunpack.c.l.b16 %v2197
        %v2301 = vpack.c.b16 %v2254, %v2253
        %v2302 = vpack.c.b16 %v2256, %v2255
        %v2303 = vpack.c.b16 %v2258, %v2257
        %v2304 = vpack.c.b16 %v2260, %v2259
        %v2305 = vpack.c.b16 %v2262, %v2261
        %v2306 = vpack.c.b16 %v2264, %v2263
        %v2307 = vpack.c.b16 %v2266, %v2265
        %v2308 = vpack.c.b16 %v2268, %v2267
        %v2309 = vpack.c.b16 %v2270, %v2269
        %v2310 = vpack.c.b16 %v2272, %v2271
        %v2311 = vpack.c.b16 %v2274, %v2273
        %v2312 = vpack.c.b16 %v2276, %v2275
        %v2313 = vpack.c.b16 %v2278, %v2277
        %v2314 = vpack.c.b16 %v2280, %v2279
        %v2315 = vpack.c.b16 %v2282, %v2281
        %v2316 = vpack.c.b16 %v2284, %v2283
        %v2317 = vpack.c.b16 %v2286, %v2285
        %v2318 = vpack.c.b16 %v2288, %v2287
        %v2319 = vpack.c.b16 %v2290, %v2289
        %v2320 = vpack.c.b16 %v2292, %v2291
        %v2321 = vpack.c.b16 %v2294, %v2293
        %v2322 = vpack.c.b16 %v2296, %v2295
        %v2323 = vpack.c.b16 %v2298, %v2297
        %v2324 = vpack.c.b16 %v2300, %v2299
        %2349 = vmatprep.subr.bf16.mxu0 0
        %2350 = vmatpush1.bf16.msra.mxu0 %v2301
        %2351 = vmatprep.subr.bf16.mxu0 0
        %2352 = vmatpush1.bf16.msra.mxu0 %v2302
        %2353 = vmatprep.subr.bf16.mxu0 0
        %2354 = vmatpush1.bf16.msra.mxu0 %v2303
        %2355 = vmatprep.subr.bf16.mxu0 0
        %2356 = vmatpush1.bf16.msra.mxu0 %v2304
        %2357 = vmatprep.subr.bf16.mxu0 0
        %2358 = vmatpush1.bf16.msra.mxu0 %v2305
        %2359 = vmatprep.subr.bf16.mxu0 0
        %2360 = vmatpush1.bf16.msra.mxu0 %v2306
        %2361 = vmatprep.subr.bf16.mxu0 0
        %2362 = vmatpush1.bf16.msra.mxu0 %v2307
        %2363 = vmatprep.subr.bf16.mxu0 0
        %2364 = vmatpush1.bf16.msra.mxu0 %v2308
        %2365 = vmatprep.subr.bf16.mxu0 0
        %2366 = vmatpush1.bf16.msra.mxu0 %v2309
        %2367 = vmatprep.subr.bf16.mxu0 0
        %2368 = vmatpush1.bf16.msra.mxu0 %v2310
        %2369 = vmatprep.subr.bf16.mxu0 0
        %2370 = vmatpush1.bf16.msra.mxu0 %v2311
        %2371 = vmatprep.subr.bf16.mxu0 0
        %2372 = vmatpush1.bf16.msra.mxu0 %v2312
        %2373 = vmatprep.subr.bf16.mxu0 0
        %2374 = vmatpush1.bf16.msra.mxu0 %v2313
        %2375 = vmatprep.subr.bf16.mxu0 0
        %2376 = vmatpush1.bf16.msra.mxu0 %v2314
        %2377 = vmatprep.subr.bf16.mxu0 0
        %2378 = vmatpush1.bf16.msra.mxu0 %v2315
        %2379 = vmatprep.subr.bf16.mxu0 0
        %2380 = vmatpush1.bf16.msra.mxu0 %v2316
        %2381 = vmatprep.mubr.bf16.mxu0 %v2148
        %2382 = vmatmul.mubr.bf16.gmra.mrb[0].mxu0 %v2147
        %v2383 = vpop.f32.mrb[0].mxu0
        %v2384 = vadd.f32 %v2203, %v2383
        %v2385 = vpop.f32.mrb[0].mxu0
        %v2386 = vpop.f32.mrb[0].mxu0
        %v2387 = vpop.f32.mrb[0].mxu0
        %2388 = vdwg.mxu0
        %2389 = vmatprep.subr.bf16.mxu0 0
        %2390 = vmatpush1.bf16.msra.mxu0 %v2317
        %2391 = vmatprep.subr.bf16.mxu0 0
        %2392 = vmatpush1.bf16.msra.mxu0 %v2318
        %2393 = vmatprep.subr.bf16.mxu0 0
        %2394 = vmatpush1.bf16.msra.mxu0 %v2319
        %2395 = vmatprep.subr.bf16.mxu0 0
        %2396 = vmatpush1.bf16.msra.mxu0 %v2320
        %2397 = vmatprep.subr.bf16.mxu0 0
        %2398 = vmatpush1.bf16.msra.mxu0 %v2321
        %2399 = vmatprep.subr.bf16.mxu0 0
        %2400 = vmatpush1.bf16.msra.mxu0 %v2322
        %2401 = vmatprep.subr.bf16.mxu0 0
        %2402 = vmatpush1.bf16.msra.mxu0 %v2323
        %2403 = vmatprep.subr.bf16.mxu0 0
        %2404 = vmatpush1.bf16.msra.mxu0 %v2324
        %2405 = vmatprep.subr.bf16.mxu0 0
        %2406 = vmatpush1.bf16.msra.mxu0 0
        %2407 = vmatprep.subr.bf16.mxu0 0
        %2408 = vmatpush1.bf16.msra.mxu0 0
        %2409 = vmatprep.subr.bf16.mxu0 0
        %2410 = vmatpush1.bf16.msra.mxu0 0
        %2411 = vmatprep.subr.bf16.mxu0 0
        %2412 = vmatpush1.bf16.msra.mxu0 0
        %2413 = vmatprep.subr.bf16.mxu0 0
        %2414 = vmatpush1.bf16.msra.mxu0 0
        %2415 = vmatprep.subr.bf16.mxu0 0
        %2416 = vmatpush1.bf16.msra.mxu0 0
        %2417 = vmatprep.subr.bf16.mxu0 0
        %2418 = vmatpush1.bf16.msra.mxu0 0
        %2419 = vmatprep.subr.bf16.mxu0 0
        %2420 = vmatpush1.bf16.msra.mxu0 0
        %2421 = vmatprep.mubr.bf16.mxu0 0
        %2422 = vmatmul.mubr.bf16.gmra.mrb[0].mxu0 %v2149
        %v2423 = vpop.f32.mrb[0].mxu0
        %v2424 = vadd.f32 %v2384, %v2423
        %v2425 = vpop.f32.mrb[0].mxu0
        %v2426 = vpop.f32.mrb[0].mxu0
        %v2427 = vpop.f32.mrb[0].mxu0
        %2428 = vdwg.mxu0
        %v2429 = vmax.f32 %v2424, 0.0
        %v2430 = vpack.c.bf16 %v2429, %v2429
        %v2431 = vld [vmem:[#allocation11] sm:$0xff]
        %v2432 = vld [vmem:[#allocation11 + $0x8] sm:$0xff]
        %v2433 = vld [vmem:[#allocation11 + $0x10] sm:$0xff]
        %v2434 = vld [vmem:[#allocation11 + $0x18] sm:$0xff]
        %v2435 = vld [vmem:[#allocation11 + $0x20] sm:$0xff]
        %v2436 = vld [vmem:[#allocation11 + $0x28] sm:$0xff]
        %v2437 = vld [vmem:[#allocation11 + $0x30] sm:$0xff]
        %v2438 = vld [vmem:[#allocation11 + $0x38] sm:$0xff]
        %v2439 = vld [vmem:[#allocation11 + $0x40] sm:$0xff]
        %v2440 = vld [vmem:[#allocation11 + $0x48] sm:$0xff]
        %v2441 = vld [vmem:[#allocation11 + $0x50] sm:$0xff]
        %v2442 = vld [vmem:[#allocation11 + $0x58] sm:$0xff]
        %v2443 = vld [vmem:[#allocation11 + $0x60] sm:$0xff]
        %v2444 = vld [vmem:[#allocation11 + $0x68] sm:$0xff]
        %v2445 = vld [vmem:[#allocation11 + $0x70] sm:$0xff]
        %v2446 = vld [vmem:[#allocation11 + $0x78] sm:$0xff]
        %v2447 = vld [vmem:[#allocation11 + $0x80] sm:$0xff]
        %v2448 = vld [vmem:[#allocation11 + $0x88] sm:$0xff]
        %v2449 = vld [vmem:[#allocation11 + $0x90] sm:$0xff]
        %v2450 = vld [vmem:[#allocation11 + $0x98] sm:$0xff]
        %v2451 = vld [vmem:[#allocation11 + $0xa0] sm:$0xff]
        %v2452 = vld [vmem:[#allocation11 + $0xa8] sm:$0xff]
        %v2453 = vld [vmem:[#allocation11 + $0xb0] sm:$0xff]
        %v2454 = vld [vmem:[#allocation11 + $0xb8] sm:$0xff]
        %v2455 = vld [vmem:[#allocation11 + $0xc0] sm:$0xff]
        %v2456 = vld [vmem:[#allocation11 + $0xc8] sm:$0xff]
        %v2457 = vld [vmem:[#allocation11 + $0xd0] sm:$0xff]
        %v2458 = vld [vmem:[#allocation11 + $0xd8] sm:$0xff]
        %v2459 = vld [vmem:[#allocation11 + $0xe0] sm:$0xff]
        %v2460 = vld [vmem:[#allocation11 + $0xe8] sm:$0xff]
        %v2461 = vld [vmem:[#allocation11 + $0xf0] sm:$0xff]
        %v2462 = vld [vmem:[#allocation11 + $0xf8] sm:$0xff]
        %v2495 = vunpack.c.l.b16 %v2431
        %v2496 = vunpack.c.h.b16 %v2431
        %v2497 = vunpack.c.l.b16 %v2432
        %v2498 = vunpack.c.h.b16 %v2432
        %v2499 = vunpack.c.l.b16 %v2433
        %v2500 = vunpack.c.h.b16 %v2433
        %v2501 = vunpack.c.l.b16 %v2434
        %v2502 = vunpack.c.h.b16 %v2434
        %v2503 = vunpack.c.l.b16 %v2435
        %v2504 = vunpack.c.h.b16 %v2435
        %v2505 = vunpack.c.l.b16 %v2436
        %v2506 = vunpack.c.h.b16 %v2436
        %v2507 = vunpack.c.l.b16 %v2437
        %v2508 = vunpack.c.h.b16 %v2437
        %v2509 = vunpack.c.l.b16 %v2438
        %v2510 = vunpack.c.h.b16 %v2438
        %v2511 = vunpack.c.l.b16 %v2439
        %v2512 = vunpack.c.h.b16 %v2439
        %v2513 = vunpack.c.l.b16 %v2440
        %v2514 = vunpack.c.h.b16 %v2440
        %v2515 = vunpack.c.l.b16 %v2441
        %v2516 = vunpack.c.h.b16 %v2441
        %v2517 = vunpack.c.l.b16 %v2442
        %v2518 = vunpack.c.h.b16 %v2442
        %v2519 = vunpack.c.l.b16 %v2443
        %v2520 = vunpack.c.h.b16 %v2443
        %v2521 = vunpack.c.l.b16 %v2444
        %v2522 = vunpack.c.h.b16 %v2444
        %v2523 = vunpack.c.l.b16 %v2445
        %v2524 = vunpack.c.h.b16 %v2445
        %v2525 = vunpack.c.l.b16 %v2446
        %v2526 = vunpack.c.h.b16 %v2446
        %v2527 = vunpack.c.l.b16 %v2447
        %v2528 = vunpack.c.h.b16 %v2447
        %v2529 = vunpack.c.l.b16 %v2448
        %v2530 = vunpack.c.h.b16 %v2448
        %v2531 = vunpack.c.l.b16 %v2449
        %v2532 = vunpack.c.h.b16 %v2449
        %v2533 = vunpack.c.l.b16 %v2450
        %v2534 = vunpack.c.h.b16 %v2450
        %v2535 = vunpack.c.l.b16 %v2451
        %v2536 = vunpack.c.h.b16 %v2451
        %v2537 = vunpack.c.l.b16 %v2452
        %v2538 = vunpack.c.h.b16 %v2452
        %v2539 = vunpack.c.l.b16 %v2453
        %v2540 = vunpack.c.h.b16 %v2453
        %v2541 = vunpack.c.l.b16 %v2454
        %v2542 = vunpack.c.h.b16 %v2454
        %v2543 = vunpack.c.l.b16 %v2455
        %v2544 = vunpack.c.h.b16 %v2455
        %v2545 = vunpack.c.l.b16 %v2456
        %v2546 = vunpack.c.h.b16 %v2456
        %v2547 = vunpack.c.l.b16 %v2457
        %v2548 = vunpack.c.h.b16 %v2457
        %v2549 = vunpack.c.l.b16 %v2458
        %v2550 = vunpack.c.h.b16 %v2458
        %v2551 = vunpack.c.l.b16 %v2459
        %v2552 = vunpack.c.h.b16 %v2459
        %v2553 = vunpack.c.l.b16 %v2460
        %v2554 = vunpack.c.h.b16 %v2460
        %v2555 = vunpack.c.l.b16 %v2461
        %v2556 = vunpack.c.h.b16 %v2461
        %v2557 = vunpack.c.l.b16 %v2462
        %v2558 = vunpack.c.h.b16 %v2462
        %v2559 = vpack.c.b16 %v2499, %v2495
        %v2560 = vpack.c.b16 %v2500, %v2496
        %v2561 = vpack.c.b16 %v2501, %v2497
        %v2562 = vpack.c.b16 %v2502, %v2498
        %v2563 = vpack.c.b16 %v2507, %v2503
        %v2564 = vpack.c.b16 %v2508, %v2504
        %v2565 = vpack.c.b16 %v2509, %v2505
        %v2566 = vpack.c.b16 %v2510, %v2506
        %v2567 = vpack.c.b16 %v2515, %v2511
        %v2568 = vpack.c.b16 %v2516, %v2512
        %v2569 = vpack.c.b16 %v2517, %v2513
        %v2570 = vpack.c.b16 %v2518, %v2514
        %v2571 = vpack.c.b16 %v2523, %v2519
        %v2572 = vpack.c.b16 %v2524, %v2520
        %v2573 = vpack.c.b16 %v2525, %v2521
        %v2574 = vpack.c.b16 %v2526, %v2522
        %v2575 = vpack.c.b16 %v2531, %v2527
        %v2576 = vpack.c.b16 %v2532, %v2528
        %v2577 = vpack.c.b16 %v2533, %v2529
        %v2578 = vpack.c.b16 %v2534, %v2530
        %v2579 = vpack.c.b16 %v2539, %v2535
        %v2580 = vpack.c.b16 %v2540, %v2536
        %v2581 = vpack.c.b16 %v2541, %v2537
        %v2582 = vpack.c.b16 %v2542, %v2538
        %v2583 = vpack.c.b16 %v2547, %v2543
        %v2584 = vpack.c.b16 %v2548, %v2544
        %v2585 = vpack.c.b16 %v2549, %v2545
        %v2586 = vpack.c.b16 %v2550, %v2546
        %v2587 = vpack.c.b16 %v2555, %v2551
        %v2588 = vpack.c.b16 %v2556, %v2552
        %v2589 = vpack.c.b16 %v2557, %v2553
        %v2590 = vpack.c.b16 %v2558, %v2554
        %2623 = vmatprep.subr.bf16.mxu0 %v2560
        %2624 = vmatpush1.bf16.msra.mxu0 %v2559
        %2625 = vmatprep.subr.bf16.mxu0 %v2564
        %2626 = vmatpush1.bf16.msra.mxu0 %v2563
        %2627 = vmatprep.subr.bf16.mxu0 %v2568
        %2628 = vmatpush1.bf16.msra.mxu0 %v2567
        %2629 = vmatprep.subr.bf16.mxu0 %v2572
        %2630 = vmatpush1.bf16.msra.mxu0 %v2571
        %2631 = vmatprep.subr.bf16.mxu0 %v2576
        %2632 = vmatpush1.bf16.msra.mxu0 %v2575
        %2633 = vmatprep.subr.bf16.mxu0 %v2580
        %2634 = vmatpush1.bf16.msra.mxu0 %v2579
        %2635 = vmatprep.subr.bf16.mxu0 %v2584
        %2636 = vmatpush1.bf16.msra.mxu0 %v2583
        %2637 = vmatprep.subr.bf16.mxu0 %v2588
        %2638 = vmatpush1.bf16.msra.mxu0 %v2587
        %2639 = vmatprep.subr.bf16.mxu0 0
        %2640 = vmatpush1.bf16.msra.mxu0 0
        %2641 = vmatprep.subr.bf16.mxu0 0
        %2642 = vmatpush1.bf16.msra.mxu0 0
        %2643 = vmatprep.subr.bf16.mxu0 0
        %2644 = vmatpush1.bf16.msra.mxu0 0
        %2645 = vmatprep.subr.bf16.mxu0 0
        %2646 = vmatpush1.bf16.msra.mxu0 0
        %2647 = vmatprep.subr.bf16.mxu0 0
        %2648 = vmatpush1.bf16.msra.mxu0 0
        %2649 = vmatprep.subr.bf16.mxu0 0
        %2650 = vmatpush1.bf16.msra.mxu0 0
        %2651 = vmatprep.subr.bf16.mxu0 0
        %2652 = vmatpush1.bf16.msra.mxu0 0
        %2653 = vmatprep.subr.bf16.mxu0 0
        %2654 = vmatpush1.bf16.msra.mxu0 0
        %2655 = vmatprep.mubr.bf16.mxu0 0
        %2656 = vmatmul.mubr.bf16.gmra.mrb[0].mxu0 %v2430
        %v2657 = vpop.f32.mrb[0].mxu0
        %v2658 = vadd.f32 0.0, %v2657
        %v2659 = vpop.f32.mrb[0].mxu0
        %v2660 = vadd.f32 0.0, %v2659
        %v2661 = vpop.f32.mrb[0].mxu0
        %v2662 = vpop.f32.mrb[0].mxu0
        %2663 = vdwg.mxu0
        %2664 = vmatprep.subr.bf16.mxu0 %v2562
        %2665 = vmatpush1.bf16.msra.mxu0 %v2561
        %2666 = vmatprep.subr.bf16.mxu0 %v2566
        %2667 = vmatpush1.bf16.msra.mxu0 %v2565
        %2668 = vmatprep.subr.bf16.mxu0 %v2570
        %2669 = vmatpush1.bf16.msra.mxu0 %v2569
        %2670 = vmatprep.subr.bf16.mxu0 %v2574
        %2671 = vmatpush1.bf16.msra.mxu0 %v2573
        %2672 = vmatprep.subr.bf16.mxu0 %v2578
        %2673 = vmatpush1.bf16.msra.mxu0 %v2577
        %2674 = vmatprep.subr.bf16.mxu0 %v2582
        %2675 = vmatpush1.bf16.msra.mxu0 %v2581
        %2676 = vmatprep.subr.bf16.mxu0 %v2586
        %2677 = vmatpush1.bf16.msra.mxu0 %v2585
        %2678 = vmatprep.subr.bf16.mxu0 %v2590
        %2679 = vmatpush1.bf16.msra.mxu0 %v2589
        %2680 = vmatprep.subr.bf16.mxu0 0
        %2681 = vmatpush1.bf16.msra.mxu0 0
        %2682 = vmatprep.subr.bf16.mxu0 0
        %2683 = vmatpush1.bf16.msra.mxu0 0
        %2684 = vmatprep.subr.bf16.mxu0 0
        %2685 = vmatpush1.bf16.msra.mxu0 0
        %2686 = vmatprep.subr.bf16.mxu0 0
        %2687 = vmatpush1.bf16.msra.mxu0 0
        %2688 = vmatprep.subr.bf16.mxu0 0
        %2689 = vmatpush1.bf16.msra.mxu0 0
        %2690 = vmatprep.subr.bf16.mxu0 0
        %2691 = vmatpush1.bf16.msra.mxu0 0
        %2692 = vmatprep.subr.bf16.mxu0 0
        %2693 = vmatpush1.bf16.msra.mxu0 0
        %2694 = vmatprep.subr.bf16.mxu0 0
        %2695 = vmatpush1.bf16.msra.mxu0 0
        %2696 = vmatprep.mubr.bf16.mxu0 0
        %2697 = vmatmul.mubr.bf16.gmra.mrb[0].mxu0 %v2430
        %v2698 = vpop.f32.mrb[0].mxu0
        %v2699 = vadd.f32 0.0, %v2698
        %v2700 = vpop.f32.mrb[0].mxu0
        %v2701 = vadd.f32 0.0, %v2700
        %v2702 = vpop.f32.mrb[0].mxu0
        %v2703 = vpop.f32.mrb[0].mxu0
        %2704 = vdwg.mxu0
        %v2705 = vld [vmem:[%s14] sm:$0xff]
        %v2706 = vld [vmem:[%s14 + $0x8] sm:$0xff]
        %s2707 = scalar_lea.vmem %s14, 16
        %v2708 = vld [vmem:[%s2707] sm:$0xff]
        %v2709 = vld [vmem:[%s2707 + $0x8] sm:$0xff]
        %vm2710 = vcmask 64512
        %v2712 = vsel %vm2710, %v2708, 0
        %v2715 = vsel %vm2710, %v2709, 0
        %2717 = vmatprep.subr.mxu0 %v2701
        %2718 = vmatpush1.msra.mxu0 %v2699
        %2719 = vmatprep.subr.mxu0 0.0
        %2720 = vmatpush1.msra.mxu0 0.0
        %2721 = vmatprep.subr.mxu0 0.0
        %2722 = vmatpush1.msra.mxu0 0.0
        %2723 = vmatprep.subr.mxu0 0.0
        %2724 = vmatpush1.msra.mxu0 0.0
        %2725 = vmatprep.subr.mxu0 0.0
        %2726 = vmatpush1.msra.mxu0 0.0
        %2727 = vmatprep.subr.mxu0 0.0
        %2728 = vmatpush1.msra.mxu0 0.0
        %2729 = vmatprep.subr.mxu0 0.0
        %2730 = vmatpush1.msra.mxu0 0.0
        %2731 = vmatprep.subr.mxu0 0.0
        %2732 = vmatpush1.msra.mxu0 0.0
        %2733 = vmatprep.subr.mxu0 0.0
        %2734 = vmatpush1.msra.mxu0 0.0
        %2735 = vmatprep.subr.mxu0 0.0
        %2736 = vmatpush1.msra.mxu0 0.0
        %2737 = vmatprep.subr.mxu0 0.0
        %2738 = vmatpush1.msra.mxu0 0.0
        %2739 = vmatprep.subr.mxu0 0.0
        %2740 = vmatpush1.msra.mxu0 0.0
        %2741 = vmatprep.subr.mxu0 0.0
        %2742 = vmatpush1.msra.mxu0 0.0
        %2743 = vmatprep.subr.mxu0 0.0
        %2744 = vmatpush1.msra.mxu0 0.0
        %2745 = vmatprep.subr.mxu0 0.0
        %2746 = vmatpush1.msra.mxu0 0.0
        %2747 = vmatprep.subr.mxu0 0.0
        %2748 = vmatpush1.msra.mxu0 0.0
        %2749 = vmatprep.subr.mxu0 0.0
        %2750 = vmatpush1.msra.mxu0 0.0
        %2751 = vmatprep.subr.mxu0 0.0
        %2752 = vmatpush1.msra.mxu0 0.0
        %2753 = vmatprep.subr.mxu0 0.0
        %2754 = vmatpush1.msra.mxu0 0.0
        %2755 = vmatprep.subr.mxu0 0.0
        %2756 = vmatpush1.msra.mxu0 0.0
        %2757 = vmatprep.subr.mxu0 0.0
        %2758 = vmatpush1.msra.mxu0 0.0
        %2759 = vmatprep.subr.mxu0 0.0
        %2760 = vmatpush1.msra.mxu0 0.0
        %2761 = vmatprep.subr.mxu0 0.0
        %2762 = vmatpush1.msra.mxu0 0.0
        %2763 = vmatprep.subr.mxu0 0.0
        %2764 = vmatpush1.msra.mxu0 0.0
        %2765 = vmatprep.subr.mxu0 0.0
        %2766 = vmatpush1.msra.mxu0 0.0
        %2767 = vmatprep.subr.mxu0 0.0
        %2768 = vmatpush1.msra.mxu0 0.0
        %2769 = vmatprep.subr.mxu0 0.0
        %2770 = vmatpush1.msra.mxu0 0.0
        %2771 = vmatprep.subr.mxu0 0.0
        %2772 = vmatpush1.msra.mxu0 0.0
        %2773 = vmatprep.subr.mxu0 0.0
        %2774 = vmatpush1.msra.mxu0 0.0
        %2775 = vmatprep.subr.mxu0 0.0
        %2776 = vmatpush1.msra.mxu0 0.0
        %2777 = vmatprep.subr.mxu0 0.0
        %2778 = vmatpush1.msra.mxu0 0.0
        %2779 = vmatprep.subr.mxu0 0.0
        %2780 = vmatpush1.msra.mxu0 0.0
        %2781 = vmatprep.mubr.f32.mxu0 0.0
        %2782 = vmatmul.mubr.f32.gmra.mrb[0].mxu0 %v2712
        %v2783 = vpop.f32.mrb[0].mxu0
        %v2784 = vadd.f32 0.0, %v2783
        %v2785 = vpop.f32.mrb[0].mxu0
        %v2786 = vadd.f32 0.0, %v2785
        %2787 = vmatprep.mubr.f32.mxu0 0.0
        %2788 = vmatmul.mubr.f32.gmra.mrb[0].mxu0 %v2715
        %v2789 = vpop.f32.mrb[0].mxu0
        %v2790 = vadd.f32 0.0, %v2789
        %v2791 = vpop.f32.mrb[0].mxu0
        %v2792 = vadd.f32 0.0, %v2791
        %2793 = vdwg.mxu0
        %v2795 = vsel %vm2710, %v2705, 0
        %v2798 = vsel %vm2710, %v2706, 0
        %2800 = vmatprep.subr.mxu0 %v2660
        %2801 = vmatpush1.msra.mxu0 %v2658
        %2802 = vmatprep.subr.mxu0 0.0
        %2803 = vmatpush1.msra.mxu0 0.0
        %2804 = vmatprep.subr.mxu0 0.0
        %2805 = vmatpush1.msra.mxu0 0.0
        %2806 = vmatprep.subr.mxu0 0.0
        %2807 = vmatpush1.msra.mxu0 0.0
        %2808 = vmatprep.subr.mxu0 0.0
        %2809 = vmatpush1.msra.mxu0 0.0
        %2810 = vmatprep.subr.mxu0 0.0
        %2811 = vmatpush1.msra.mxu0 0.0
        %2812 = vmatprep.subr.mxu0 0.0
        %2813 = vmatpush1.msra.mxu0 0.0
        %2814 = vmatprep.subr.mxu0 0.0
        %2815 = vmatpush1.msra.mxu0 0.0
        %2816 = vmatprep.subr.mxu0 0.0
        %2817 = vmatpush1.msra.mxu0 0.0
        %2818 = vmatprep.subr.mxu0 0.0
        %2819 = vmatpush1.msra.mxu0 0.0
        %2820 = vmatprep.subr.mxu0 0.0
        %2821 = vmatpush1.msra.mxu0 0.0
        %2822 = vmatprep.subr.mxu0 0.0
        %2823 = vmatpush1.msra.mxu0 0.0
        %2824 = vmatprep.subr.mxu0 0.0
        %2825 = vmatpush1.msra.mxu0 0.0
        %2826 = vmatprep.subr.mxu0 0.0
        %2827 = vmatpush1.msra.mxu0 0.0
        %2828 = vmatprep.subr.mxu0 0.0
        %2829 = vmatpush1.msra.mxu0 0.0
        %2830 = vmatprep.subr.mxu0 0.0
        %2831 = vmatpush1.msra.mxu0 0.0
        %2832 = vmatprep.subr.mxu0 0.0
        %2833 = vmatpush1.msra.mxu0 0.0
        %2834 = vmatprep.subr.mxu0 0.0
        %2835 = vmatpush1.msra.mxu0 0.0
        %2836 = vmatprep.subr.mxu0 0.0
        %2837 = vmatpush1.msra.mxu0 0.0
        %2838 = vmatprep.subr.mxu0 0.0
        %2839 = vmatpush1.msra.mxu0 0.0
        %2840 = vmatprep.subr.mxu0 0.0
        %2841 = vmatpush1.msra.mxu0 0.0
        %2842 = vmatprep.subr.mxu0 0.0
        %2843 = vmatpush1.msra.mxu0 0.0
        %2844 = vmatprep.subr.mxu0 0.0
        %2845 = vmatpush1.msra.mxu0 0.0
        %2846 = vmatprep.subr.mxu0 0.0
        %2847 = vmatpush1.msra.mxu0 0.0
        %2848 = vmatprep.subr.mxu0 0.0
        %2849 = vmatpush1.msra.mxu0 0.0
        %2850 = vmatprep.subr.mxu0 0.0
        %2851 = vmatpush1.msra.mxu0 0.0
        %2852 = vmatprep.subr.mxu0 0.0
        %2853 = vmatpush1.msra.mxu0 0.0
        %2854 = vmatprep.subr.mxu0 0.0
        %2855 = vmatpush1.msra.mxu0 0.0
        %2856 = vmatprep.subr.mxu0 0.0
        %2857 = vmatpush1.msra.mxu0 0.0
        %2858 = vmatprep.subr.mxu0 0.0
        %2859 = vmatpush1.msra.mxu0 0.0
        %2860 = vmatprep.subr.mxu0 0.0
        %2861 = vmatpush1.msra.mxu0 0.0
        %2862 = vmatprep.subr.mxu0 0.0
        %2863 = vmatpush1.msra.mxu0 0.0
        %2864 = vmatprep.mubr.f32.mxu0 0.0
        %2865 = vmatmul.mubr.f32.gmra.mrb[0].mxu0 %v2795
        %v2866 = vpop.f32.mrb[0].mxu0
        %v2867 = vadd.f32 %v2784, %v2866
        %v2868 = vpop.f32.mrb[0].mxu0
        %v2869 = vadd.f32 %v2786, %v2868
        %2870 = vmatprep.mubr.f32.mxu0 0.0
        %2871 = vmatmul.mubr.f32.gmra.mrb[0].mxu0 %v2798
        %v2872 = vpop.f32.mrb[0].mxu0
        %v2873 = vadd.f32 %v2790, %v2872
        %v2874 = vpop.f32.mrb[0].mxu0
        %v2875 = vadd.f32 %v2792, %v2874
        %2876 = vdwg.mxu0
        %v2877 = vld [vmem:[%s13] sm:$0x3]
        %v2879 = vlaneseq
        %v2880 = vshrl.u32 %v2879, 7
        %v2881 = vsub.s32 0, %v2880
        %v2882 = vrot.slane %v2877, %v2881
        %v2883 = vlaneseq
        %v2884 = vshrl.u32 %v2883, 7
        %v2885 = vsub.s32 1, %v2884
        %v2886 = vrot.slane %v2877, %v2885
        %v2889 = vadd.f32 %v2867, %v2882
        %v2890 = vadd.f32 %v2869, %v2886
        %v2891 = vadd.f32 %v2873, %v2882
        %v2892 = vadd.f32 %v2875, %v2886
        %v2893 = vmax.f32 %v2889, 0.0
        %v2894 = vmax.f32 %v2890, 0.0
        %v2895 = vmax.f32 %v2891, 0.0
        %v2896 = vmax.f32 %v2892, 0.0
        %v2897 = vadd.f32 %v1357, %v2893
        %v2898 = vadd.f32 %v1358, %v2894
        %v2899 = vadd.f32 %v1359, %v2895
        %v2900 = vadd.f32 %v1360, %v2896
        %2901 = vst [vmem:[%s575] sm:$0xff] %v2897
        %2902 = vst [vmem:[%s575 + $0x8] sm:$0xff] %v2898
        %2903 = vst [vmem:[%s575 + $0x10] sm:$0xff] %v2899
        %2904 = vst [vmem:[%s575 + $0x18] sm:$0xff] %v2900
        %s2905 = sand.u32 %s361, 1
        %s2906 = scalar_lea.sflag [#allocation4], %s2905
        %s2907 = sand.u32 %s361, 1
        %s2908 = smul.addr %s2907, 32
        %s2909 = scalar_lea.vmem [#allocation13], %s2908
        // Predicated region
        $region105: #{tpu_custom_call.1} parent=79 // pred_check
          %p2910 = pneg %p371
        $region106: #{tpu_custom_call.1} parent=79 // pred_check_branch
          %2912 = sbr.rel (%p2910) target = $region108
        $region107: #{tpu_custom_call.1} parent=79 // pred_region
          %s2914 = ssub.s32 512, 512
          %2915 = vsyncadd %s2906, %s2914
          %s2916 = smul.addr %s33, 4
          %s2917 = smul.addr %s2916, 128
          %s2918 = scalar_lea.hbm %s15, %s2917
          %s2919 = sshll.u32 %s2909, 4
          %s2920 = int_to_ptr.vmem [resolvable:$true] %s2919
          %2925 = dma.vmem_to_hbm [thread:$0]  %s2920, 512, %s2918, %s2906, 256, 256, 16
        $region108: #{tpu_custom_call.1} parent=79 // pred_fallthru
          _
      $region80: #{tpu_custom_call.1} parent=5 // pred_fallthru
        _
      %p2926 = scmp.le.s32.totalorder 2, %s28
      // Predicated region
      $region109: #{tpu_custom_call.1} parent=5 // pred_check
        %p2927 = pneg %p2926
      $region110: #{tpu_custom_call.1} parent=5 // pred_check_branch
        %2929 = sbr.rel (%p2927) target = $region112
      $region111: #{tpu_custom_call.1} parent=5 // pred_region
        %s2930 = ssub.s32 %s28, 2
        // Predicated region
        $region113: #{tpu_custom_call.1} parent=111 // pred_check
          %p2931 = pneg %p377
        $region114: #{tpu_custom_call.1} parent=111 // pred_check_branch
          %2933 = sbr.rel (%p2931) target = $region116
        $region115: #{tpu_custom_call.1} parent=111 // pred_region
          %s2934 = sand.u32 %s362, 1
          %s2935 = scalar_lea.sflag [#allocation4], %s2934
          %s2936 = sand.u32 %s362, 1
          %s2937 = smul.addr %s2936, 32
          %s2938 = scalar_lea.vmem [#allocation13], %s2937
          %2939 = dma.done %s2935, 512
        $region116: #{tpu_custom_call.1} parent=111 // pred_fallthru
          _
      $region112: #{tpu_custom_call.1} parent=5 // pred_fallthru
        _
    $region6: #{tpu_custom_call.1} parent=1 // loop_footer
      %s32 = sadd.s32 1, %s28
    $region7: #{tpu_custom_call.1} parent=1 // loop_footer_branch
      %27 = sbr.rel target = $region3
    $region8: #{tpu_custom_call.1} parent=1 // loop_exit
      _
    %2940 = vsyncpa [#allocation3], 1
    %s2941 = scalar_lea.sflag [#allocation3], 1
    %2942 = vsyncpa %s2941, 1
    %2943 = vsyncpa [#allocation6], 1
    %2944 = vsyncpa [#allocation9], 1
    %2945 = vsyncpa [#allocation12], 1
    %2946 = vsyncpa [#allocation4], 1
    %s2947 = scalar_lea.sflag [#allocation4], 1
    %2948 = vsyncpa %s2947, 1

</llo_original>
